<compile_context>
chip_gen: v6e
topology: v6e:2x2x1
jax: 0.10.0
libtpu: 0.0.40
codegen_flags: <defaults>
</compile_context>

<pallas_src>
import jax
import jax.numpy as jnp
from jax.experimental import pallas as pl
from jax.experimental.pallas import tpu as pltpu


def _hbm_copy_kernel(x_ref, o_ref, sem):
    # Single HBM -> HBM DMA of the whole (contiguous) tensor.
    cp = pltpu.make_async_copy(x_ref, o_ref, sem)
    cp.start()
    cp.wait()


def _materialized_copy(x):
    """One HBM->HBM DMA copy of `x` via Pallas (no VMEM hop, no grid)."""
    return pl.pallas_call(
        _hbm_copy_kernel,
        out_shape=jax.ShapeDtypeStruct(x.shape, x.dtype),
        in_specs=[pl.BlockSpec(memory_space=pl.ANY)],
        out_specs=pl.BlockSpec(memory_space=pl.ANY),
        scratch_shapes=[pltpu.SemaphoreType.DMA(())],
    )(x)


def channel_group_view(x, groups=2, materialize=False):
    """Equivalent of torch's x.view(N, groups, C//groups, H, W) for a
    contiguous NCHW tensor.

    Default (materialize=False): metadata-only reshape, zero data movement —
    this is the correct production path for a .view().

    materialize=True: force one physical HBM->HBM DMA copy via Pallas, then
    re-label the result with a metadata-only reshape.
    """
    N, C, H, W = x.shape
    assert C % groups == 0, "channels must be divisible by groups"
    Cg = C // groups

    if not materialize:
        # Zero-cost path: pure metadata (XLA bitcast-reshape of a contiguous
        # array). This is what torch .view() actually is.
        return jnp.reshape(x, (N, groups, Cg, H, W))

    # Materialized path: single HBM->HBM DMA, then metadata-only reshape.
    out = _materialized_copy(x)
    return jnp.reshape(out, (N, groups, Cg, H, W))


if __name__ == "__main__":
    # Shapes taken directly from the module:
    #   x262 = [1, 488, 14, 14]; x264 = 1 (N), x268 = 244 (C//2),
    #   x266 = x267 = 14 (H, W).
    key = jax.random.PRNGKey(0)
    N, C, H, W = 1, 488, 14, 14
    x264, x268, x266, x267 = 1, 244, 14, 14

    x262 = jax.random.normal(key, (N, C, H, W), dtype=jnp.float32)

    # Reference semantics of torch .view on a contiguous NCHW tensor.
    ref = x262.reshape(x264, 2, x268, x266, x267)

    # 1) Default zero-cost path (no kernel launch at all).
    x269 = channel_group_view(x262, groups=2)
    x269 = jax.block_until_ready(x269)
    assert x269.shape == (x264, 2, x268, x266, x267)
    assert x269.dtype == x262.dtype
    assert jnp.array_equal(x269, ref)

    # 2) Materialized path: exercise the Pallas HBM->HBM DMA kernel once.
    x269_copy = channel_group_view(x262, groups=2, materialize=True)
    x269_copy = jax.block_until_ready(x269_copy)
    assert x269_copy.shape == (x264, 2, x268, x266, x267)
    assert x269_copy.dtype == x262.dtype
    assert jnp.array_equal(x269_copy, ref)

    print("KERNEL_OK")
</pallas_src>

<mosaic_0001>
module attributes {stable_mosaic.version = 11 : i64} {
  func.func @_hbm_copy_kernel(%arg0: memref<1x488x14x14xf32, #tpu.memory_space<any>>, %arg1: memref<1x488x14x14xf32, #tpu.memory_space<any>>, %arg2: memref<!tpu.dma_semaphore, #tpu.memory_space<semaphore_mem>>) attributes {dimension_semantics = [], scalar_prefetch = 0 : i64, scratch_operands = 1 : i64, tpu.core_type = #tpu.core_type<tc>} {
    tpu.enqueue_dma source(%arg0 : memref<1x488x14x14xf32, #tpu.memory_space<any>>) target(%arg1 : memref<1x488x14x14xf32, #tpu.memory_space<any>>) target_semaphore(%arg2 : memref<!tpu.dma_semaphore, #tpu.memory_space<semaphore_mem>>)
    tpu.wait_dma2 semaphore(%arg2 : memref<!tpu.dma_semaphore, #tpu.memory_space<semaphore_mem>>) src(%arg0 : memref<1x488x14x14xf32, #tpu.memory_space<any>>) dst(%arg1 : memref<1x488x14x14xf32, #tpu.memory_space<any>>)
    return
  }
}

</mosaic_0001>

<llo_original>
// kernel: tpu_custom_call.1
$region0: #{tpu_custom_call.1}
  #allocation0 [shape = 'u32[]', space=smem, size = 0x4, offset = 0x4, fixed_abs, tag = 'smem constant byte address 0x4 - core index']
  #allocation1 [shape = 'u32[144,128]{1,0:T(1,128)}', space=vmem, size = 0x12000, scoped, tag = 'internal scratch']
  #allocation2 [shape = 's32[1]{0}', space=sflag, size = 0x4, scoped, tag = 'scratch operand']
  #allocation3 [shape = 's32[]', space=sflag, size = 0x4, offset = 0, fixed_abs, tag = 'sflag constant byte address 0x0 - dummy sync flag']
  %s0 = inlined_call_operand.vmem [shape: f32[1,488,14,14], index: 0, kind: input, shape index: {}]
  %s1 = inlined_call_operand.vmem [shape: f32[1,488,14,14], index: 1, kind: output, shape index: {}]
  %s2 = sld [smem:[#allocation0]]
  $region39: #{tpu_custom_call.1} parent=0
    _
  %s4 = ssub.s32 1, %s2
  %s5 = scalar_select 0, %s4, %s2
  %p7 = scmp.lt.u32.totalorder 14, 8
  %p8 = pneg %p7
  // Predicated region
  $region2: #{tpu_custom_call.1} parent=0 // pred_check
    _
  $region3: #{tpu_custom_call.1} parent=0 // pred_check_branch
    %10 = sbr.rel (%p7) target = $region5
  $region4: #{tpu_custom_call.1} parent=0 // pred_region
    %s1000 = sand.u32 14, 7
    %p1001 = scmp.eq.s32.totalorder %s1000, 0
    %p1002 = pneg %p1001
    // Predicated region
    $region17: #{tpu_custom_call.1} parent=4 // pred_check
      _
    $region18: #{tpu_custom_call.1} parent=4 // pred_check_branch
      %1004 = sbr.rel (%p1001) target = $region20
    $region19: #{tpu_custom_call.1} parent=4 // pred_region
      %s1005 = sand.u32 14, 7
      %s1006 = ssub.s32 14, %s1005
      %s1007 = scalar_lea.vmem %s0, %s1006
      %s1008 = ssub.s32 14, %s1005
      %s1009 = scalar_lea.vmem %s1, %s1008
      loop: start=0, step=1, limit=1
      $region21: #{tpu_custom_call.1} parent=19 // loop_pre_header
        _
      $region22: #{tpu_custom_call.1} parent=19 // loop_header
        %s1011 = sphi 0, %s1015
        %p1012 = scmp.ge.s32.totalorder %s1011, 1
        %s1016 = sphi %s0, %s0
        %s1017 = sphi %s1, %s1
      $region23: #{tpu_custom_call.1} parent=19 // loop_header_branch
        %1014 = sbr.rel (%p1012) target = $region27
      $region24: #{tpu_custom_call.1} parent=19 // loop_body
        %v1018 = vld [vmem:[%s1016] sm:$0xff]
        %1019 = vst [vmem:[%s1017] sm:$0xff] %v1018
        %v1020 = vld [vmem:[%s1016 + $0x10] sm:$0xff]
        %1021 = vst [vmem:[%s1017 + $0x10] sm:$0xff] %v1020
        %v1022 = vld [vmem:[%s1016 + $0x20] sm:$0xff]
        %1023 = vst [vmem:[%s1017 + $0x20] sm:$0xff] %v1022
        %v1024 = vld [vmem:[%s1016 + $0x30] sm:$0xff]
        %1025 = vst [vmem:[%s1017 + $0x30] sm:$0xff] %v1024
        %v1026 = vld [vmem:[%s1016 + $0x40] sm:$0xff]
        %1027 = vst [vmem:[%s1017 + $0x40] sm:$0xff] %v1026
        %v1028 = vld [vmem:[%s1016 + $0x50] sm:$0xff]
        %1029 = vst [vmem:[%s1017 + $0x50] sm:$0xff] %v1028
        %v1030 = vld [vmem:[%s1016 + $0x60] sm:$0xff]
        %1031 = vst [vmem:[%s1017 + $0x60] sm:$0xff] %v1030
        %v1032 = vld [vmem:[%s1016 + $0x70] sm:$0xff]
        %1033 = vst [vmem:[%s1017 + $0x70] sm:$0xff] %v1032
        %v1034 = vld [vmem:[%s1016 + $0x80] sm:$0xff]
        %1035 = vst [vmem:[%s1017 + $0x80] sm:$0xff] %v1034
        %v1036 = vld [vmem:[%s1016 + $0x90] sm:$0xff]
        %1037 = vst [vmem:[%s1017 + $0x90] sm:$0xff] %v1036
        %v1038 = vld [vmem:[%s1016 + $0xa0] sm:$0xff]
        %1039 = vst [vmem:[%s1017 + $0xa0] sm:$0xff] %v1038
        %v1040 = vld [vmem:[%s1016 + $0xb0] sm:$0xff]
        %1041 = vst [vmem:[%s1017 + $0xb0] sm:$0xff] %v1040
        %v1042 = vld [vmem:[%s1016 + $0xc0] sm:$0xff]
        %1043 = vst [vmem:[%s1017 + $0xc0] sm:$0xff] %v1042
        %v1044 = vld [vmem:[%s1016 + $0xd0] sm:$0xff]
        %1045 = vst [vmem:[%s1017 + $0xd0] sm:$0xff] %v1044
        %v1046 = vld [vmem:[%s1016 + $0xe0] sm:$0xff]
        %1047 = vst [vmem:[%s1017 + $0xe0] sm:$0xff] %v1046
        %v1048 = vld [vmem:[%s1016 + $0xf0] sm:$0xff]
        %1049 = vst [vmem:[%s1017 + $0xf0] sm:$0xff] %v1048
        %v1050 = vld [vmem:[%s1016 + $0x100] sm:$0xff]
        %1051 = vst [vmem:[%s1017 + $0x100] sm:$0xff] %v1050
        %v1052 = vld [vmem:[%s1016 + $0x110] sm:$0xff]
        %1053 = vst [vmem:[%s1017 + $0x110] sm:$0xff] %v1052
        %v1054 = vld [vmem:[%s1016 + $0x120] sm:$0xff]
        %1055 = vst [vmem:[%s1017 + $0x120] sm:$0xff] %v1054
        %v1056 = vld [vmem:[%s1016 + $0x130] sm:$0xff]
        %1057 = vst [vmem:[%s1017 + $0x130] sm:$0xff] %v1056
        %v1058 = vld [vmem:[%s1016 + $0x140] sm:$0xff]
        %1059 = vst [vmem:[%s1017 + $0x140] sm:$0xff] %v1058
        %v1060 = vld [vmem:[%s1016 + $0x150] sm:$0xff]
        %1061 = vst [vmem:[%s1017 + $0x150] sm:$0xff] %v1060
        %v1062 = vld [vmem:[%s1016 + $0x160] sm:$0xff]
        %1063 = vst [vmem:[%s1017 + $0x160] sm:$0xff] %v1062
        %v1064 = vld [vmem:[%s1016 + $0x170] sm:$0xff]
        %1065 = vst [vmem:[%s1017 + $0x170] sm:$0xff] %v1064
        %v1066 = vld [vmem:[%s1016 + $0x180] sm:$0xff]
        %1067 = vst [vmem:[%s1017 + $0x180] sm:$0xff] %v1066
        %v1068 = vld [vmem:[%s1016 + $0x190] sm:$0xff]
        %1069 = vst [vmem:[%s1017 + $0x190] sm:$0xff] %v1068
        %v1070 = vld [vmem:[%s1016 + $0x1a0] sm:$0xff]
        %1071 = vst [vmem:[%s1017 + $0x1a0] sm:$0xff] %v1070
        %v1072 = vld [vmem:[%s1016 + $0x1b0] sm:$0xff]
        %1073 = vst [vmem:[%s1017 + $0x1b0] sm:$0xff] %v1072
        %v1074 = vld [vmem:[%s1016 + $0x1c0] sm:$0xff]
        %1075 = vst [vmem:[%s1017 + $0x1c0] sm:$0xff] %v1074
        %v1076 = vld [vmem:[%s1016 + $0x1d0] sm:$0xff]
        %1077 = vst [vmem:[%s1017 + $0x1d0] sm:$0xff] %v1076
        %v1078 = vld [vmem:[%s1016 + $0x1e0] sm:$0xff]
        %1079 = vst [vmem:[%s1017 + $0x1e0] sm:$0xff] %v1078
        %v1080 = vld [vmem:[%s1016 + $0x1f0] sm:$0xff]
        %1081 = vst [vmem:[%s1017 + $0x1f0] sm:$0xff] %v1080
        %v1082 = vld [vmem:[%s1016 + $0x200] sm:$0xff]
        %1083 = vst [vmem:[%s1017 + $0x200] sm:$0xff] %v1082
        %v1084 = vld [vmem:[%s1016 + $0x210] sm:$0xff]
        %1085 = vst [vmem:[%s1017 + $0x210] sm:$0xff] %v1084
        %v1086 = vld [vmem:[%s1016 + $0x220] sm:$0xff]
        %1087 = vst [vmem:[%s1017 + $0x220] sm:$0xff] %v1086
        %v1088 = vld [vmem:[%s1016 + $0x230] sm:$0xff]
        %1089 = vst [vmem:[%s1017 + $0x230] sm:$0xff] %v1088
        %v1090 = vld [vmem:[%s1016 + $0x240] sm:$0xff]
        %1091 = vst [vmem:[%s1017 + $0x240] sm:$0xff] %v1090
        %v1092 = vld [vmem:[%s1016 + $0x250] sm:$0xff]
        %1093 = vst [vmem:[%s1017 + $0x250] sm:$0xff] %v1092
        %v1094 = vld [vmem:[%s1016 + $0x260] sm:$0xff]
        %1095 = vst [vmem:[%s1017 + $0x260] sm:$0xff] %v1094
        %v1096 = vld [vmem:[%s1016 + $0x270] sm:$0xff]
        %1097 = vst [vmem:[%s1017 + $0x270] sm:$0xff] %v1096
        %v1098 = vld [vmem:[%s1016 + $0x280] sm:$0xff]
        %1099 = vst [vmem:[%s1017 + $0x280] sm:$0xff] %v1098
        %v1100 = vld [vmem:[%s1016 + $0x290] sm:$0xff]
        %1101 = vst [vmem:[%s1017 + $0x290] sm:$0xff] %v1100
        %v1102 = vld [vmem:[%s1016 + $0x2a0] sm:$0xff]
        %1103 = vst [vmem:[%s1017 + $0x2a0] sm:$0xff] %v1102
        %v1104 = vld [vmem:[%s1016 + $0x2b0] sm:$0xff]
        %1105 = vst [vmem:[%s1017 + $0x2b0] sm:$0xff] %v1104
        %v1106 = vld [vmem:[%s1016 + $0x2c0] sm:$0xff]
        %1107 = vst [vmem:[%s1017 + $0x2c0] sm:$0xff] %v1106
        %v1108 = vld [vmem:[%s1016 + $0x2d0] sm:$0xff]
        %1109 = vst [vmem:[%s1017 + $0x2d0] sm:$0xff] %v1108
        %v1110 = vld [vmem:[%s1016 + $0x2e0] sm:$0xff]
        %1111 = vst [vmem:[%s1017 + $0x2e0] sm:$0xff] %v1110
        %v1112 = vld [vmem:[%s1016 + $0x2f0] sm:$0xff]
        %1113 = vst [vmem:[%s1017 + $0x2f0] sm:$0xff] %v1112
        %v1114 = vld [vmem:[%s1016 + $0x300] sm:$0xff]
        %1115 = vst [vmem:[%s1017 + $0x300] sm:$0xff] %v1114
        %v1116 = vld [vmem:[%s1016 + $0x310] sm:$0xff]
        %1117 = vst [vmem:[%s1017 + $0x310] sm:$0xff] %v1116
        %v1118 = vld [vmem:[%s1016 + $0x320] sm:$0xff]
        %1119 = vst [vmem:[%s1017 + $0x320] sm:$0xff] %v1118
        %v1120 = vld [vmem:[%s1016 + $0x330] sm:$0xff]
        %1121 = vst [vmem:[%s1017 + $0x330] sm:$0xff] %v1120
        %v1122 = vld [vmem:[%s1016 + $0x340] sm:$0xff]
        %1123 = vst [vmem:[%s1017 + $0x340] sm:$0xff] %v1122
        %v1124 = vld [vmem:[%s1016 + $0x350] sm:$0xff]
        %1125 = vst [vmem:[%s1017 + $0x350] sm:$0xff] %v1124
        %v1126 = vld [vmem:[%s1016 + $0x360] sm:$0xff]
        %1127 = vst [vmem:[%s1017 + $0x360] sm:$0xff] %v1126
        %v1128 = vld [vmem:[%s1016 + $0x370] sm:$0xff]
        %1129 = vst [vmem:[%s1017 + $0x370] sm:$0xff] %v1128
        %v1130 = vld [vmem:[%s1016 + $0x380] sm:$0xff]
        %1131 = vst [vmem:[%s1017 + $0x380] sm:$0xff] %v1130
        %v1132 = vld [vmem:[%s1016 + $0x390] sm:$0xff]
        %1133 = vst [vmem:[%s1017 + $0x390] sm:$0xff] %v1132
        %v1134 = vld [vmem:[%s1016 + $0x3a0] sm:$0xff]
        %1135 = vst [vmem:[%s1017 + $0x3a0] sm:$0xff] %v1134
        %v1136 = vld [vmem:[%s1016 + $0x3b0] sm:$0xff]
        %1137 = vst [vmem:[%s1017 + $0x3b0] sm:$0xff] %v1136
        %v1138 = vld [vmem:[%s1016 + $0x3c0] sm:$0xff]
        %1139 = vst [vmem:[%s1017 + $0x3c0] sm:$0xff] %v1138
        %v1140 = vld [vmem:[%s1016 + $0x3d0] sm:$0xff]
        %1141 = vst [vmem:[%s1017 + $0x3d0] sm:$0xff] %v1140
        %v1142 = vld [vmem:[%s1016 + $0x3e0] sm:$0xff]
        %1143 = vst [vmem:[%s1017 + $0x3e0] sm:$0xff] %v1142
        %v1144 = vld [vmem:[%s1016 + $0x3f0] sm:$0xff]
        %1145 = vst [vmem:[%s1017 + $0x3f0] sm:$0xff] %v1144
        %v1146 = vld [vmem:[%s1016 + $0x400] sm:$0xff]
        %1147 = vst [vmem:[%s1017 + $0x400] sm:$0xff] %v1146
        %v1148 = vld [vmem:[%s1016 + $0x410] sm:$0xff]
        %1149 = vst [vmem:[%s1017 + $0x410] sm:$0xff] %v1148
        %v1150 = vld [vmem:[%s1016 + $0x420] sm:$0xff]
        %1151 = vst [vmem:[%s1017 + $0x420] sm:$0xff] %v1150
        %v1152 = vld [vmem:[%s1016 + $0x430] sm:$0xff]
        %1153 = vst [vmem:[%s1017 + $0x430] sm:$0xff] %v1152
        %v1154 = vld [vmem:[%s1016 + $0x440] sm:$0xff]
        %1155 = vst [vmem:[%s1017 + $0x440] sm:$0xff] %v1154
        %v1156 = vld [vmem:[%s1016 + $0x450] sm:$0xff]
        %1157 = vst [vmem:[%s1017 + $0x450] sm:$0xff] %v1156
        %v1158 = vld [vmem:[%s1016 + $0x460] sm:$0xff]
        %1159 = vst [vmem:[%s1017 + $0x460] sm:$0xff] %v1158
        %v1160 = vld [vmem:[%s1016 + $0x470] sm:$0xff]
        %1161 = vst [vmem:[%s1017 + $0x470] sm:$0xff] %v1160
        %v1162 = vld [vmem:[%s1016 + $0x480] sm:$0xff]
        %1163 = vst [vmem:[%s1017 + $0x480] sm:$0xff] %v1162
        %v1164 = vld [vmem:[%s1016 + $0x490] sm:$0xff]
        %1165 = vst [vmem:[%s1017 + $0x490] sm:$0xff] %v1164
        %v1166 = vld [vmem:[%s1016 + $0x4a0] sm:$0xff]
        %1167 = vst [vmem:[%s1017 + $0x4a0] sm:$0xff] %v1166
        %v1168 = vld [vmem:[%s1016 + $0x4b0] sm:$0xff]
        %1169 = vst [vmem:[%s1017 + $0x4b0] sm:$0xff] %v1168
        %v1170 = vld [vmem:[%s1016 + $0x4c0] sm:$0xff]
        %1171 = vst [vmem:[%s1017 + $0x4c0] sm:$0xff] %v1170
        %v1172 = vld [vmem:[%s1016 + $0x4d0] sm:$0xff]
        %1173 = vst [vmem:[%s1017 + $0x4d0] sm:$0xff] %v1172
        %v1174 = vld [vmem:[%s1016 + $0x4e0] sm:$0xff]
        %1175 = vst [vmem:[%s1017 + $0x4e0] sm:$0xff] %v1174
        %v1176 = vld [vmem:[%s1016 + $0x4f0] sm:$0xff]
        %1177 = vst [vmem:[%s1017 + $0x4f0] sm:$0xff] %v1176
        %v1178 = vld [vmem:[%s1016 + $0x500] sm:$0xff]
        %1179 = vst [vmem:[%s1017 + $0x500] sm:$0xff] %v1178
        %v1180 = vld [vmem:[%s1016 + $0x510] sm:$0xff]
        %1181 = vst [vmem:[%s1017 + $0x510] sm:$0xff] %v1180
        %v1182 = vld [vmem:[%s1016 + $0x520] sm:$0xff]
        %1183 = vst [vmem:[%s1017 + $0x520] sm:$0xff] %v1182
        %v1184 = vld [vmem:[%s1016 + $0x530] sm:$0xff]
        %1185 = vst [vmem:[%s1017 + $0x530] sm:$0xff] %v1184
        %v1186 = vld [vmem:[%s1016 + $0x540] sm:$0xff]
        %1187 = vst [vmem:[%s1017 + $0x540] sm:$0xff] %v1186
        %v1188 = vld [vmem:[%s1016 + $0x550] sm:$0xff]
        %1189 = vst [vmem:[%s1017 + $0x550] sm:$0xff] %v1188
        %v1190 = vld [vmem:[%s1016 + $0x560] sm:$0xff]
        %1191 = vst [vmem:[%s1017 + $0x560] sm:$0xff] %v1190
        %v1192 = vld [vmem:[%s1016 + $0x570] sm:$0xff]
        %1193 = vst [vmem:[%s1017 + $0x570] sm:$0xff] %v1192
        %v1194 = vld [vmem:[%s1016 + $0x580] sm:$0xff]
        %1195 = vst [vmem:[%s1017 + $0x580] sm:$0xff] %v1194
        %v1196 = vld [vmem:[%s1016 + $0x590] sm:$0xff]
        %1197 = vst [vmem:[%s1017 + $0x590] sm:$0xff] %v1196
        %v1198 = vld [vmem:[%s1016 + $0x5a0] sm:$0xff]
        %1199 = vst [vmem:[%s1017 + $0x5a0] sm:$0xff] %v1198
        %v1200 = vld [vmem:[%s1016 + $0x5b0] sm:$0xff]
        %1201 = vst [vmem:[%s1017 + $0x5b0] sm:$0xff] %v1200
        %v1202 = vld [vmem:[%s1016 + $0x5c0] sm:$0xff]
        %1203 = vst [vmem:[%s1017 + $0x5c0] sm:$0xff] %v1202
        %v1204 = vld [vmem:[%s1016 + $0x5d0] sm:$0xff]
        %1205 = vst [vmem:[%s1017 + $0x5d0] sm:$0xff] %v1204
        %v1206 = vld [vmem:[%s1016 + $0x5e0] sm:$0xff]
        %1207 = vst [vmem:[%s1017 + $0x5e0] sm:$0xff] %v1206
        %v1208 = vld [vmem:[%s1016 + $0x5f0] sm:$0xff]
        %1209 = vst [vmem:[%s1017 + $0x5f0] sm:$0xff] %v1208
        %v1210 = vld [vmem:[%s1016 + $0x600] sm:$0xff]
        %1211 = vst [vmem:[%s1017 + $0x600] sm:$0xff] %v1210
        %v1212 = vld [vmem:[%s1016 + $0x610] sm:$0xff]
        %1213 = vst [vmem:[%s1017 + $0x610] sm:$0xff] %v1212
        %v1214 = vld [vmem:[%s1016 + $0x620] sm:$0xff]
        %1215 = vst [vmem:[%s1017 + $0x620] sm:$0xff] %v1214
        %v1216 = vld [vmem:[%s1016 + $0x630] sm:$0xff]
        %1217 = vst [vmem:[%s1017 + $0x630] sm:$0xff] %v1216
        %v1218 = vld [vmem:[%s1016 + $0x640] sm:$0xff]
        %1219 = vst [vmem:[%s1017 + $0x640] sm:$0xff] %v1218
        %v1220 = vld [vmem:[%s1016 + $0x650] sm:$0xff]
        %1221 = vst [vmem:[%s1017 + $0x650] sm:$0xff] %v1220
        %v1222 = vld [vmem:[%s1016 + $0x660] sm:$0xff]
        %1223 = vst [vmem:[%s1017 + $0x660] sm:$0xff] %v1222
        %v1224 = vld [vmem:[%s1016 + $0x670] sm:$0xff]
        %1225 = vst [vmem:[%s1017 + $0x670] sm:$0xff] %v1224
        %v1226 = vld [vmem:[%s1016 + $0x680] sm:$0xff]
        %1227 = vst [vmem:[%s1017 + $0x680] sm:$0xff] %v1226
        %v1228 = vld [vmem:[%s1016 + $0x690] sm:$0xff]
        %1229 = vst [vmem:[%s1017 + $0x690] sm:$0xff] %v1228
        %v1230 = vld [vmem:[%s1016 + $0x6a0] sm:$0xff]
        %1231 = vst [vmem:[%s1017 + $0x6a0] sm:$0xff] %v1230
        %v1232 = vld [vmem:[%s1016 + $0x6b0] sm:$0xff]
        %1233 = vst [vmem:[%s1017 + $0x6b0] sm:$0xff] %v1232
        %v1234 = vld [vmem:[%s1016 + $0x6c0] sm:$0xff]
        %1235 = vst [vmem:[%s1017 + $0x6c0] sm:$0xff] %v1234
        %v1236 = vld [vmem:[%s1016 + $0x6d0] sm:$0xff]
        %1237 = vst [vmem:[%s1017 + $0x6d0] sm:$0xff] %v1236
        %v1238 = vld [vmem:[%s1016 + $0x6e0] sm:$0xff]
        %1239 = vst [vmem:[%s1017 + $0x6e0] sm:$0xff] %v1238
        %v1240 = vld [vmem:[%s1016 + $0x6f0] sm:$0xff]
        %1241 = vst [vmem:[%s1017 + $0x6f0] sm:$0xff] %v1240
        %v1242 = vld [vmem:[%s1016 + $0x700] sm:$0xff]
        %1243 = vst [vmem:[%s1017 + $0x700] sm:$0xff] %v1242
        %v1244 = vld [vmem:[%s1016 + $0x710] sm:$0xff]
        %1245 = vst [vmem:[%s1017 + $0x710] sm:$0xff] %v1244
        %v1246 = vld [vmem:[%s1016 + $0x720] sm:$0xff]
        %1247 = vst [vmem:[%s1017 + $0x720] sm:$0xff] %v1246
        %v1248 = vld [vmem:[%s1016 + $0x730] sm:$0xff]
        %1249 = vst [vmem:[%s1017 + $0x730] sm:$0xff] %v1248
        %v1250 = vld [vmem:[%s1016 + $0x740] sm:$0xff]
        %1251 = vst [vmem:[%s1017 + $0x740] sm:$0xff] %v1250
        %v1252 = vld [vmem:[%s1016 + $0x750] sm:$0xff]
        %1253 = vst [vmem:[%s1017 + $0x750] sm:$0xff] %v1252
        %v1254 = vld [vmem:[%s1016 + $0x760] sm:$0xff]
        %1255 = vst [vmem:[%s1017 + $0x760] sm:$0xff] %v1254
        %v1256 = vld [vmem:[%s1016 + $0x770] sm:$0xff]
        %1257 = vst [vmem:[%s1017 + $0x770] sm:$0xff] %v1256
        %v1258 = vld [vmem:[%s1016 + $0x780] sm:$0xff]
        %1259 = vst [vmem:[%s1017 + $0x780] sm:$0xff] %v1258
        %v1260 = vld [vmem:[%s1016 + $0x790] sm:$0xff]
        %1261 = vst [vmem:[%s1017 + $0x790] sm:$0xff] %v1260
        %v1262 = vld [vmem:[%s1016 + $0x7a0] sm:$0xff]
        %1263 = vst [vmem:[%s1017 + $0x7a0] sm:$0xff] %v1262
        %v1264 = vld [vmem:[%s1016 + $0x7b0] sm:$0xff]
        %1265 = vst [vmem:[%s1017 + $0x7b0] sm:$0xff] %v1264
        %v1266 = vld [vmem:[%s1016 + $0x7c0] sm:$0xff]
        %1267 = vst [vmem:[%s1017 + $0x7c0] sm:$0xff] %v1266
        %v1268 = vld [vmem:[%s1016 + $0x7d0] sm:$0xff]
        %1269 = vst [vmem:[%s1017 + $0x7d0] sm:$0xff] %v1268
        %v1270 = vld [vmem:[%s1016 + $0x7e0] sm:$0xff]
        %1271 = vst [vmem:[%s1017 + $0x7e0] sm:$0xff] %v1270
        %v1272 = vld [vmem:[%s1016 + $0x7f0] sm:$0xff]
        %1273 = vst [vmem:[%s1017 + $0x7f0] sm:$0xff] %v1272
        %v1274 = vld [vmem:[%s1016 + $0x800] sm:$0xff]
        %1275 = vst [vmem:[%s1017 + $0x800] sm:$0xff] %v1274
        %v1276 = vld [vmem:[%s1016 + $0x810] sm:$0xff]
        %1277 = vst [vmem:[%s1017 + $0x810] sm:$0xff] %v1276
        %v1278 = vld [vmem:[%s1016 + $0x820] sm:$0xff]
        %1279 = vst [vmem:[%s1017 + $0x820] sm:$0xff] %v1278
        %v1280 = vld [vmem:[%s1016 + $0x830] sm:$0xff]
        %1281 = vst [vmem:[%s1017 + $0x830] sm:$0xff] %v1280
        %v1282 = vld [vmem:[%s1016 + $0x840] sm:$0xff]
        %1283 = vst [vmem:[%s1017 + $0x840] sm:$0xff] %v1282
        %v1284 = vld [vmem:[%s1016 + $0x850] sm:$0xff]
        %1285 = vst [vmem:[%s1017 + $0x850] sm:$0xff] %v1284
        %v1286 = vld [vmem:[%s1016 + $0x860] sm:$0xff]
        %1287 = vst [vmem:[%s1017 + $0x860] sm:$0xff] %v1286
        %v1288 = vld [vmem:[%s1016 + $0x870] sm:$0xff]
        %1289 = vst [vmem:[%s1017 + $0x870] sm:$0xff] %v1288
        %v1290 = vld [vmem:[%s1016 + $0x880] sm:$0xff]
        %1291 = vst [vmem:[%s1017 + $0x880] sm:$0xff] %v1290
        %v1292 = vld [vmem:[%s1016 + $0x890] sm:$0xff]
        %1293 = vst [vmem:[%s1017 + $0x890] sm:$0xff] %v1292
        %v1294 = vld [vmem:[%s1016 + $0x8a0] sm:$0xff]
        %1295 = vst [vmem:[%s1017 + $0x8a0] sm:$0xff] %v1294
        %v1296 = vld [vmem:[%s1016 + $0x8b0] sm:$0xff]
        %1297 = vst [vmem:[%s1017 + $0x8b0] sm:$0xff] %v1296
        %v1298 = vld [vmem:[%s1016 + $0x8c0] sm:$0xff]
        %1299 = vst [vmem:[%s1017 + $0x8c0] sm:$0xff] %v1298
        %v1300 = vld [vmem:[%s1016 + $0x8d0] sm:$0xff]
        %1301 = vst [vmem:[%s1017 + $0x8d0] sm:$0xff] %v1300
        %v1302 = vld [vmem:[%s1016 + $0x8e0] sm:$0xff]
        %1303 = vst [vmem:[%s1017 + $0x8e0] sm:$0xff] %v1302
        %v1304 = vld [vmem:[%s1016 + $0x8f0] sm:$0xff]
        %1305 = vst [vmem:[%s1017 + $0x8f0] sm:$0xff] %v1304
        %v1306 = vld [vmem:[%s1016 + $0x900] sm:$0xff]
        %1307 = vst [vmem:[%s1017 + $0x900] sm:$0xff] %v1306
        %v1308 = vld [vmem:[%s1016 + $0x910] sm:$0xff]
        %1309 = vst [vmem:[%s1017 + $0x910] sm:$0xff] %v1308
        %v1310 = vld [vmem:[%s1016 + $0x920] sm:$0xff]
        %1311 = vst [vmem:[%s1017 + $0x920] sm:$0xff] %v1310
        %v1312 = vld [vmem:[%s1016 + $0x930] sm:$0xff]
        %1313 = vst [vmem:[%s1017 + $0x930] sm:$0xff] %v1312
        %v1314 = vld [vmem:[%s1016 + $0x940] sm:$0xff]
        %1315 = vst [vmem:[%s1017 + $0x940] sm:$0xff] %v1314
        %v1316 = vld [vmem:[%s1016 + $0x950] sm:$0xff]
        %1317 = vst [vmem:[%s1017 + $0x950] sm:$0xff] %v1316
        %v1318 = vld [vmem:[%s1016 + $0x960] sm:$0xff]
        %1319 = vst [vmem:[%s1017 + $0x960] sm:$0xff] %v1318
        %v1320 = vld [vmem:[%s1016 + $0x970] sm:$0xff]
        %1321 = vst [vmem:[%s1017 + $0x970] sm:$0xff] %v1320
        %v1322 = vld [vmem:[%s1016 + $0x980] sm:$0xff]
        %1323 = vst [vmem:[%s1017 + $0x980] sm:$0xff] %v1322
        %v1324 = vld [vmem:[%s1016 + $0x990] sm:$0xff]
        %1325 = vst [vmem:[%s1017 + $0x990] sm:$0xff] %v1324
        %v1326 = vld [vmem:[%s1016 + $0x9a0] sm:$0xff]
        %1327 = vst [vmem:[%s1017 + $0x9a0] sm:$0xff] %v1326
        %v1328 = vld [vmem:[%s1016 + $0x9b0] sm:$0xff]
        %1329 = vst [vmem:[%s1017 + $0x9b0] sm:$0xff] %v1328
        %v1330 = vld [vmem:[%s1016 + $0x9c0] sm:$0xff]
        %1331 = vst [vmem:[%s1017 + $0x9c0] sm:$0xff] %v1330
        %v1332 = vld [vmem:[%s1016 + $0x9d0] sm:$0xff]
        %1333 = vst [vmem:[%s1017 + $0x9d0] sm:$0xff] %v1332
        %v1334 = vld [vmem:[%s1016 + $0x9e0] sm:$0xff]
        %1335 = vst [vmem:[%s1017 + $0x9e0] sm:$0xff] %v1334
        %v1336 = vld [vmem:[%s1016 + $0x9f0] sm:$0xff]
        %1337 = vst [vmem:[%s1017 + $0x9f0] sm:$0xff] %v1336
        %v1338 = vld [vmem:[%s1016 + $0xa00] sm:$0xff]
        %1339 = vst [vmem:[%s1017 + $0xa00] sm:$0xff] %v1338
        %v1340 = vld [vmem:[%s1016 + $0xa10] sm:$0xff]
        %1341 = vst [vmem:[%s1017 + $0xa10] sm:$0xff] %v1340
        %v1342 = vld [vmem:[%s1016 + $0xa20] sm:$0xff]
        %1343 = vst [vmem:[%s1017 + $0xa20] sm:$0xff] %v1342
        %v1344 = vld [vmem:[%s1016 + $0xa30] sm:$0xff]
        %1345 = vst [vmem:[%s1017 + $0xa30] sm:$0xff] %v1344
        %v1346 = vld [vmem:[%s1016 + $0xa40] sm:$0xff]
        %1347 = vst [vmem:[%s1017 + $0xa40] sm:$0xff] %v1346
        %v1348 = vld [vmem:[%s1016 + $0xa50] sm:$0xff]
        %1349 = vst [vmem:[%s1017 + $0xa50] sm:$0xff] %v1348
        %v1350 = vld [vmem:[%s1016 + $0xa60] sm:$0xff]
        %1351 = vst [vmem:[%s1017 + $0xa60] sm:$0xff] %v1350
        %v1352 = vld [vmem:[%s1016 + $0xa70] sm:$0xff]
        %1353 = vst [vmem:[%s1017 + $0xa70] sm:$0xff] %v1352
        %v1354 = vld [vmem:[%s1016 + $0xa80] sm:$0xff]
        %1355 = vst [vmem:[%s1017 + $0xa80] sm:$0xff] %v1354
        %v1356 = vld [vmem:[%s1016 + $0xa90] sm:$0xff]
        %1357 = vst [vmem:[%s1017 + $0xa90] sm:$0xff] %v1356
        %v1358 = vld [vmem:[%s1016 + $0xaa0] sm:$0xff]
        %1359 = vst [vmem:[%s1017 + $0xaa0] sm:$0xff] %v1358
        %v1360 = vld [vmem:[%s1016 + $0xab0] sm:$0xff]
        %1361 = vst [vmem:[%s1017 + $0xab0] sm:$0xff] %v1360
        %v1362 = vld [vmem:[%s1016 + $0xac0] sm:$0xff]
        %1363 = vst [vmem:[%s1017 + $0xac0] sm:$0xff] %v1362
        %v1364 = vld [vmem:[%s1016 + $0xad0] sm:$0xff]
        %1365 = vst [vmem:[%s1017 + $0xad0] sm:$0xff] %v1364
        %v1366 = vld [vmem:[%s1016 + $0xae0] sm:$0xff]
        %1367 = vst [vmem:[%s1017 + $0xae0] sm:$0xff] %v1366
        %v1368 = vld [vmem:[%s1016 + $0xaf0] sm:$0xff]
        %1369 = vst [vmem:[%s1017 + $0xaf0] sm:$0xff] %v1368
        %v1370 = vld [vmem:[%s1016 + $0xb00] sm:$0xff]
        %1371 = vst [vmem:[%s1017 + $0xb00] sm:$0xff] %v1370
        %v1372 = vld [vmem:[%s1016 + $0xb10] sm:$0xff]
        %1373 = vst [vmem:[%s1017 + $0xb10] sm:$0xff] %v1372
        %v1374 = vld [vmem:[%s1016 + $0xb20] sm:$0xff]
        %1375 = vst [vmem:[%s1017 + $0xb20] sm:$0xff] %v1374
        %v1376 = vld [vmem:[%s1016 + $0xb30] sm:$0xff]
        %1377 = vst [vmem:[%s1017 + $0xb30] sm:$0xff] %v1376
        %v1378 = vld [vmem:[%s1016 + $0xb40] sm:$0xff]
        %1379 = vst [vmem:[%s1017 + $0xb40] sm:$0xff] %v1378
        %v1380 = vld [vmem:[%s1016 + $0xb50] sm:$0xff]
        %1381 = vst [vmem:[%s1017 + $0xb50] sm:$0xff] %v1380
        %v1382 = vld [vmem:[%s1016 + $0xb60] sm:$0xff]
        %1383 = vst [vmem:[%s1017 + $0xb60] sm:$0xff] %v1382
        %v1384 = vld [vmem:[%s1016 + $0xb70] sm:$0xff]
        %1385 = vst [vmem:[%s1017 + $0xb70] sm:$0xff] %v1384
        %v1386 = vld [vmem:[%s1016 + $0xb80] sm:$0xff]
        %1387 = vst [vmem:[%s1017 + $0xb80] sm:$0xff] %v1386
        %v1388 = vld [vmem:[%s1016 + $0xb90] sm:$0xff]
        %1389 = vst [vmem:[%s1017 + $0xb90] sm:$0xff] %v1388
        %v1390 = vld [vmem:[%s1016 + $0xba0] sm:$0xff]
        %1391 = vst [vmem:[%s1017 + $0xba0] sm:$0xff] %v1390
        %v1392 = vld [vmem:[%s1016 + $0xbb0] sm:$0xff]
        %1393 = vst [vmem:[%s1017 + $0xbb0] sm:$0xff] %v1392
        %v1394 = vld [vmem:[%s1016 + $0xbc0] sm:$0xff]
        %1395 = vst [vmem:[%s1017 + $0xbc0] sm:$0xff] %v1394
        %v1396 = vld [vmem:[%s1016 + $0xbd0] sm:$0xff]
        %1397 = vst [vmem:[%s1017 + $0xbd0] sm:$0xff] %v1396
        %v1398 = vld [vmem:[%s1016 + $0xbe0] sm:$0xff]
        %1399 = vst [vmem:[%s1017 + $0xbe0] sm:$0xff] %v1398
        %v1400 = vld [vmem:[%s1016 + $0xbf0] sm:$0xff]
        %1401 = vst [vmem:[%s1017 + $0xbf0] sm:$0xff] %v1400
        %v1402 = vld [vmem:[%s1016 + $0xc00] sm:$0xff]
        %1403 = vst [vmem:[%s1017 + $0xc00] sm:$0xff] %v1402
        %v1404 = vld [vmem:[%s1016 + $0xc10] sm:$0xff]
        %1405 = vst [vmem:[%s1017 + $0xc10] sm:$0xff] %v1404
        %v1406 = vld [vmem:[%s1016 + $0xc20] sm:$0xff]
        %1407 = vst [vmem:[%s1017 + $0xc20] sm:$0xff] %v1406
        %v1408 = vld [vmem:[%s1016 + $0xc30] sm:$0xff]
        %1409 = vst [vmem:[%s1017 + $0xc30] sm:$0xff] %v1408
        %v1410 = vld [vmem:[%s1016 + $0xc40] sm:$0xff]
        %1411 = vst [vmem:[%s1017 + $0xc40] sm:$0xff] %v1410
        %v1412 = vld [vmem:[%s1016 + $0xc50] sm:$0xff]
        %1413 = vst [vmem:[%s1017 + $0xc50] sm:$0xff] %v1412
        %v1414 = vld [vmem:[%s1016 + $0xc60] sm:$0xff]
        %1415 = vst [vmem:[%s1017 + $0xc60] sm:$0xff] %v1414
        %v1416 = vld [vmem:[%s1016 + $0xc70] sm:$0xff]
        %1417 = vst [vmem:[%s1017 + $0xc70] sm:$0xff] %v1416
        %v1418 = vld [vmem:[%s1016 + $0xc80] sm:$0xff]
        %1419 = vst [vmem:[%s1017 + $0xc80] sm:$0xff] %v1418
        %v1420 = vld [vmem:[%s1016 + $0xc90] sm:$0xff]
        %1421 = vst [vmem:[%s1017 + $0xc90] sm:$0xff] %v1420
        %v1422 = vld [vmem:[%s1016 + $0xca0] sm:$0xff]
        %1423 = vst [vmem:[%s1017 + $0xca0] sm:$0xff] %v1422
        %v1424 = vld [vmem:[%s1016 + $0xcb0] sm:$0xff]
        %1425 = vst [vmem:[%s1017 + $0xcb0] sm:$0xff] %v1424
        %v1426 = vld [vmem:[%s1016 + $0xcc0] sm:$0xff]
        %1427 = vst [vmem:[%s1017 + $0xcc0] sm:$0xff] %v1426
        %v1428 = vld [vmem:[%s1016 + $0xcd0] sm:$0xff]
        %1429 = vst [vmem:[%s1017 + $0xcd0] sm:$0xff] %v1428
        %v1430 = vld [vmem:[%s1016 + $0xce0] sm:$0xff]
        %1431 = vst [vmem:[%s1017 + $0xce0] sm:$0xff] %v1430
        %v1432 = vld [vmem:[%s1016 + $0xcf0] sm:$0xff]
        %1433 = vst [vmem:[%s1017 + $0xcf0] sm:$0xff] %v1432
        %v1434 = vld [vmem:[%s1016 + $0xd00] sm:$0xff]
        %1435 = vst [vmem:[%s1017 + $0xd00] sm:$0xff] %v1434
        %v1436 = vld [vmem:[%s1016 + $0xd10] sm:$0xff]
        %1437 = vst [vmem:[%s1017 + $0xd10] sm:$0xff] %v1436
        %v1438 = vld [vmem:[%s1016 + $0xd20] sm:$0xff]
        %1439 = vst [vmem:[%s1017 + $0xd20] sm:$0xff] %v1438
        %v1440 = vld [vmem:[%s1016 + $0xd30] sm:$0xff]
        %1441 = vst [vmem:[%s1017 + $0xd30] sm:$0xff] %v1440
        %v1442 = vld [vmem:[%s1016 + $0xd40] sm:$0xff]
        %1443 = vst [vmem:[%s1017 + $0xd40] sm:$0xff] %v1442
        %v1444 = vld [vmem:[%s1016 + $0xd50] sm:$0xff]
        %1445 = vst [vmem:[%s1017 + $0xd50] sm:$0xff] %v1444
        %v1446 = vld [vmem:[%s1016 + $0xd60] sm:$0xff]
        %1447 = vst [vmem:[%s1017 + $0xd60] sm:$0xff] %v1446
        %v1448 = vld [vmem:[%s1016 + $0xd70] sm:$0xff]
        %1449 = vst [vmem:[%s1017 + $0xd70] sm:$0xff] %v1448
        %v1450 = vld [vmem:[%s1016 + $0xd80] sm:$0xff]
        %1451 = vst [vmem:[%s1017 + $0xd80] sm:$0xff] %v1450
        %v1452 = vld [vmem:[%s1016 + $0xd90] sm:$0xff]
        %1453 = vst [vmem:[%s1017 + $0xd90] sm:$0xff] %v1452
        %v1454 = vld [vmem:[%s1016 + $0xda0] sm:$0xff]
        %1455 = vst [vmem:[%s1017 + $0xda0] sm:$0xff] %v1454
        %v1456 = vld [vmem:[%s1016 + $0xdb0] sm:$0xff]
        %1457 = vst [vmem:[%s1017 + $0xdb0] sm:$0xff] %v1456
        %v1458 = vld [vmem:[%s1016 + $0xdc0] sm:$0xff]
        %1459 = vst [vmem:[%s1017 + $0xdc0] sm:$0xff] %v1458
        %v1460 = vld [vmem:[%s1016 + $0xdd0] sm:$0xff]
        %1461 = vst [vmem:[%s1017 + $0xdd0] sm:$0xff] %v1460
        %v1462 = vld [vmem:[%s1016 + $0xde0] sm:$0xff]
        %1463 = vst [vmem:[%s1017 + $0xde0] sm:$0xff] %v1462
        %v1464 = vld [vmem:[%s1016 + $0xdf0] sm:$0xff]
        %1465 = vst [vmem:[%s1017 + $0xdf0] sm:$0xff] %v1464
        %v1466 = vld [vmem:[%s1016 + $0xe00] sm:$0xff]
        %1467 = vst [vmem:[%s1017 + $0xe00] sm:$0xff] %v1466
        %v1468 = vld [vmem:[%s1016 + $0xe10] sm:$0xff]
        %1469 = vst [vmem:[%s1017 + $0xe10] sm:$0xff] %v1468
        %v1470 = vld [vmem:[%s1016 + $0xe20] sm:$0xff]
        %1471 = vst [vmem:[%s1017 + $0xe20] sm:$0xff] %v1470
        %v1472 = vld [vmem:[%s1016 + $0xe30] sm:$0xff]
        %1473 = vst [vmem:[%s1017 + $0xe30] sm:$0xff] %v1472
        %v1474 = vld [vmem:[%s1016 + $0xe40] sm:$0xff]
        %1475 = vst [vmem:[%s1017 + $0xe40] sm:$0xff] %v1474
        %v1476 = vld [vmem:[%s1016 + $0xe50] sm:$0xff]
        %1477 = vst [vmem:[%s1017 + $0xe50] sm:$0xff] %v1476
        %v1478 = vld [vmem:[%s1016 + $0xe60] sm:$0xff]
        %1479 = vst [vmem:[%s1017 + $0xe60] sm:$0xff] %v1478
        %v1480 = vld [vmem:[%s1016 + $0xe70] sm:$0xff]
        %1481 = vst [vmem:[%s1017 + $0xe70] sm:$0xff] %v1480
        %v1482 = vld [vmem:[%s1016 + $0xe80] sm:$0xff]
        %1483 = vst [vmem:[%s1017 + $0xe80] sm:$0xff] %v1482
        %v1484 = vld [vmem:[%s1016 + $0xe90] sm:$0xff]
        %1485 = vst [vmem:[%s1017 + $0xe90] sm:$0xff] %v1484
        %v1486 = vld [vmem:[%s1016 + $0xea0] sm:$0xff]
        %1487 = vst [vmem:[%s1017 + $0xea0] sm:$0xff] %v1486
        %v1488 = vld [vmem:[%s1016 + $0xeb0] sm:$0xff]
        %1489 = vst [vmem:[%s1017 + $0xeb0] sm:$0xff] %v1488
        %v1490 = vld [vmem:[%s1016 + $0xec0] sm:$0xff]
        %1491 = vst [vmem:[%s1017 + $0xec0] sm:$0xff] %v1490
        %v1492 = vld [vmem:[%s1016 + $0xed0] sm:$0xff]
        %1493 = vst [vmem:[%s1017 + $0xed0] sm:$0xff] %v1492
        %v1494 = vld [vmem:[%s1016 + $0xee0] sm:$0xff]
        %1495 = vst [vmem:[%s1017 + $0xee0] sm:$0xff] %v1494
        %v1496 = vld [vmem:[%s1016 + $0xef0] sm:$0xff]
        %1497 = vst [vmem:[%s1017 + $0xef0] sm:$0xff] %v1496
        %v1498 = vld [vmem:[%s1016 + $0xf00] sm:$0xff]
        %1499 = vst [vmem:[%s1017 + $0xf00] sm:$0xff] %v1498
        %v1500 = vld [vmem:[%s1016 + $0xf10] sm:$0xff]
        %1501 = vst [vmem:[%s1017 + $0xf10] sm:$0xff] %v1500
        %v1502 = vld [vmem:[%s1016 + $0xf20] sm:$0xff]
        %1503 = vst [vmem:[%s1017 + $0xf20] sm:$0xff] %v1502
        %v1504 = vld [vmem:[%s1016 + $0xf30] sm:$0xff]
        %1505 = vst [vmem:[%s1017 + $0xf30] sm:$0xff] %v1504
        %v1506 = vld [vmem:[%s1016 + $0xf40] sm:$0xff]
        %1507 = vst [vmem:[%s1017 + $0xf40] sm:$0xff] %v1506
        %v1508 = vld [vmem:[%s1016 + $0xf50] sm:$0xff]
        %1509 = vst [vmem:[%s1017 + $0xf50] sm:$0xff] %v1508
        %v1510 = vld [vmem:[%s1016 + $0xf60] sm:$0xff]
        %1511 = vst [vmem:[%s1017 + $0xf60] sm:$0xff] %v1510
        %v1512 = vld [vmem:[%s1016 + $0xf70] sm:$0xff]
        %1513 = vst [vmem:[%s1017 + $0xf70] sm:$0xff] %v1512
        %v1514 = vld [vmem:[%s1016 + $0xf80] sm:$0xff]
        %1515 = vst [vmem:[%s1017 + $0xf80] sm:$0xff] %v1514
        %v1516 = vld [vmem:[%s1016 + $0xf90] sm:$0xff]
        %1517 = vst [vmem:[%s1017 + $0xf90] sm:$0xff] %v1516
        %v1518 = vld [vmem:[%s1016 + $0xfa0] sm:$0xff]
        %1519 = vst [vmem:[%s1017 + $0xfa0] sm:$0xff] %v1518
        %v1520 = vld [vmem:[%s1016 + $0xfb0] sm:$0xff]
        %1521 = vst [vmem:[%s1017 + $0xfb0] sm:$0xff] %v1520
        %v1522 = vld [vmem:[%s1016 + $0xfc0] sm:$0xff]
        %1523 = vst [vmem:[%s1017 + $0xfc0] sm:$0xff] %v1522
        %v1524 = vld [vmem:[%s1016 + $0xfd0] sm:$0xff]
        %1525 = vst [vmem:[%s1017 + $0xfd0] sm:$0xff] %v1524
        %v1526 = vld [vmem:[%s1016 + $0xfe0] sm:$0xff]
        %1527 = vst [vmem:[%s1017 + $0xfe0] sm:$0xff] %v1526
        %v1528 = vld [vmem:[%s1016 + $0xff0] sm:$0xff]
        %1529 = vst [vmem:[%s1017 + $0xff0] sm:$0xff] %v1528
        %v1530 = vld [vmem:[%s1016 + $0x1000] sm:$0xff]
        %1531 = vst [vmem:[%s1017 + $0x1000] sm:$0xff] %v1530
        %v1532 = vld [vmem:[%s1016 + $0x1010] sm:$0xff]
        %1533 = vst [vmem:[%s1017 + $0x1010] sm:$0xff] %v1532
        %v1534 = vld [vmem:[%s1016 + $0x1020] sm:$0xff]
        %1535 = vst [vmem:[%s1017 + $0x1020] sm:$0xff] %v1534
        %v1536 = vld [vmem:[%s1016 + $0x1030] sm:$0xff]
        %1537 = vst [vmem:[%s1017 + $0x1030] sm:$0xff] %v1536
        %v1538 = vld [vmem:[%s1016 + $0x1040] sm:$0xff]
        %1539 = vst [vmem:[%s1017 + $0x1040] sm:$0xff] %v1538
        %v1540 = vld [vmem:[%s1016 + $0x1050] sm:$0xff]
        %1541 = vst [vmem:[%s1017 + $0x1050] sm:$0xff] %v1540
        %v1542 = vld [vmem:[%s1016 + $0x1060] sm:$0xff]
        %1543 = vst [vmem:[%s1017 + $0x1060] sm:$0xff] %v1542
        %v1544 = vld [vmem:[%s1016 + $0x1070] sm:$0xff]
        %1545 = vst [vmem:[%s1017 + $0x1070] sm:$0xff] %v1544
        %v1546 = vld [vmem:[%s1016 + $0x1080] sm:$0xff]
        %1547 = vst [vmem:[%s1017 + $0x1080] sm:$0xff] %v1546
        %v1548 = vld [vmem:[%s1016 + $0x1090] sm:$0xff]
        %1549 = vst [vmem:[%s1017 + $0x1090] sm:$0xff] %v1548
        %v1550 = vld [vmem:[%s1016 + $0x10a0] sm:$0xff]
        %1551 = vst [vmem:[%s1017 + $0x10a0] sm:$0xff] %v1550
        %v1552 = vld [vmem:[%s1016 + $0x10b0] sm:$0xff]
        %1553 = vst [vmem:[%s1017 + $0x10b0] sm:$0xff] %v1552
        %v1554 = vld [vmem:[%s1016 + $0x10c0] sm:$0xff]
        %1555 = vst [vmem:[%s1017 + $0x10c0] sm:$0xff] %v1554
        %v1556 = vld [vmem:[%s1016 + $0x10d0] sm:$0xff]
        %1557 = vst [vmem:[%s1017 + $0x10d0] sm:$0xff] %v1556
        %v1558 = vld [vmem:[%s1016 + $0x10e0] sm:$0xff]
        %1559 = vst [vmem:[%s1017 + $0x10e0] sm:$0xff] %v1558
        %v1560 = vld [vmem:[%s1016 + $0x10f0] sm:$0xff]
        %1561 = vst [vmem:[%s1017 + $0x10f0] sm:$0xff] %v1560
        %v1562 = vld [vmem:[%s1016 + $0x1100] sm:$0xff]
        %1563 = vst [vmem:[%s1017 + $0x1100] sm:$0xff] %v1562
        %v1564 = vld [vmem:[%s1016 + $0x1110] sm:$0xff]
        %1565 = vst [vmem:[%s1017 + $0x1110] sm:$0xff] %v1564
        %v1566 = vld [vmem:[%s1016 + $0x1120] sm:$0xff]
        %1567 = vst [vmem:[%s1017 + $0x1120] sm:$0xff] %v1566
        %v1568 = vld [vmem:[%s1016 + $0x1130] sm:$0xff]
        %1569 = vst [vmem:[%s1017 + $0x1130] sm:$0xff] %v1568
        %v1570 = vld [vmem:[%s1016 + $0x1140] sm:$0xff]
        %1571 = vst [vmem:[%s1017 + $0x1140] sm:$0xff] %v1570
        %v1572 = vld [vmem:[%s1016 + $0x1150] sm:$0xff]
        %1573 = vst [vmem:[%s1017 + $0x1150] sm:$0xff] %v1572
        %v1574 = vld [vmem:[%s1016 + $0x1160] sm:$0xff]
        %1575 = vst [vmem:[%s1017 + $0x1160] sm:$0xff] %v1574
        %v1576 = vld [vmem:[%s1016 + $0x1170] sm:$0xff]
        %1577 = vst [vmem:[%s1017 + $0x1170] sm:$0xff] %v1576
        %v1578 = vld [vmem:[%s1016 + $0x1180] sm:$0xff]
        %1579 = vst [vmem:[%s1017 + $0x1180] sm:$0xff] %v1578
        %v1580 = vld [vmem:[%s1016 + $0x1190] sm:$0xff]
        %1581 = vst [vmem:[%s1017 + $0x1190] sm:$0xff] %v1580
        %v1582 = vld [vmem:[%s1016 + $0x11a0] sm:$0xff]
        %1583 = vst [vmem:[%s1017 + $0x11a0] sm:$0xff] %v1582
        %v1584 = vld [vmem:[%s1016 + $0x11b0] sm:$0xff]
        %1585 = vst [vmem:[%s1017 + $0x11b0] sm:$0xff] %v1584
        %v1586 = vld [vmem:[%s1016 + $0x11c0] sm:$0xff]
        %1587 = vst [vmem:[%s1017 + $0x11c0] sm:$0xff] %v1586
        %v1588 = vld [vmem:[%s1016 + $0x11d0] sm:$0xff]
        %1589 = vst [vmem:[%s1017 + $0x11d0] sm:$0xff] %v1588
        %v1590 = vld [vmem:[%s1016 + $0x11e0] sm:$0xff]
        %1591 = vst [vmem:[%s1017 + $0x11e0] sm:$0xff] %v1590
        %v1592 = vld [vmem:[%s1016 + $0x11f0] sm:$0xff]
        %1593 = vst [vmem:[%s1017 + $0x11f0] sm:$0xff] %v1592
        %v1594 = vld [vmem:[%s1016 + $0x1200] sm:$0xff]
        %1595 = vst [vmem:[%s1017 + $0x1200] sm:$0xff] %v1594
        %v1596 = vld [vmem:[%s1016 + $0x1210] sm:$0xff]
        %1597 = vst [vmem:[%s1017 + $0x1210] sm:$0xff] %v1596
        %v1598 = vld [vmem:[%s1016 + $0x1220] sm:$0xff]
        %1599 = vst [vmem:[%s1017 + $0x1220] sm:$0xff] %v1598
        %v1600 = vld [vmem:[%s1016 + $0x1230] sm:$0xff]
        %1601 = vst [vmem:[%s1017 + $0x1230] sm:$0xff] %v1600
        %v1602 = vld [vmem:[%s1016 + $0x1240] sm:$0xff]
        %1603 = vst [vmem:[%s1017 + $0x1240] sm:$0xff] %v1602
        %v1604 = vld [vmem:[%s1016 + $0x1250] sm:$0xff]
        %1605 = vst [vmem:[%s1017 + $0x1250] sm:$0xff] %v1604
        %v1606 = vld [vmem:[%s1016 + $0x1260] sm:$0xff]
        %1607 = vst [vmem:[%s1017 + $0x1260] sm:$0xff] %v1606
        %v1608 = vld [vmem:[%s1016 + $0x1270] sm:$0xff]
        %1609 = vst [vmem:[%s1017 + $0x1270] sm:$0xff] %v1608
        %v1610 = vld [vmem:[%s1016 + $0x1280] sm:$0xff]
        %1611 = vst [vmem:[%s1017 + $0x1280] sm:$0xff] %v1610
        %v1612 = vld [vmem:[%s1016 + $0x1290] sm:$0xff]
        %1613 = vst [vmem:[%s1017 + $0x1290] sm:$0xff] %v1612
        %v1614 = vld [vmem:[%s1016 + $0x12a0] sm:$0xff]
        %1615 = vst [vmem:[%s1017 + $0x12a0] sm:$0xff] %v1614
        %v1616 = vld [vmem:[%s1016 + $0x12b0] sm:$0xff]
        %1617 = vst [vmem:[%s1017 + $0x12b0] sm:$0xff] %v1616
        %v1618 = vld [vmem:[%s1016 + $0x12c0] sm:$0xff]
        %1619 = vst [vmem:[%s1017 + $0x12c0] sm:$0xff] %v1618
        %v1620 = vld [vmem:[%s1016 + $0x12d0] sm:$0xff]
        %1621 = vst [vmem:[%s1017 + $0x12d0] sm:$0xff] %v1620
        %v1622 = vld [vmem:[%s1016 + $0x12e0] sm:$0xff]
        %1623 = vst [vmem:[%s1017 + $0x12e0] sm:$0xff] %v1622
        %v1624 = vld [vmem:[%s1016 + $0x12f0] sm:$0xff]
        %1625 = vst [vmem:[%s1017 + $0x12f0] sm:$0xff] %v1624
        %v1626 = vld [vmem:[%s1016 + $0x1300] sm:$0xff]
        %1627 = vst [vmem:[%s1017 + $0x1300] sm:$0xff] %v1626
        %v1628 = vld [vmem:[%s1016 + $0x1310] sm:$0xff]
        %1629 = vst [vmem:[%s1017 + $0x1310] sm:$0xff] %v1628
        %v1630 = vld [vmem:[%s1016 + $0x1320] sm:$0xff]
        %1631 = vst [vmem:[%s1017 + $0x1320] sm:$0xff] %v1630
        %v1632 = vld [vmem:[%s1016 + $0x1330] sm:$0xff]
        %1633 = vst [vmem:[%s1017 + $0x1330] sm:$0xff] %v1632
        %v1634 = vld [vmem:[%s1016 + $0x1340] sm:$0xff]
        %1635 = vst [vmem:[%s1017 + $0x1340] sm:$0xff] %v1634
        %v1636 = vld [vmem:[%s1016 + $0x1350] sm:$0xff]
        %1637 = vst [vmem:[%s1017 + $0x1350] sm:$0xff] %v1636
        %v1638 = vld [vmem:[%s1016 + $0x1360] sm:$0xff]
        %1639 = vst [vmem:[%s1017 + $0x1360] sm:$0xff] %v1638
        %v1640 = vld [vmem:[%s1016 + $0x1370] sm:$0xff]
        %1641 = vst [vmem:[%s1017 + $0x1370] sm:$0xff] %v1640
        %v1642 = vld [vmem:[%s1016 + $0x1380] sm:$0xff]
        %1643 = vst [vmem:[%s1017 + $0x1380] sm:$0xff] %v1642
        %v1644 = vld [vmem:[%s1016 + $0x1390] sm:$0xff]
        %1645 = vst [vmem:[%s1017 + $0x1390] sm:$0xff] %v1644
        %v1646 = vld [vmem:[%s1016 + $0x13a0] sm:$0xff]
        %1647 = vst [vmem:[%s1017 + $0x13a0] sm:$0xff] %v1646
        %v1648 = vld [vmem:[%s1016 + $0x13b0] sm:$0xff]
        %1649 = vst [vmem:[%s1017 + $0x13b0] sm:$0xff] %v1648
        %v1650 = vld [vmem:[%s1016 + $0x13c0] sm:$0xff]
        %1651 = vst [vmem:[%s1017 + $0x13c0] sm:$0xff] %v1650
        %v1652 = vld [vmem:[%s1016 + $0x13d0] sm:$0xff]
        %1653 = vst [vmem:[%s1017 + $0x13d0] sm:$0xff] %v1652
        %v1654 = vld [vmem:[%s1016 + $0x13e0] sm:$0xff]
        %1655 = vst [vmem:[%s1017 + $0x13e0] sm:$0xff] %v1654
        %v1656 = vld [vmem:[%s1016 + $0x13f0] sm:$0xff]
        %1657 = vst [vmem:[%s1017 + $0x13f0] sm:$0xff] %v1656
        %v1658 = vld [vmem:[%s1016 + $0x1400] sm:$0xff]
        %1659 = vst [vmem:[%s1017 + $0x1400] sm:$0xff] %v1658
        %v1660 = vld [vmem:[%s1016 + $0x1410] sm:$0xff]
        %1661 = vst [vmem:[%s1017 + $0x1410] sm:$0xff] %v1660
        %v1662 = vld [vmem:[%s1016 + $0x1420] sm:$0xff]
        %1663 = vst [vmem:[%s1017 + $0x1420] sm:$0xff] %v1662
        %v1664 = vld [vmem:[%s1016 + $0x1430] sm:$0xff]
        %1665 = vst [vmem:[%s1017 + $0x1430] sm:$0xff] %v1664
        %v1666 = vld [vmem:[%s1016 + $0x1440] sm:$0xff]
        %1667 = vst [vmem:[%s1017 + $0x1440] sm:$0xff] %v1666
        %v1668 = vld [vmem:[%s1016 + $0x1450] sm:$0xff]
        %1669 = vst [vmem:[%s1017 + $0x1450] sm:$0xff] %v1668
        %v1670 = vld [vmem:[%s1016 + $0x1460] sm:$0xff]
        %1671 = vst [vmem:[%s1017 + $0x1460] sm:$0xff] %v1670
        %v1672 = vld [vmem:[%s1016 + $0x1470] sm:$0xff]
        %1673 = vst [vmem:[%s1017 + $0x1470] sm:$0xff] %v1672
        %v1674 = vld [vmem:[%s1016 + $0x1480] sm:$0xff]
        %1675 = vst [vmem:[%s1017 + $0x1480] sm:$0xff] %v1674
        %v1676 = vld [vmem:[%s1016 + $0x1490] sm:$0xff]
        %1677 = vst [vmem:[%s1017 + $0x1490] sm:$0xff] %v1676
        %v1678 = vld [vmem:[%s1016 + $0x14a0] sm:$0xff]
        %1679 = vst [vmem:[%s1017 + $0x14a0] sm:$0xff] %v1678
        %v1680 = vld [vmem:[%s1016 + $0x14b0] sm:$0xff]
        %1681 = vst [vmem:[%s1017 + $0x14b0] sm:$0xff] %v1680
        %v1682 = vld [vmem:[%s1016 + $0x14c0] sm:$0xff]
        %1683 = vst [vmem:[%s1017 + $0x14c0] sm:$0xff] %v1682
        %v1684 = vld [vmem:[%s1016 + $0x14d0] sm:$0xff]
        %1685 = vst [vmem:[%s1017 + $0x14d0] sm:$0xff] %v1684
        %v1686 = vld [vmem:[%s1016 + $0x14e0] sm:$0xff]
        %1687 = vst [vmem:[%s1017 + $0x14e0] sm:$0xff] %v1686
        %v1688 = vld [vmem:[%s1016 + $0x14f0] sm:$0xff]
        %1689 = vst [vmem:[%s1017 + $0x14f0] sm:$0xff] %v1688
        %v1690 = vld [vmem:[%s1016 + $0x1500] sm:$0xff]
        %1691 = vst [vmem:[%s1017 + $0x1500] sm:$0xff] %v1690
        %v1692 = vld [vmem:[%s1016 + $0x1510] sm:$0xff]
        %1693 = vst [vmem:[%s1017 + $0x1510] sm:$0xff] %v1692
        %v1694 = vld [vmem:[%s1016 + $0x1520] sm:$0xff]
        %1695 = vst [vmem:[%s1017 + $0x1520] sm:$0xff] %v1694
        %v1696 = vld [vmem:[%s1016 + $0x1530] sm:$0xff]
        %1697 = vst [vmem:[%s1017 + $0x1530] sm:$0xff] %v1696
        %v1698 = vld [vmem:[%s1016 + $0x1540] sm:$0xff]
        %1699 = vst [vmem:[%s1017 + $0x1540] sm:$0xff] %v1698
        %v1700 = vld [vmem:[%s1016 + $0x1550] sm:$0xff]
        %1701 = vst [vmem:[%s1017 + $0x1550] sm:$0xff] %v1700
        %v1702 = vld [vmem:[%s1016 + $0x1560] sm:$0xff]
        %1703 = vst [vmem:[%s1017 + $0x1560] sm:$0xff] %v1702
        %v1704 = vld [vmem:[%s1016 + $0x1570] sm:$0xff]
        %1705 = vst [vmem:[%s1017 + $0x1570] sm:$0xff] %v1704
        %v1706 = vld [vmem:[%s1016 + $0x1580] sm:$0xff]
        %1707 = vst [vmem:[%s1017 + $0x1580] sm:$0xff] %v1706
        %v1708 = vld [vmem:[%s1016 + $0x1590] sm:$0xff]
        %1709 = vst [vmem:[%s1017 + $0x1590] sm:$0xff] %v1708
        %v1710 = vld [vmem:[%s1016 + $0x15a0] sm:$0xff]
        %1711 = vst [vmem:[%s1017 + $0x15a0] sm:$0xff] %v1710
        %v1712 = vld [vmem:[%s1016 + $0x15b0] sm:$0xff]
        %1713 = vst [vmem:[%s1017 + $0x15b0] sm:$0xff] %v1712
        %v1714 = vld [vmem:[%s1016 + $0x15c0] sm:$0xff]
        %1715 = vst [vmem:[%s1017 + $0x15c0] sm:$0xff] %v1714
        %v1716 = vld [vmem:[%s1016 + $0x15d0] sm:$0xff]
        %1717 = vst [vmem:[%s1017 + $0x15d0] sm:$0xff] %v1716
        %v1718 = vld [vmem:[%s1016 + $0x15e0] sm:$0xff]
        %1719 = vst [vmem:[%s1017 + $0x15e0] sm:$0xff] %v1718
        %v1720 = vld [vmem:[%s1016 + $0x15f0] sm:$0xff]
        %1721 = vst [vmem:[%s1017 + $0x15f0] sm:$0xff] %v1720
        %v1722 = vld [vmem:[%s1016 + $0x1600] sm:$0xff]
        %1723 = vst [vmem:[%s1017 + $0x1600] sm:$0xff] %v1722
        %v1724 = vld [vmem:[%s1016 + $0x1610] sm:$0xff]
        %1725 = vst [vmem:[%s1017 + $0x1610] sm:$0xff] %v1724
        %v1726 = vld [vmem:[%s1016 + $0x1620] sm:$0xff]
        %1727 = vst [vmem:[%s1017 + $0x1620] sm:$0xff] %v1726
        %v1728 = vld [vmem:[%s1016 + $0x1630] sm:$0xff]
        %1729 = vst [vmem:[%s1017 + $0x1630] sm:$0xff] %v1728
        %v1730 = vld [vmem:[%s1016 + $0x1640] sm:$0xff]
        %1731 = vst [vmem:[%s1017 + $0x1640] sm:$0xff] %v1730
        %v1732 = vld [vmem:[%s1016 + $0x1650] sm:$0xff]
        %1733 = vst [vmem:[%s1017 + $0x1650] sm:$0xff] %v1732
        %v1734 = vld [vmem:[%s1016 + $0x1660] sm:$0xff]
        %1735 = vst [vmem:[%s1017 + $0x1660] sm:$0xff] %v1734
        %v1736 = vld [vmem:[%s1016 + $0x1670] sm:$0xff]
        %1737 = vst [vmem:[%s1017 + $0x1670] sm:$0xff] %v1736
        %v1738 = vld [vmem:[%s1016 + $0x1680] sm:$0xff]
        %1739 = vst [vmem:[%s1017 + $0x1680] sm:$0xff] %v1738
        %v1740 = vld [vmem:[%s1016 + $0x1690] sm:$0xff]
        %1741 = vst [vmem:[%s1017 + $0x1690] sm:$0xff] %v1740
        %v1742 = vld [vmem:[%s1016 + $0x16a0] sm:$0xff]
        %1743 = vst [vmem:[%s1017 + $0x16a0] sm:$0xff] %v1742
        %v1744 = vld [vmem:[%s1016 + $0x16b0] sm:$0xff]
        %1745 = vst [vmem:[%s1017 + $0x16b0] sm:$0xff] %v1744
        %v1746 = vld [vmem:[%s1016 + $0x16c0] sm:$0xff]
        %1747 = vst [vmem:[%s1017 + $0x16c0] sm:$0xff] %v1746
        %v1748 = vld [vmem:[%s1016 + $0x16d0] sm:$0xff]
        %1749 = vst [vmem:[%s1017 + $0x16d0] sm:$0xff] %v1748
        %v1750 = vld [vmem:[%s1016 + $0x16e0] sm:$0xff]
        %1751 = vst [vmem:[%s1017 + $0x16e0] sm:$0xff] %v1750
        %v1752 = vld [vmem:[%s1016 + $0x16f0] sm:$0xff]
        %1753 = vst [vmem:[%s1017 + $0x16f0] sm:$0xff] %v1752
        %v1754 = vld [vmem:[%s1016 + $0x1700] sm:$0xff]
        %1755 = vst [vmem:[%s1017 + $0x1700] sm:$0xff] %v1754
        %v1756 = vld [vmem:[%s1016 + $0x1710] sm:$0xff]
        %1757 = vst [vmem:[%s1017 + $0x1710] sm:$0xff] %v1756
        %v1758 = vld [vmem:[%s1016 + $0x1720] sm:$0xff]
        %1759 = vst [vmem:[%s1017 + $0x1720] sm:$0xff] %v1758
        %v1760 = vld [vmem:[%s1016 + $0x1730] sm:$0xff]
        %1761 = vst [vmem:[%s1017 + $0x1730] sm:$0xff] %v1760
        %v1762 = vld [vmem:[%s1016 + $0x1740] sm:$0xff]
        %1763 = vst [vmem:[%s1017 + $0x1740] sm:$0xff] %v1762
        %v1764 = vld [vmem:[%s1016 + $0x1750] sm:$0xff]
        %1765 = vst [vmem:[%s1017 + $0x1750] sm:$0xff] %v1764
        %v1766 = vld [vmem:[%s1016 + $0x1760] sm:$0xff]
        %1767 = vst [vmem:[%s1017 + $0x1760] sm:$0xff] %v1766
        %v1768 = vld [vmem:[%s1016 + $0x1770] sm:$0xff]
        %1769 = vst [vmem:[%s1017 + $0x1770] sm:$0xff] %v1768
        %v1770 = vld [vmem:[%s1016 + $0x1780] sm:$0xff]
        %1771 = vst [vmem:[%s1017 + $0x1780] sm:$0xff] %v1770
        %v1772 = vld [vmem:[%s1016 + $0x1790] sm:$0xff]
        %1773 = vst [vmem:[%s1017 + $0x1790] sm:$0xff] %v1772
        %v1774 = vld [vmem:[%s1016 + $0x17a0] sm:$0xff]
        %1775 = vst [vmem:[%s1017 + $0x17a0] sm:$0xff] %v1774
        %v1776 = vld [vmem:[%s1016 + $0x17b0] sm:$0xff]
        %1777 = vst [vmem:[%s1017 + $0x17b0] sm:$0xff] %v1776
        %v1778 = vld [vmem:[%s1016 + $0x17c0] sm:$0xff]
        %1779 = vst [vmem:[%s1017 + $0x17c0] sm:$0xff] %v1778
        %v1780 = vld [vmem:[%s1016 + $0x17d0] sm:$0xff]
        %1781 = vst [vmem:[%s1017 + $0x17d0] sm:$0xff] %v1780
        %v1782 = vld [vmem:[%s1016 + $0x17e0] sm:$0xff]
        %1783 = vst [vmem:[%s1017 + $0x17e0] sm:$0xff] %v1782
        %v1784 = vld [vmem:[%s1016 + $0x17f0] sm:$0xff]
        %1785 = vst [vmem:[%s1017 + $0x17f0] sm:$0xff] %v1784
        %v1786 = vld [vmem:[%s1016 + $0x1800] sm:$0xff]
        %1787 = vst [vmem:[%s1017 + $0x1800] sm:$0xff] %v1786
        %v1788 = vld [vmem:[%s1016 + $0x1810] sm:$0xff]
        %1789 = vst [vmem:[%s1017 + $0x1810] sm:$0xff] %v1788
        %v1790 = vld [vmem:[%s1016 + $0x1820] sm:$0xff]
        %1791 = vst [vmem:[%s1017 + $0x1820] sm:$0xff] %v1790
        %v1792 = vld [vmem:[%s1016 + $0x1830] sm:$0xff]
        %1793 = vst [vmem:[%s1017 + $0x1830] sm:$0xff] %v1792
        %v1794 = vld [vmem:[%s1016 + $0x1840] sm:$0xff]
        %1795 = vst [vmem:[%s1017 + $0x1840] sm:$0xff] %v1794
        %v1796 = vld [vmem:[%s1016 + $0x1850] sm:$0xff]
        %1797 = vst [vmem:[%s1017 + $0x1850] sm:$0xff] %v1796
        %v1798 = vld [vmem:[%s1016 + $0x1860] sm:$0xff]
        %1799 = vst [vmem:[%s1017 + $0x1860] sm:$0xff] %v1798
        %v1800 = vld [vmem:[%s1016 + $0x1870] sm:$0xff]
        %1801 = vst [vmem:[%s1017 + $0x1870] sm:$0xff] %v1800
        %v1802 = vld [vmem:[%s1016 + $0x1880] sm:$0xff]
        %1803 = vst [vmem:[%s1017 + $0x1880] sm:$0xff] %v1802
        %v1804 = vld [vmem:[%s1016 + $0x1890] sm:$0xff]
        %1805 = vst [vmem:[%s1017 + $0x1890] sm:$0xff] %v1804
        %v1806 = vld [vmem:[%s1016 + $0x18a0] sm:$0xff]
        %1807 = vst [vmem:[%s1017 + $0x18a0] sm:$0xff] %v1806
        %v1808 = vld [vmem:[%s1016 + $0x18b0] sm:$0xff]
        %1809 = vst [vmem:[%s1017 + $0x18b0] sm:$0xff] %v1808
        %v1810 = vld [vmem:[%s1016 + $0x18c0] sm:$0xff]
        %1811 = vst [vmem:[%s1017 + $0x18c0] sm:$0xff] %v1810
        %v1812 = vld [vmem:[%s1016 + $0x18d0] sm:$0xff]
        %1813 = vst [vmem:[%s1017 + $0x18d0] sm:$0xff] %v1812
        %v1814 = vld [vmem:[%s1016 + $0x18e0] sm:$0xff]
        %1815 = vst [vmem:[%s1017 + $0x18e0] sm:$0xff] %v1814
        %v1816 = vld [vmem:[%s1016 + $0x18f0] sm:$0xff]
        %1817 = vst [vmem:[%s1017 + $0x18f0] sm:$0xff] %v1816
        %v1818 = vld [vmem:[%s1016 + $0x1900] sm:$0xff]
        %1819 = vst [vmem:[%s1017 + $0x1900] sm:$0xff] %v1818
        %v1820 = vld [vmem:[%s1016 + $0x1910] sm:$0xff]
        %1821 = vst [vmem:[%s1017 + $0x1910] sm:$0xff] %v1820
        %v1822 = vld [vmem:[%s1016 + $0x1920] sm:$0xff]
        %1823 = vst [vmem:[%s1017 + $0x1920] sm:$0xff] %v1822
        %v1824 = vld [vmem:[%s1016 + $0x1930] sm:$0xff]
        %1825 = vst [vmem:[%s1017 + $0x1930] sm:$0xff] %v1824
        %v1826 = vld [vmem:[%s1016 + $0x1940] sm:$0xff]
        %1827 = vst [vmem:[%s1017 + $0x1940] sm:$0xff] %v1826
        %v1828 = vld [vmem:[%s1016 + $0x1950] sm:$0xff]
        %1829 = vst [vmem:[%s1017 + $0x1950] sm:$0xff] %v1828
        %v1830 = vld [vmem:[%s1016 + $0x1960] sm:$0xff]
        %1831 = vst [vmem:[%s1017 + $0x1960] sm:$0xff] %v1830
        %v1832 = vld [vmem:[%s1016 + $0x1970] sm:$0xff]
        %1833 = vst [vmem:[%s1017 + $0x1970] sm:$0xff] %v1832
        %v1834 = vld [vmem:[%s1016 + $0x1980] sm:$0xff]
        %1835 = vst [vmem:[%s1017 + $0x1980] sm:$0xff] %v1834
        %v1836 = vld [vmem:[%s1016 + $0x1990] sm:$0xff]
        %1837 = vst [vmem:[%s1017 + $0x1990] sm:$0xff] %v1836
        %v1838 = vld [vmem:[%s1016 + $0x19a0] sm:$0xff]
        %1839 = vst [vmem:[%s1017 + $0x19a0] sm:$0xff] %v1838
        %v1840 = vld [vmem:[%s1016 + $0x19b0] sm:$0xff]
        %1841 = vst [vmem:[%s1017 + $0x19b0] sm:$0xff] %v1840
        %v1842 = vld [vmem:[%s1016 + $0x19c0] sm:$0xff]
        %1843 = vst [vmem:[%s1017 + $0x19c0] sm:$0xff] %v1842
        %v1844 = vld [vmem:[%s1016 + $0x19d0] sm:$0xff]
        %1845 = vst [vmem:[%s1017 + $0x19d0] sm:$0xff] %v1844
        %v1846 = vld [vmem:[%s1016 + $0x19e0] sm:$0xff]
        %1847 = vst [vmem:[%s1017 + $0x19e0] sm:$0xff] %v1846
        %v1848 = vld [vmem:[%s1016 + $0x19f0] sm:$0xff]
        %1849 = vst [vmem:[%s1017 + $0x19f0] sm:$0xff] %v1848
        %v1850 = vld [vmem:[%s1016 + $0x1a00] sm:$0xff]
        %1851 = vst [vmem:[%s1017 + $0x1a00] sm:$0xff] %v1850
        %v1852 = vld [vmem:[%s1016 + $0x1a10] sm:$0xff]
        %1853 = vst [vmem:[%s1017 + $0x1a10] sm:$0xff] %v1852
        %v1854 = vld [vmem:[%s1016 + $0x1a20] sm:$0xff]
        %1855 = vst [vmem:[%s1017 + $0x1a20] sm:$0xff] %v1854
        %v1856 = vld [vmem:[%s1016 + $0x1a30] sm:$0xff]
        %1857 = vst [vmem:[%s1017 + $0x1a30] sm:$0xff] %v1856
        %v1858 = vld [vmem:[%s1016 + $0x1a40] sm:$0xff]
        %1859 = vst [vmem:[%s1017 + $0x1a40] sm:$0xff] %v1858
        %v1860 = vld [vmem:[%s1016 + $0x1a50] sm:$0xff]
        %1861 = vst [vmem:[%s1017 + $0x1a50] sm:$0xff] %v1860
        %v1862 = vld [vmem:[%s1016 + $0x1a60] sm:$0xff]
        %1863 = vst [vmem:[%s1017 + $0x1a60] sm:$0xff] %v1862
        %v1864 = vld [vmem:[%s1016 + $0x1a70] sm:$0xff]
        %1865 = vst [vmem:[%s1017 + $0x1a70] sm:$0xff] %v1864
        %v1866 = vld [vmem:[%s1016 + $0x1a80] sm:$0xff]
        %1867 = vst [vmem:[%s1017 + $0x1a80] sm:$0xff] %v1866
        %v1868 = vld [vmem:[%s1016 + $0x1a90] sm:$0xff]
        %1869 = vst [vmem:[%s1017 + $0x1a90] sm:$0xff] %v1868
        %v1870 = vld [vmem:[%s1016 + $0x1aa0] sm:$0xff]
        %1871 = vst [vmem:[%s1017 + $0x1aa0] sm:$0xff] %v1870
        %v1872 = vld [vmem:[%s1016 + $0x1ab0] sm:$0xff]
        %1873 = vst [vmem:[%s1017 + $0x1ab0] sm:$0xff] %v1872
        %v1874 = vld [vmem:[%s1016 + $0x1ac0] sm:$0xff]
        %1875 = vst [vmem:[%s1017 + $0x1ac0] sm:$0xff] %v1874
        %v1876 = vld [vmem:[%s1016 + $0x1ad0] sm:$0xff]
        %1877 = vst [vmem:[%s1017 + $0x1ad0] sm:$0xff] %v1876
        %v1878 = vld [vmem:[%s1016 + $0x1ae0] sm:$0xff]
        %1879 = vst [vmem:[%s1017 + $0x1ae0] sm:$0xff] %v1878
        %v1880 = vld [vmem:[%s1016 + $0x1af0] sm:$0xff]
        %1881 = vst [vmem:[%s1017 + $0x1af0] sm:$0xff] %v1880
        %v1882 = vld [vmem:[%s1016 + $0x1b00] sm:$0xff]
        %1883 = vst [vmem:[%s1017 + $0x1b00] sm:$0xff] %v1882
        %v1884 = vld [vmem:[%s1016 + $0x1b10] sm:$0xff]
        %1885 = vst [vmem:[%s1017 + $0x1b10] sm:$0xff] %v1884
        %v1886 = vld [vmem:[%s1016 + $0x1b20] sm:$0xff]
        %1887 = vst [vmem:[%s1017 + $0x1b20] sm:$0xff] %v1886
        %v1888 = vld [vmem:[%s1016 + $0x1b30] sm:$0xff]
        %1889 = vst [vmem:[%s1017 + $0x1b30] sm:$0xff] %v1888
        %v1890 = vld [vmem:[%s1016 + $0x1b40] sm:$0xff]
        %1891 = vst [vmem:[%s1017 + $0x1b40] sm:$0xff] %v1890
        %v1892 = vld [vmem:[%s1016 + $0x1b50] sm:$0xff]
        %1893 = vst [vmem:[%s1017 + $0x1b50] sm:$0xff] %v1892
        %v1894 = vld [vmem:[%s1016 + $0x1b60] sm:$0xff]
        %1895 = vst [vmem:[%s1017 + $0x1b60] sm:$0xff] %v1894
        %v1896 = vld [vmem:[%s1016 + $0x1b70] sm:$0xff]
        %1897 = vst [vmem:[%s1017 + $0x1b70] sm:$0xff] %v1896
        %v1898 = vld [vmem:[%s1016 + $0x1b80] sm:$0xff]
        %1899 = vst [vmem:[%s1017 + $0x1b80] sm:$0xff] %v1898
        %v1900 = vld [vmem:[%s1016 + $0x1b90] sm:$0xff]
        %1901 = vst [vmem:[%s1017 + $0x1b90] sm:$0xff] %v1900
        %v1902 = vld [vmem:[%s1016 + $0x1ba0] sm:$0xff]
        %1903 = vst [vmem:[%s1017 + $0x1ba0] sm:$0xff] %v1902
        %v1904 = vld [vmem:[%s1016 + $0x1bb0] sm:$0xff]
        %1905 = vst [vmem:[%s1017 + $0x1bb0] sm:$0xff] %v1904
        %v1906 = vld [vmem:[%s1016 + $0x1bc0] sm:$0xff]
        %1907 = vst [vmem:[%s1017 + $0x1bc0] sm:$0xff] %v1906
        %v1908 = vld [vmem:[%s1016 + $0x1bd0] sm:$0xff]
        %1909 = vst [vmem:[%s1017 + $0x1bd0] sm:$0xff] %v1908
        %v1910 = vld [vmem:[%s1016 + $0x1be0] sm:$0xff]
        %1911 = vst [vmem:[%s1017 + $0x1be0] sm:$0xff] %v1910
        %v1912 = vld [vmem:[%s1016 + $0x1bf0] sm:$0xff]
        %1913 = vst [vmem:[%s1017 + $0x1bf0] sm:$0xff] %v1912
        %v1914 = vld [vmem:[%s1016 + $0x1c00] sm:$0xff]
        %1915 = vst [vmem:[%s1017 + $0x1c00] sm:$0xff] %v1914
        %v1916 = vld [vmem:[%s1016 + $0x1c10] sm:$0xff]
        %1917 = vst [vmem:[%s1017 + $0x1c10] sm:$0xff] %v1916
        %v1918 = vld [vmem:[%s1016 + $0x1c20] sm:$0xff]
        %1919 = vst [vmem:[%s1017 + $0x1c20] sm:$0xff] %v1918
        %v1920 = vld [vmem:[%s1016 + $0x1c30] sm:$0xff]
        %1921 = vst [vmem:[%s1017 + $0x1c30] sm:$0xff] %v1920
        %v1922 = vld [vmem:[%s1016 + $0x1c40] sm:$0xff]
        %1923 = vst [vmem:[%s1017 + $0x1c40] sm:$0xff] %v1922
        %v1924 = vld [vmem:[%s1016 + $0x1c50] sm:$0xff]
        %1925 = vst [vmem:[%s1017 + $0x1c50] sm:$0xff] %v1924
        %v1926 = vld [vmem:[%s1016 + $0x1c60] sm:$0xff]
        %1927 = vst [vmem:[%s1017 + $0x1c60] sm:$0xff] %v1926
        %v1928 = vld [vmem:[%s1016 + $0x1c70] sm:$0xff]
        %1929 = vst [vmem:[%s1017 + $0x1c70] sm:$0xff] %v1928
        %v1930 = vld [vmem:[%s1016 + $0x1c80] sm:$0xff]
        %1931 = vst [vmem:[%s1017 + $0x1c80] sm:$0xff] %v1930
        %v1932 = vld [vmem:[%s1016 + $0x1c90] sm:$0xff]
        %1933 = vst [vmem:[%s1017 + $0x1c90] sm:$0xff] %v1932
        %v1934 = vld [vmem:[%s1016 + $0x1ca0] sm:$0xff]
        %1935 = vst [vmem:[%s1017 + $0x1ca0] sm:$0xff] %v1934
        %v1936 = vld [vmem:[%s1016 + $0x1cb0] sm:$0xff]
        %1937 = vst [vmem:[%s1017 + $0x1cb0] sm:$0xff] %v1936
        %v1938 = vld [vmem:[%s1016 + $0x1cc0] sm:$0xff]
        %1939 = vst [vmem:[%s1017 + $0x1cc0] sm:$0xff] %v1938
        %v1940 = vld [vmem:[%s1016 + $0x1cd0] sm:$0xff]
        %1941 = vst [vmem:[%s1017 + $0x1cd0] sm:$0xff] %v1940
        %v1942 = vld [vmem:[%s1016 + $0x1ce0] sm:$0xff]
        %1943 = vst [vmem:[%s1017 + $0x1ce0] sm:$0xff] %v1942
        %v1944 = vld [vmem:[%s1016 + $0x1cf0] sm:$0xff]
        %1945 = vst [vmem:[%s1017 + $0x1cf0] sm:$0xff] %v1944
        %v1946 = vld [vmem:[%s1016 + $0x1d00] sm:$0xff]
        %1947 = vst [vmem:[%s1017 + $0x1d00] sm:$0xff] %v1946
        %v1948 = vld [vmem:[%s1016 + $0x1d10] sm:$0xff]
        %1949 = vst [vmem:[%s1017 + $0x1d10] sm:$0xff] %v1948
        %v1950 = vld [vmem:[%s1016 + $0x1d20] sm:$0xff]
        %1951 = vst [vmem:[%s1017 + $0x1d20] sm:$0xff] %v1950
        %v1952 = vld [vmem:[%s1016 + $0x1d30] sm:$0xff]
        %1953 = vst [vmem:[%s1017 + $0x1d30] sm:$0xff] %v1952
        %v1954 = vld [vmem:[%s1016 + $0x1d40] sm:$0xff]
        %1955 = vst [vmem:[%s1017 + $0x1d40] sm:$0xff] %v1954
        %v1956 = vld [vmem:[%s1016 + $0x1d50] sm:$0xff]
        %1957 = vst [vmem:[%s1017 + $0x1d50] sm:$0xff] %v1956
        %v1958 = vld [vmem:[%s1016 + $0x1d60] sm:$0xff]
        %1959 = vst [vmem:[%s1017 + $0x1d60] sm:$0xff] %v1958
        %v1960 = vld [vmem:[%s1016 + $0x1d70] sm:$0xff]
        %1961 = vst [vmem:[%s1017 + $0x1d70] sm:$0xff] %v1960
        %v1962 = vld [vmem:[%s1016 + $0x1d80] sm:$0xff]
        %1963 = vst [vmem:[%s1017 + $0x1d80] sm:$0xff] %v1962
        %v1964 = vld [vmem:[%s1016 + $0x1d90] sm:$0xff]
        %1965 = vst [vmem:[%s1017 + $0x1d90] sm:$0xff] %v1964
        %v1966 = vld [vmem:[%s1016 + $0x1da0] sm:$0xff]
        %1967 = vst [vmem:[%s1017 + $0x1da0] sm:$0xff] %v1966
        %v1968 = vld [vmem:[%s1016 + $0x1db0] sm:$0xff]
        %1969 = vst [vmem:[%s1017 + $0x1db0] sm:$0xff] %v1968
        %v1970 = vld [vmem:[%s1016 + $0x1dc0] sm:$0xff]
        %1971 = vst [vmem:[%s1017 + $0x1dc0] sm:$0xff] %v1970
        %v1972 = vld [vmem:[%s1016 + $0x1dd0] sm:$0xff]
        %1973 = vst [vmem:[%s1017 + $0x1dd0] sm:$0xff] %v1972
        %v1974 = vld [vmem:[%s1016 + $0x1de0] sm:$0xff]
        %1975 = vst [vmem:[%s1017 + $0x1de0] sm:$0xff] %v1974
        %v1976 = vld [vmem:[%s1016 + $0x1df0] sm:$0xff]
        %1977 = vst [vmem:[%s1017 + $0x1df0] sm:$0xff] %v1976
        %v1978 = vld [vmem:[%s1016 + $0x1e00] sm:$0xff]
        %1979 = vst [vmem:[%s1017 + $0x1e00] sm:$0xff] %v1978
        %v1980 = vld [vmem:[%s1016 + $0x1e10] sm:$0xff]
        %1981 = vst [vmem:[%s1017 + $0x1e10] sm:$0xff] %v1980
        %v1982 = vld [vmem:[%s1016 + $0x1e20] sm:$0xff]
        %1983 = vst [vmem:[%s1017 + $0x1e20] sm:$0xff] %v1982
        %v1984 = vld [vmem:[%s1016 + $0x1e30] sm:$0xff]
        %1985 = vst [vmem:[%s1017 + $0x1e30] sm:$0xff] %v1984
        %v1986 = vld [vmem:[%s1016 + $0x1e40] sm:$0xff]
        %1987 = vst [vmem:[%s1017 + $0x1e40] sm:$0xff] %v1986
        %v1988 = vld [vmem:[%s1016 + $0x1e50] sm:$0xff]
        %1989 = vst [vmem:[%s1017 + $0x1e50] sm:$0xff] %v1988
        %v1990 = vld [vmem:[%s1016 + $0x1e60] sm:$0xff]
        %1991 = vst [vmem:[%s1017 + $0x1e60] sm:$0xff] %v1990
        %v1992 = vld [vmem:[%s1016 + $0x1e70] sm:$0xff]
        %1993 = vst [vmem:[%s1017 + $0x1e70] sm:$0xff] %v1992
      $region25: #{tpu_custom_call.1} parent=19 // loop_footer
        %s1015 = sadd.s32 1, %s1011
      $region26: #{tpu_custom_call.1} parent=19 // loop_footer_branch
        %1010 = sbr.rel target = $region22
      $region27: #{tpu_custom_call.1} parent=19 // loop_exit
        _
      %s1994 = sshll.u32 1, %s1005
      %s1995 = ssub.s32 %s1994, 1
      loop: start=0, step=1, limit=1
      $region28: #{tpu_custom_call.1} parent=19 // loop_pre_header
        _
      $region29: #{tpu_custom_call.1} parent=19 // loop_header
        %s1997 = sphi 0, %s2001
        %p1998 = scmp.ge.s32.totalorder %s1997, 1
        %s2002 = sphi %s1007, %s1007
        %s2003 = sphi %s1009, %s1009
      $region30: #{tpu_custom_call.1} parent=19 // loop_header_branch
        %2000 = sbr.rel (%p1998) target = $region34
      $region31: #{tpu_custom_call.1} parent=19 // loop_body
        %v2004 = vld [vmem:[%s2002] sm:%s1995]
        %2005 = vst [vmem:[%s2003] sm:%s1995] %v2004
        %v2006 = vld [vmem:[%s2002 + $0x10] sm:%s1995]
        %2007 = vst [vmem:[%s2003 + $0x10] sm:%s1995] %v2006
        %v2008 = vld [vmem:[%s2002 + $0x20] sm:%s1995]
        %2009 = vst [vmem:[%s2003 + $0x20] sm:%s1995] %v2008
        %v2010 = vld [vmem:[%s2002 + $0x30] sm:%s1995]
        %2011 = vst [vmem:[%s2003 + $0x30] sm:%s1995] %v2010
        %v2012 = vld [vmem:[%s2002 + $0x40] sm:%s1995]
        %2013 = vst [vmem:[%s2003 + $0x40] sm:%s1995] %v2012
        %v2014 = vld [vmem:[%s2002 + $0x50] sm:%s1995]
        %2015 = vst [vmem:[%s2003 + $0x50] sm:%s1995] %v2014
        %v2016 = vld [vmem:[%s2002 + $0x60] sm:%s1995]
        %2017 = vst [vmem:[%s2003 + $0x60] sm:%s1995] %v2016
        %v2018 = vld [vmem:[%s2002 + $0x70] sm:%s1995]
        %2019 = vst [vmem:[%s2003 + $0x70] sm:%s1995] %v2018
        %v2020 = vld [vmem:[%s2002 + $0x80] sm:%s1995]
        %2021 = vst [vmem:[%s2003 + $0x80] sm:%s1995] %v2020
        %v2022 = vld [vmem:[%s2002 + $0x90] sm:%s1995]
        %2023 = vst [vmem:[%s2003 + $0x90] sm:%s1995] %v2022
        %v2024 = vld [vmem:[%s2002 + $0xa0] sm:%s1995]
        %2025 = vst [vmem:[%s2003 + $0xa0] sm:%s1995] %v2024
        %v2026 = vld [vmem:[%s2002 + $0xb0] sm:%s1995]
        %2027 = vst [vmem:[%s2003 + $0xb0] sm:%s1995] %v2026
        %v2028 = vld [vmem:[%s2002 + $0xc0] sm:%s1995]
        %2029 = vst [vmem:[%s2003 + $0xc0] sm:%s1995] %v2028
        %v2030 = vld [vmem:[%s2002 + $0xd0] sm:%s1995]
        %2031 = vst [vmem:[%s2003 + $0xd0] sm:%s1995] %v2030
        %v2032 = vld [vmem:[%s2002 + $0xe0] sm:%s1995]
        %2033 = vst [vmem:[%s2003 + $0xe0] sm:%s1995] %v2032
        %v2034 = vld [vmem:[%s2002 + $0xf0] sm:%s1995]
        %2035 = vst [vmem:[%s2003 + $0xf0] sm:%s1995] %v2034
        %v2036 = vld [vmem:[%s2002 + $0x100] sm:%s1995]
        %2037 = vst [vmem:[%s2003 + $0x100] sm:%s1995] %v2036
        %v2038 = vld [vmem:[%s2002 + $0x110] sm:%s1995]
        %2039 = vst [vmem:[%s2003 + $0x110] sm:%s1995] %v2038
        %v2040 = vld [vmem:[%s2002 + $0x120] sm:%s1995]
        %2041 = vst [vmem:[%s2003 + $0x120] sm:%s1995] %v2040
        %v2042 = vld [vmem:[%s2002 + $0x130] sm:%s1995]
        %2043 = vst [vmem:[%s2003 + $0x130] sm:%s1995] %v2042
        %v2044 = vld [vmem:[%s2002 + $0x140] sm:%s1995]
        %2045 = vst [vmem:[%s2003 + $0x140] sm:%s1995] %v2044
        %v2046 = vld [vmem:[%s2002 + $0x150] sm:%s1995]
        %2047 = vst [vmem:[%s2003 + $0x150] sm:%s1995] %v2046
        %v2048 = vld [vmem:[%s2002 + $0x160] sm:%s1995]
        %2049 = vst [vmem:[%s2003 + $0x160] sm:%s1995] %v2048
        %v2050 = vld [vmem:[%s2002 + $0x170] sm:%s1995]
        %2051 = vst [vmem:[%s2003 + $0x170] sm:%s1995] %v2050
        %v2052 = vld [vmem:[%s2002 + $0x180] sm:%s1995]
        %2053 = vst [vmem:[%s2003 + $0x180] sm:%s1995] %v2052
        %v2054 = vld [vmem:[%s2002 + $0x190] sm:%s1995]
        %2055 = vst [vmem:[%s2003 + $0x190] sm:%s1995] %v2054
        %v2056 = vld [vmem:[%s2002 + $0x1a0] sm:%s1995]
        %2057 = vst [vmem:[%s2003 + $0x1a0] sm:%s1995] %v2056
        %v2058 = vld [vmem:[%s2002 + $0x1b0] sm:%s1995]
        %2059 = vst [vmem:[%s2003 + $0x1b0] sm:%s1995] %v2058
        %v2060 = vld [vmem:[%s2002 + $0x1c0] sm:%s1995]
        %2061 = vst [vmem:[%s2003 + $0x1c0] sm:%s1995] %v2060
        %v2062 = vld [vmem:[%s2002 + $0x1d0] sm:%s1995]
        %2063 = vst [vmem:[%s2003 + $0x1d0] sm:%s1995] %v2062
        %v2064 = vld [vmem:[%s2002 + $0x1e0] sm:%s1995]
        %2065 = vst [vmem:[%s2003 + $0x1e0] sm:%s1995] %v2064
        %v2066 = vld [vmem:[%s2002 + $0x1f0] sm:%s1995]
        %2067 = vst [vmem:[%s2003 + $0x1f0] sm:%s1995] %v2066
        %v2068 = vld [vmem:[%s2002 + $0x200] sm:%s1995]
        %2069 = vst [vmem:[%s2003 + $0x200] sm:%s1995] %v2068
        %v2070 = vld [vmem:[%s2002 + $0x210] sm:%s1995]
        %2071 = vst [vmem:[%s2003 + $0x210] sm:%s1995] %v2070
        %v2072 = vld [vmem:[%s2002 + $0x220] sm:%s1995]
        %2073 = vst [vmem:[%s2003 + $0x220] sm:%s1995] %v2072
        %v2074 = vld [vmem:[%s2002 + $0x230] sm:%s1995]
        %2075 = vst [vmem:[%s2003 + $0x230] sm:%s1995] %v2074
        %v2076 = vld [vmem:[%s2002 + $0x240] sm:%s1995]
        %2077 = vst [vmem:[%s2003 + $0x240] sm:%s1995] %v2076
        %v2078 = vld [vmem:[%s2002 + $0x250] sm:%s1995]
        %2079 = vst [vmem:[%s2003 + $0x250] sm:%s1995] %v2078
        %v2080 = vld [vmem:[%s2002 + $0x260] sm:%s1995]
        %2081 = vst [vmem:[%s2003 + $0x260] sm:%s1995] %v2080
        %v2082 = vld [vmem:[%s2002 + $0x270] sm:%s1995]
        %2083 = vst [vmem:[%s2003 + $0x270] sm:%s1995] %v2082
        %v2084 = vld [vmem:[%s2002 + $0x280] sm:%s1995]
        %2085 = vst [vmem:[%s2003 + $0x280] sm:%s1995] %v2084
        %v2086 = vld [vmem:[%s2002 + $0x290] sm:%s1995]
        %2087 = vst [vmem:[%s2003 + $0x290] sm:%s1995] %v2086
        %v2088 = vld [vmem:[%s2002 + $0x2a0] sm:%s1995]
        %2089 = vst [vmem:[%s2003 + $0x2a0] sm:%s1995] %v2088
        %v2090 = vld [vmem:[%s2002 + $0x2b0] sm:%s1995]
        %2091 = vst [vmem:[%s2003 + $0x2b0] sm:%s1995] %v2090
        %v2092 = vld [vmem:[%s2002 + $0x2c0] sm:%s1995]
        %2093 = vst [vmem:[%s2003 + $0x2c0] sm:%s1995] %v2092
        %v2094 = vld [vmem:[%s2002 + $0x2d0] sm:%s1995]
        %2095 = vst [vmem:[%s2003 + $0x2d0] sm:%s1995] %v2094
        %v2096 = vld [vmem:[%s2002 + $0x2e0] sm:%s1995]
        %2097 = vst [vmem:[%s2003 + $0x2e0] sm:%s1995] %v2096
        %v2098 = vld [vmem:[%s2002 + $0x2f0] sm:%s1995]
        %2099 = vst [vmem:[%s2003 + $0x2f0] sm:%s1995] %v2098
        %v2100 = vld [vmem:[%s2002 + $0x300] sm:%s1995]
        %2101 = vst [vmem:[%s2003 + $0x300] sm:%s1995] %v2100
        %v2102 = vld [vmem:[%s2002 + $0x310] sm:%s1995]
        %2103 = vst [vmem:[%s2003 + $0x310] sm:%s1995] %v2102
        %v2104 = vld [vmem:[%s2002 + $0x320] sm:%s1995]
        %2105 = vst [vmem:[%s2003 + $0x320] sm:%s1995] %v2104
        %v2106 = vld [vmem:[%s2002 + $0x330] sm:%s1995]
        %2107 = vst [vmem:[%s2003 + $0x330] sm:%s1995] %v2106
        %v2108 = vld [vmem:[%s2002 + $0x340] sm:%s1995]
        %2109 = vst [vmem:[%s2003 + $0x340] sm:%s1995] %v2108
        %v2110 = vld [vmem:[%s2002 + $0x350] sm:%s1995]
        %2111 = vst [vmem:[%s2003 + $0x350] sm:%s1995] %v2110
        %v2112 = vld [vmem:[%s2002 + $0x360] sm:%s1995]
        %2113 = vst [vmem:[%s2003 + $0x360] sm:%s1995] %v2112
        %v2114 = vld [vmem:[%s2002 + $0x370] sm:%s1995]
        %2115 = vst [vmem:[%s2003 + $0x370] sm:%s1995] %v2114
        %v2116 = vld [vmem:[%s2002 + $0x380] sm:%s1995]
        %2117 = vst [vmem:[%s2003 + $0x380] sm:%s1995] %v2116
        %v2118 = vld [vmem:[%s2002 + $0x390] sm:%s1995]
        %2119 = vst [vmem:[%s2003 + $0x390] sm:%s1995] %v2118
        %v2120 = vld [vmem:[%s2002 + $0x3a0] sm:%s1995]
        %2121 = vst [vmem:[%s2003 + $0x3a0] sm:%s1995] %v2120
        %v2122 = vld [vmem:[%s2002 + $0x3b0] sm:%s1995]
        %2123 = vst [vmem:[%s2003 + $0x3b0] sm:%s1995] %v2122
        %v2124 = vld [vmem:[%s2002 + $0x3c0] sm:%s1995]
        %2125 = vst [vmem:[%s2003 + $0x3c0] sm:%s1995] %v2124
        %v2126 = vld [vmem:[%s2002 + $0x3d0] sm:%s1995]
        %2127 = vst [vmem:[%s2003 + $0x3d0] sm:%s1995] %v2126
        %v2128 = vld [vmem:[%s2002 + $0x3e0] sm:%s1995]
        %2129 = vst [vmem:[%s2003 + $0x3e0] sm:%s1995] %v2128
        %v2130 = vld [vmem:[%s2002 + $0x3f0] sm:%s1995]
        %2131 = vst [vmem:[%s2003 + $0x3f0] sm:%s1995] %v2130
        %v2132 = vld [vmem:[%s2002 + $0x400] sm:%s1995]
        %2133 = vst [vmem:[%s2003 + $0x400] sm:%s1995] %v2132
        %v2134 = vld [vmem:[%s2002 + $0x410] sm:%s1995]
        %2135 = vst [vmem:[%s2003 + $0x410] sm:%s1995] %v2134
        %v2136 = vld [vmem:[%s2002 + $0x420] sm:%s1995]
        %2137 = vst [vmem:[%s2003 + $0x420] sm:%s1995] %v2136
        %v2138 = vld [vmem:[%s2002 + $0x430] sm:%s1995]
        %2139 = vst [vmem:[%s2003 + $0x430] sm:%s1995] %v2138
        %v2140 = vld [vmem:[%s2002 + $0x440] sm:%s1995]
        %2141 = vst [vmem:[%s2003 + $0x440] sm:%s1995] %v2140
        %v2142 = vld [vmem:[%s2002 + $0x450] sm:%s1995]
        %2143 = vst [vmem:[%s2003 + $0x450] sm:%s1995] %v2142
        %v2144 = vld [vmem:[%s2002 + $0x460] sm:%s1995]
        %2145 = vst [vmem:[%s2003 + $0x460] sm:%s1995] %v2144
        %v2146 = vld [vmem:[%s2002 + $0x470] sm:%s1995]
        %2147 = vst [vmem:[%s2003 + $0x470] sm:%s1995] %v2146
        %v2148 = vld [vmem:[%s2002 + $0x480] sm:%s1995]
        %2149 = vst [vmem:[%s2003 + $0x480] sm:%s1995] %v2148
        %v2150 = vld [vmem:[%s2002 + $0x490] sm:%s1995]
        %2151 = vst [vmem:[%s2003 + $0x490] sm:%s1995] %v2150
        %v2152 = vld [vmem:[%s2002 + $0x4a0] sm:%s1995]
        %2153 = vst [vmem:[%s2003 + $0x4a0] sm:%s1995] %v2152
        %v2154 = vld [vmem:[%s2002 + $0x4b0] sm:%s1995]
        %2155 = vst [vmem:[%s2003 + $0x4b0] sm:%s1995] %v2154
        %v2156 = vld [vmem:[%s2002 + $0x4c0] sm:%s1995]
        %2157 = vst [vmem:[%s2003 + $0x4c0] sm:%s1995] %v2156
        %v2158 = vld [vmem:[%s2002 + $0x4d0] sm:%s1995]
        %2159 = vst [vmem:[%s2003 + $0x4d0] sm:%s1995] %v2158
        %v2160 = vld [vmem:[%s2002 + $0x4e0] sm:%s1995]
        %2161 = vst [vmem:[%s2003 + $0x4e0] sm:%s1995] %v2160
        %v2162 = vld [vmem:[%s2002 + $0x4f0] sm:%s1995]
        %2163 = vst [vmem:[%s2003 + $0x4f0] sm:%s1995] %v2162
        %v2164 = vld [vmem:[%s2002 + $0x500] sm:%s1995]
        %2165 = vst [vmem:[%s2003 + $0x500] sm:%s1995] %v2164
        %v2166 = vld [vmem:[%s2002 + $0x510] sm:%s1995]
        %2167 = vst [vmem:[%s2003 + $0x510] sm:%s1995] %v2166
        %v2168 = vld [vmem:[%s2002 + $0x520] sm:%s1995]
        %2169 = vst [vmem:[%s2003 + $0x520] sm:%s1995] %v2168
        %v2170 = vld [vmem:[%s2002 + $0x530] sm:%s1995]
        %2171 = vst [vmem:[%s2003 + $0x530] sm:%s1995] %v2170
        %v2172 = vld [vmem:[%s2002 + $0x540] sm:%s1995]
        %2173 = vst [vmem:[%s2003 + $0x540] sm:%s1995] %v2172
        %v2174 = vld [vmem:[%s2002 + $0x550] sm:%s1995]
        %2175 = vst [vmem:[%s2003 + $0x550] sm:%s1995] %v2174
        %v2176 = vld [vmem:[%s2002 + $0x560] sm:%s1995]
        %2177 = vst [vmem:[%s2003 + $0x560] sm:%s1995] %v2176
        %v2178 = vld [vmem:[%s2002 + $0x570] sm:%s1995]
        %2179 = vst [vmem:[%s2003 + $0x570] sm:%s1995] %v2178
        %v2180 = vld [vmem:[%s2002 + $0x580] sm:%s1995]
        %2181 = vst [vmem:[%s2003 + $0x580] sm:%s1995] %v2180
        %v2182 = vld [vmem:[%s2002 + $0x590] sm:%s1995]
        %2183 = vst [vmem:[%s2003 + $0x590] sm:%s1995] %v2182
        %v2184 = vld [vmem:[%s2002 + $0x5a0] sm:%s1995]
        %2185 = vst [vmem:[%s2003 + $0x5a0] sm:%s1995] %v2184
        %v2186 = vld [vmem:[%s2002 + $0x5b0] sm:%s1995]
        %2187 = vst [vmem:[%s2003 + $0x5b0] sm:%s1995] %v2186
        %v2188 = vld [vmem:[%s2002 + $0x5c0] sm:%s1995]
        %2189 = vst [vmem:[%s2003 + $0x5c0] sm:%s1995] %v2188
        %v2190 = vld [vmem:[%s2002 + $0x5d0] sm:%s1995]
        %2191 = vst [vmem:[%s2003 + $0x5d0] sm:%s1995] %v2190
        %v2192 = vld [vmem:[%s2002 + $0x5e0] sm:%s1995]
        %2193 = vst [vmem:[%s2003 + $0x5e0] sm:%s1995] %v2192
        %v2194 = vld [vmem:[%s2002 + $0x5f0] sm:%s1995]
        %2195 = vst [vmem:[%s2003 + $0x5f0] sm:%s1995] %v2194
        %v2196 = vld [vmem:[%s2002 + $0x600] sm:%s1995]
        %2197 = vst [vmem:[%s2003 + $0x600] sm:%s1995] %v2196
        %v2198 = vld [vmem:[%s2002 + $0x610] sm:%s1995]
        %2199 = vst [vmem:[%s2003 + $0x610] sm:%s1995] %v2198
        %v2200 = vld [vmem:[%s2002 + $0x620] sm:%s1995]
        %2201 = vst [vmem:[%s2003 + $0x620] sm:%s1995] %v2200
        %v2202 = vld [vmem:[%s2002 + $0x630] sm:%s1995]
        %2203 = vst [vmem:[%s2003 + $0x630] sm:%s1995] %v2202
        %v2204 = vld [vmem:[%s2002 + $0x640] sm:%s1995]
        %2205 = vst [vmem:[%s2003 + $0x640] sm:%s1995] %v2204
        %v2206 = vld [vmem:[%s2002 + $0x650] sm:%s1995]
        %2207 = vst [vmem:[%s2003 + $0x650] sm:%s1995] %v2206
        %v2208 = vld [vmem:[%s2002 + $0x660] sm:%s1995]
        %2209 = vst [vmem:[%s2003 + $0x660] sm:%s1995] %v2208
        %v2210 = vld [vmem:[%s2002 + $0x670] sm:%s1995]
        %2211 = vst [vmem:[%s2003 + $0x670] sm:%s1995] %v2210
        %v2212 = vld [vmem:[%s2002 + $0x680] sm:%s1995]
        %2213 = vst [vmem:[%s2003 + $0x680] sm:%s1995] %v2212
        %v2214 = vld [vmem:[%s2002 + $0x690] sm:%s1995]
        %2215 = vst [vmem:[%s2003 + $0x690] sm:%s1995] %v2214
        %v2216 = vld [vmem:[%s2002 + $0x6a0] sm:%s1995]
        %2217 = vst [vmem:[%s2003 + $0x6a0] sm:%s1995] %v2216
        %v2218 = vld [vmem:[%s2002 + $0x6b0] sm:%s1995]
        %2219 = vst [vmem:[%s2003 + $0x6b0] sm:%s1995] %v2218
        %v2220 = vld [vmem:[%s2002 + $0x6c0] sm:%s1995]
        %2221 = vst [vmem:[%s2003 + $0x6c0] sm:%s1995] %v2220
        %v2222 = vld [vmem:[%s2002 + $0x6d0] sm:%s1995]
        %2223 = vst [vmem:[%s2003 + $0x6d0] sm:%s1995] %v2222
        %v2224 = vld [vmem:[%s2002 + $0x6e0] sm:%s1995]
        %2225 = vst [vmem:[%s2003 + $0x6e0] sm:%s1995] %v2224
        %v2226 = vld [vmem:[%s2002 + $0x6f0] sm:%s1995]
        %2227 = vst [vmem:[%s2003 + $0x6f0] sm:%s1995] %v2226
        %v2228 = vld [vmem:[%s2002 + $0x700] sm:%s1995]
        %2229 = vst [vmem:[%s2003 + $0x700] sm:%s1995] %v2228
        %v2230 = vld [vmem:[%s2002 + $0x710] sm:%s1995]
        %2231 = vst [vmem:[%s2003 + $0x710] sm:%s1995] %v2230
        %v2232 = vld [vmem:[%s2002 + $0x720] sm:%s1995]
        %2233 = vst [vmem:[%s2003 + $0x720] sm:%s1995] %v2232
        %v2234 = vld [vmem:[%s2002 + $0x730] sm:%s1995]
        %2235 = vst [vmem:[%s2003 + $0x730] sm:%s1995] %v2234
        %v2236 = vld [vmem:[%s2002 + $0x740] sm:%s1995]
        %2237 = vst [vmem:[%s2003 + $0x740] sm:%s1995] %v2236
        %v2238 = vld [vmem:[%s2002 + $0x750] sm:%s1995]
        %2239 = vst [vmem:[%s2003 + $0x750] sm:%s1995] %v2238
        %v2240 = vld [vmem:[%s2002 + $0x760] sm:%s1995]
        %2241 = vst [vmem:[%s2003 + $0x760] sm:%s1995] %v2240
        %v2242 = vld [vmem:[%s2002 + $0x770] sm:%s1995]
        %2243 = vst [vmem:[%s2003 + $0x770] sm:%s1995] %v2242
        %v2244 = vld [vmem:[%s2002 + $0x780] sm:%s1995]
        %2245 = vst [vmem:[%s2003 + $0x780] sm:%s1995] %v2244
        %v2246 = vld [vmem:[%s2002 + $0x790] sm:%s1995]
        %2247 = vst [vmem:[%s2003 + $0x790] sm:%s1995] %v2246
        %v2248 = vld [vmem:[%s2002 + $0x7a0] sm:%s1995]
        %2249 = vst [vmem:[%s2003 + $0x7a0] sm:%s1995] %v2248
        %v2250 = vld [vmem:[%s2002 + $0x7b0] sm:%s1995]
        %2251 = vst [vmem:[%s2003 + $0x7b0] sm:%s1995] %v2250
        %v2252 = vld [vmem:[%s2002 + $0x7c0] sm:%s1995]
        %2253 = vst [vmem:[%s2003 + $0x7c0] sm:%s1995] %v2252
        %v2254 = vld [vmem:[%s2002 + $0x7d0] sm:%s1995]
        %2255 = vst [vmem:[%s2003 + $0x7d0] sm:%s1995] %v2254
        %v2256 = vld [vmem:[%s2002 + $0x7e0] sm:%s1995]
        %2257 = vst [vmem:[%s2003 + $0x7e0] sm:%s1995] %v2256
        %v2258 = vld [vmem:[%s2002 + $0x7f0] sm:%s1995]
        %2259 = vst [vmem:[%s2003 + $0x7f0] sm:%s1995] %v2258
        %v2260 = vld [vmem:[%s2002 + $0x800] sm:%s1995]
        %2261 = vst [vmem:[%s2003 + $0x800] sm:%s1995] %v2260
        %v2262 = vld [vmem:[%s2002 + $0x810] sm:%s1995]
        %2263 = vst [vmem:[%s2003 + $0x810] sm:%s1995] %v2262
        %v2264 = vld [vmem:[%s2002 + $0x820] sm:%s1995]
        %2265 = vst [vmem:[%s2003 + $0x820] sm:%s1995] %v2264
        %v2266 = vld [vmem:[%s2002 + $0x830] sm:%s1995]
        %2267 = vst [vmem:[%s2003 + $0x830] sm:%s1995] %v2266
        %v2268 = vld [vmem:[%s2002 + $0x840] sm:%s1995]
        %2269 = vst [vmem:[%s2003 + $0x840] sm:%s1995] %v2268
        %v2270 = vld [vmem:[%s2002 + $0x850] sm:%s1995]
        %2271 = vst [vmem:[%s2003 + $0x850] sm:%s1995] %v2270
        %v2272 = vld [vmem:[%s2002 + $0x860] sm:%s1995]
        %2273 = vst [vmem:[%s2003 + $0x860] sm:%s1995] %v2272
        %v2274 = vld [vmem:[%s2002 + $0x870] sm:%s1995]
        %2275 = vst [vmem:[%s2003 + $0x870] sm:%s1995] %v2274
        %v2276 = vld [vmem:[%s2002 + $0x880] sm:%s1995]
        %2277 = vst [vmem:[%s2003 + $0x880] sm:%s1995] %v2276
        %v2278 = vld [vmem:[%s2002 + $0x890] sm:%s1995]
        %2279 = vst [vmem:[%s2003 + $0x890] sm:%s1995] %v2278
        %v2280 = vld [vmem:[%s2002 + $0x8a0] sm:%s1995]
        %2281 = vst [vmem:[%s2003 + $0x8a0] sm:%s1995] %v2280
        %v2282 = vld [vmem:[%s2002 + $0x8b0] sm:%s1995]
        %2283 = vst [vmem:[%s2003 + $0x8b0] sm:%s1995] %v2282
        %v2284 = vld [vmem:[%s2002 + $0x8c0] sm:%s1995]
        %2285 = vst [vmem:[%s2003 + $0x8c0] sm:%s1995] %v2284
        %v2286 = vld [vmem:[%s2002 + $0x8d0] sm:%s1995]
        %2287 = vst [vmem:[%s2003 + $0x8d0] sm:%s1995] %v2286
        %v2288 = vld [vmem:[%s2002 + $0x8e0] sm:%s1995]
        %2289 = vst [vmem:[%s2003 + $0x8e0] sm:%s1995] %v2288
        %v2290 = vld [vmem:[%s2002 + $0x8f0] sm:%s1995]
        %2291 = vst [vmem:[%s2003 + $0x8f0] sm:%s1995] %v2290
        %v2292 = vld [vmem:[%s2002 + $0x900] sm:%s1995]
        %2293 = vst [vmem:[%s2003 + $0x900] sm:%s1995] %v2292
        %v2294 = vld [vmem:[%s2002 + $0x910] sm:%s1995]
        %2295 = vst [vmem:[%s2003 + $0x910] sm:%s1995] %v2294
        %v2296 = vld [vmem:[%s2002 + $0x920] sm:%s1995]
        %2297 = vst [vmem:[%s2003 + $0x920] sm:%s1995] %v2296
        %v2298 = vld [vmem:[%s2002 + $0x930] sm:%s1995]
        %2299 = vst [vmem:[%s2003 + $0x930] sm:%s1995] %v2298
        %v2300 = vld [vmem:[%s2002 + $0x940] sm:%s1995]
        %2301 = vst [vmem:[%s2003 + $0x940] sm:%s1995] %v2300
        %v2302 = vld [vmem:[%s2002 + $0x950] sm:%s1995]
        %2303 = vst [vmem:[%s2003 + $0x950] sm:%s1995] %v2302
        %v2304 = vld [vmem:[%s2002 + $0x960] sm:%s1995]
        %2305 = vst [vmem:[%s2003 + $0x960] sm:%s1995] %v2304
        %v2306 = vld [vmem:[%s2002 + $0x970] sm:%s1995]
        %2307 = vst [vmem:[%s2003 + $0x970] sm:%s1995] %v2306
        %v2308 = vld [vmem:[%s2002 + $0x980] sm:%s1995]
        %2309 = vst [vmem:[%s2003 + $0x980] sm:%s1995] %v2308
        %v2310 = vld [vmem:[%s2002 + $0x990] sm:%s1995]
        %2311 = vst [vmem:[%s2003 + $0x990] sm:%s1995] %v2310
        %v2312 = vld [vmem:[%s2002 + $0x9a0] sm:%s1995]
        %2313 = vst [vmem:[%s2003 + $0x9a0] sm:%s1995] %v2312
        %v2314 = vld [vmem:[%s2002 + $0x9b0] sm:%s1995]
        %2315 = vst [vmem:[%s2003 + $0x9b0] sm:%s1995] %v2314
        %v2316 = vld [vmem:[%s2002 + $0x9c0] sm:%s1995]
        %2317 = vst [vmem:[%s2003 + $0x9c0] sm:%s1995] %v2316
        %v2318 = vld [vmem:[%s2002 + $0x9d0] sm:%s1995]
        %2319 = vst [vmem:[%s2003 + $0x9d0] sm:%s1995] %v2318
        %v2320 = vld [vmem:[%s2002 + $0x9e0] sm:%s1995]
        %2321 = vst [vmem:[%s2003 + $0x9e0] sm:%s1995] %v2320
        %v2322 = vld [vmem:[%s2002 + $0x9f0] sm:%s1995]
        %2323 = vst [vmem:[%s2003 + $0x9f0] sm:%s1995] %v2322
        %v2324 = vld [vmem:[%s2002 + $0xa00] sm:%s1995]
        %2325 = vst [vmem:[%s2003 + $0xa00] sm:%s1995] %v2324
        %v2326 = vld [vmem:[%s2002 + $0xa10] sm:%s1995]
        %2327 = vst [vmem:[%s2003 + $0xa10] sm:%s1995] %v2326
        %v2328 = vld [vmem:[%s2002 + $0xa20] sm:%s1995]
        %2329 = vst [vmem:[%s2003 + $0xa20] sm:%s1995] %v2328
        %v2330 = vld [vmem:[%s2002 + $0xa30] sm:%s1995]
        %2331 = vst [vmem:[%s2003 + $0xa30] sm:%s1995] %v2330
        %v2332 = vld [vmem:[%s2002 + $0xa40] sm:%s1995]
        %2333 = vst [vmem:[%s2003 + $0xa40] sm:%s1995] %v2332
        %v2334 = vld [vmem:[%s2002 + $0xa50] sm:%s1995]
        %2335 = vst [vmem:[%s2003 + $0xa50] sm:%s1995] %v2334
        %v2336 = vld [vmem:[%s2002 + $0xa60] sm:%s1995]
        %2337 = vst [vmem:[%s2003 + $0xa60] sm:%s1995] %v2336
        %v2338 = vld [vmem:[%s2002 + $0xa70] sm:%s1995]
        %2339 = vst [vmem:[%s2003 + $0xa70] sm:%s1995] %v2338
        %v2340 = vld [vmem:[%s2002 + $0xa80] sm:%s1995]
        %2341 = vst [vmem:[%s2003 + $0xa80] sm:%s1995] %v2340
        %v2342 = vld [vmem:[%s2002 + $0xa90] sm:%s1995]
        %2343 = vst [vmem:[%s2003 + $0xa90] sm:%s1995] %v2342
        %v2344 = vld [vmem:[%s2002 + $0xaa0] sm:%s1995]
        %2345 = vst [vmem:[%s2003 + $0xaa0] sm:%s1995] %v2344
        %v2346 = vld [vmem:[%s2002 + $0xab0] sm:%s1995]
        %2347 = vst [vmem:[%s2003 + $0xab0] sm:%s1995] %v2346
        %v2348 = vld [vmem:[%s2002 + $0xac0] sm:%s1995]
        %2349 = vst [vmem:[%s2003 + $0xac0] sm:%s1995] %v2348
        %v2350 = vld [vmem:[%s2002 + $0xad0] sm:%s1995]
        %2351 = vst [vmem:[%s2003 + $0xad0] sm:%s1995] %v2350
        %v2352 = vld [vmem:[%s2002 + $0xae0] sm:%s1995]
        %2353 = vst [vmem:[%s2003 + $0xae0] sm:%s1995] %v2352
        %v2354 = vld [vmem:[%s2002 + $0xaf0] sm:%s1995]
        %2355 = vst [vmem:[%s2003 + $0xaf0] sm:%s1995] %v2354
        %v2356 = vld [vmem:[%s2002 + $0xb00] sm:%s1995]
        %2357 = vst [vmem:[%s2003 + $0xb00] sm:%s1995] %v2356
        %v2358 = vld [vmem:[%s2002 + $0xb10] sm:%s1995]
        %2359 = vst [vmem:[%s2003 + $0xb10] sm:%s1995] %v2358
        %v2360 = vld [vmem:[%s2002 + $0xb20] sm:%s1995]
        %2361 = vst [vmem:[%s2003 + $0xb20] sm:%s1995] %v2360
        %v2362 = vld [vmem:[%s2002 + $0xb30] sm:%s1995]
        %2363 = vst [vmem:[%s2003 + $0xb30] sm:%s1995] %v2362
        %v2364 = vld [vmem:[%s2002 + $0xb40] sm:%s1995]
        %2365 = vst [vmem:[%s2003 + $0xb40] sm:%s1995] %v2364
        %v2366 = vld [vmem:[%s2002 + $0xb50] sm:%s1995]
        %2367 = vst [vmem:[%s2003 + $0xb50] sm:%s1995] %v2366
        %v2368 = vld [vmem:[%s2002 + $0xb60] sm:%s1995]
        %2369 = vst [vmem:[%s2003 + $0xb60] sm:%s1995] %v2368
        %v2370 = vld [vmem:[%s2002 + $0xb70] sm:%s1995]
        %2371 = vst [vmem:[%s2003 + $0xb70] sm:%s1995] %v2370
        %v2372 = vld [vmem:[%s2002 + $0xb80] sm:%s1995]
        %2373 = vst [vmem:[%s2003 + $0xb80] sm:%s1995] %v2372
        %v2374 = vld [vmem:[%s2002 + $0xb90] sm:%s1995]
        %2375 = vst [vmem:[%s2003 + $0xb90] sm:%s1995] %v2374
        %v2376 = vld [vmem:[%s2002 + $0xba0] sm:%s1995]
        %2377 = vst [vmem:[%s2003 + $0xba0] sm:%s1995] %v2376
        %v2378 = vld [vmem:[%s2002 + $0xbb0] sm:%s1995]
        %2379 = vst [vmem:[%s2003 + $0xbb0] sm:%s1995] %v2378
        %v2380 = vld [vmem:[%s2002 + $0xbc0] sm:%s1995]
        %2381 = vst [vmem:[%s2003 + $0xbc0] sm:%s1995] %v2380
        %v2382 = vld [vmem:[%s2002 + $0xbd0] sm:%s1995]
        %2383 = vst [vmem:[%s2003 + $0xbd0] sm:%s1995] %v2382
        %v2384 = vld [vmem:[%s2002 + $0xbe0] sm:%s1995]
        %2385 = vst [vmem:[%s2003 + $0xbe0] sm:%s1995] %v2384
        %v2386 = vld [vmem:[%s2002 + $0xbf0] sm:%s1995]
        %2387 = vst [vmem:[%s2003 + $0xbf0] sm:%s1995] %v2386
        %v2388 = vld [vmem:[%s2002 + $0xc00] sm:%s1995]
        %2389 = vst [vmem:[%s2003 + $0xc00] sm:%s1995] %v2388
        %v2390 = vld [vmem:[%s2002 + $0xc10] sm:%s1995]
        %2391 = vst [vmem:[%s2003 + $0xc10] sm:%s1995] %v2390
        %v2392 = vld [vmem:[%s2002 + $0xc20] sm:%s1995]
        %2393 = vst [vmem:[%s2003 + $0xc20] sm:%s1995] %v2392
        %v2394 = vld [vmem:[%s2002 + $0xc30] sm:%s1995]
        %2395 = vst [vmem:[%s2003 + $0xc30] sm:%s1995] %v2394
        %v2396 = vld [vmem:[%s2002 + $0xc40] sm:%s1995]
        %2397 = vst [vmem:[%s2003 + $0xc40] sm:%s1995] %v2396
        %v2398 = vld [vmem:[%s2002 + $0xc50] sm:%s1995]
        %2399 = vst [vmem:[%s2003 + $0xc50] sm:%s1995] %v2398
        %v2400 = vld [vmem:[%s2002 + $0xc60] sm:%s1995]
        %2401 = vst [vmem:[%s2003 + $0xc60] sm:%s1995] %v2400
        %v2402 = vld [vmem:[%s2002 + $0xc70] sm:%s1995]
        %2403 = vst [vmem:[%s2003 + $0xc70] sm:%s1995] %v2402
        %v2404 = vld [vmem:[%s2002 + $0xc80] sm:%s1995]
        %2405 = vst [vmem:[%s2003 + $0xc80] sm:%s1995] %v2404
        %v2406 = vld [vmem:[%s2002 + $0xc90] sm:%s1995]
        %2407 = vst [vmem:[%s2003 + $0xc90] sm:%s1995] %v2406
        %v2408 = vld [vmem:[%s2002 + $0xca0] sm:%s1995]
        %2409 = vst [vmem:[%s2003 + $0xca0] sm:%s1995] %v2408
        %v2410 = vld [vmem:[%s2002 + $0xcb0] sm:%s1995]
        %2411 = vst [vmem:[%s2003 + $0xcb0] sm:%s1995] %v2410
        %v2412 = vld [vmem:[%s2002 + $0xcc0] sm:%s1995]
        %2413 = vst [vmem:[%s2003 + $0xcc0] sm:%s1995] %v2412
        %v2414 = vld [vmem:[%s2002 + $0xcd0] sm:%s1995]
        %2415 = vst [vmem:[%s2003 + $0xcd0] sm:%s1995] %v2414
        %v2416 = vld [vmem:[%s2002 + $0xce0] sm:%s1995]
        %2417 = vst [vmem:[%s2003 + $0xce0] sm:%s1995] %v2416
        %v2418 = vld [vmem:[%s2002 + $0xcf0] sm:%s1995]
        %2419 = vst [vmem:[%s2003 + $0xcf0] sm:%s1995] %v2418
        %v2420 = vld [vmem:[%s2002 + $0xd00] sm:%s1995]
        %2421 = vst [vmem:[%s2003 + $0xd00] sm:%s1995] %v2420
        %v2422 = vld [vmem:[%s2002 + $0xd10] sm:%s1995]
        %2423 = vst [vmem:[%s2003 + $0xd10] sm:%s1995] %v2422
        %v2424 = vld [vmem:[%s2002 + $0xd20] sm:%s1995]
        %2425 = vst [vmem:[%s2003 + $0xd20] sm:%s1995] %v2424
        %v2426 = vld [vmem:[%s2002 + $0xd30] sm:%s1995]
        %2427 = vst [vmem:[%s2003 + $0xd30] sm:%s1995] %v2426
        %v2428 = vld [vmem:[%s2002 + $0xd40] sm:%s1995]
        %2429 = vst [vmem:[%s2003 + $0xd40] sm:%s1995] %v2428
        %v2430 = vld [vmem:[%s2002 + $0xd50] sm:%s1995]
        %2431 = vst [vmem:[%s2003 + $0xd50] sm:%s1995] %v2430
        %v2432 = vld [vmem:[%s2002 + $0xd60] sm:%s1995]
        %2433 = vst [vmem:[%s2003 + $0xd60] sm:%s1995] %v2432
        %v2434 = vld [vmem:[%s2002 + $0xd70] sm:%s1995]
        %2435 = vst [vmem:[%s2003 + $0xd70] sm:%s1995] %v2434
        %v2436 = vld [vmem:[%s2002 + $0xd80] sm:%s1995]
        %2437 = vst [vmem:[%s2003 + $0xd80] sm:%s1995] %v2436
        %v2438 = vld [vmem:[%s2002 + $0xd90] sm:%s1995]
        %2439 = vst [vmem:[%s2003 + $0xd90] sm:%s1995] %v2438
        %v2440 = vld [vmem:[%s2002 + $0xda0] sm:%s1995]
        %2441 = vst [vmem:[%s2003 + $0xda0] sm:%s1995] %v2440
        %v2442 = vld [vmem:[%s2002 + $0xdb0] sm:%s1995]
        %2443 = vst [vmem:[%s2003 + $0xdb0] sm:%s1995] %v2442
        %v2444 = vld [vmem:[%s2002 + $0xdc0] sm:%s1995]
        %2445 = vst [vmem:[%s2003 + $0xdc0] sm:%s1995] %v2444
        %v2446 = vld [vmem:[%s2002 + $0xdd0] sm:%s1995]
        %2447 = vst [vmem:[%s2003 + $0xdd0] sm:%s1995] %v2446
        %v2448 = vld [vmem:[%s2002 + $0xde0] sm:%s1995]
        %2449 = vst [vmem:[%s2003 + $0xde0] sm:%s1995] %v2448
        %v2450 = vld [vmem:[%s2002 + $0xdf0] sm:%s1995]
        %2451 = vst [vmem:[%s2003 + $0xdf0] sm:%s1995] %v2450
        %v2452 = vld [vmem:[%s2002 + $0xe00] sm:%s1995]
        %2453 = vst [vmem:[%s2003 + $0xe00] sm:%s1995] %v2452
        %v2454 = vld [vmem:[%s2002 + $0xe10] sm:%s1995]
        %2455 = vst [vmem:[%s2003 + $0xe10] sm:%s1995] %v2454
        %v2456 = vld [vmem:[%s2002 + $0xe20] sm:%s1995]
        %2457 = vst [vmem:[%s2003 + $0xe20] sm:%s1995] %v2456
        %v2458 = vld [vmem:[%s2002 + $0xe30] sm:%s1995]
        %2459 = vst [vmem:[%s2003 + $0xe30] sm:%s1995] %v2458
        %v2460 = vld [vmem:[%s2002 + $0xe40] sm:%s1995]
        %2461 = vst [vmem:[%s2003 + $0xe40] sm:%s1995] %v2460
        %v2462 = vld [vmem:[%s2002 + $0xe50] sm:%s1995]
        %2463 = vst [vmem:[%s2003 + $0xe50] sm:%s1995] %v2462
        %v2464 = vld [vmem:[%s2002 + $0xe60] sm:%s1995]
        %2465 = vst [vmem:[%s2003 + $0xe60] sm:%s1995] %v2464
        %v2466 = vld [vmem:[%s2002 + $0xe70] sm:%s1995]
        %2467 = vst [vmem:[%s2003 + $0xe70] sm:%s1995] %v2466
        %v2468 = vld [vmem:[%s2002 + $0xe80] sm:%s1995]
        %2469 = vst [vmem:[%s2003 + $0xe80] sm:%s1995] %v2468
        %v2470 = vld [vmem:[%s2002 + $0xe90] sm:%s1995]
        %2471 = vst [vmem:[%s2003 + $0xe90] sm:%s1995] %v2470
        %v2472 = vld [vmem:[%s2002 + $0xea0] sm:%s1995]
        %2473 = vst [vmem:[%s2003 + $0xea0] sm:%s1995] %v2472
        %v2474 = vld [vmem:[%s2002 + $0xeb0] sm:%s1995]
        %2475 = vst [vmem:[%s2003 + $0xeb0] sm:%s1995] %v2474
        %v2476 = vld [vmem:[%s2002 + $0xec0] sm:%s1995]
        %2477 = vst [vmem:[%s2003 + $0xec0] sm:%s1995] %v2476
        %v2478 = vld [vmem:[%s2002 + $0xed0] sm:%s1995]
        %2479 = vst [vmem:[%s2003 + $0xed0] sm:%s1995] %v2478
        %v2480 = vld [vmem:[%s2002 + $0xee0] sm:%s1995]
        %2481 = vst [vmem:[%s2003 + $0xee0] sm:%s1995] %v2480
        %v2482 = vld [vmem:[%s2002 + $0xef0] sm:%s1995]
        %2483 = vst [vmem:[%s2003 + $0xef0] sm:%s1995] %v2482
        %v2484 = vld [vmem:[%s2002 + $0xf00] sm:%s1995]
        %2485 = vst [vmem:[%s2003 + $0xf00] sm:%s1995] %v2484
        %v2486 = vld [vmem:[%s2002 + $0xf10] sm:%s1995]
        %2487 = vst [vmem:[%s2003 + $0xf10] sm:%s1995] %v2486
        %v2488 = vld [vmem:[%s2002 + $0xf20] sm:%s1995]
        %2489 = vst [vmem:[%s2003 + $0xf20] sm:%s1995] %v2488
        %v2490 = vld [vmem:[%s2002 + $0xf30] sm:%s1995]
        %2491 = vst [vmem:[%s2003 + $0xf30] sm:%s1995] %v2490
        %v2492 = vld [vmem:[%s2002 + $0xf40] sm:%s1995]
        %2493 = vst [vmem:[%s2003 + $0xf40] sm:%s1995] %v2492
        %v2494 = vld [vmem:[%s2002 + $0xf50] sm:%s1995]
        %2495 = vst [vmem:[%s2003 + $0xf50] sm:%s1995] %v2494
        %v2496 = vld [vmem:[%s2002 + $0xf60] sm:%s1995]
        %2497 = vst [vmem:[%s2003 + $0xf60] sm:%s1995] %v2496
        %v2498 = vld [vmem:[%s2002 + $0xf70] sm:%s1995]
        %2499 = vst [vmem:[%s2003 + $0xf70] sm:%s1995] %v2498
        %v2500 = vld [vmem:[%s2002 + $0xf80] sm:%s1995]
        %2501 = vst [vmem:[%s2003 + $0xf80] sm:%s1995] %v2500
        %v2502 = vld [vmem:[%s2002 + $0xf90] sm:%s1995]
        %2503 = vst [vmem:[%s2003 + $0xf90] sm:%s1995] %v2502
        %v2504 = vld [vmem:[%s2002 + $0xfa0] sm:%s1995]
        %2505 = vst [vmem:[%s2003 + $0xfa0] sm:%s1995] %v2504
        %v2506 = vld [vmem:[%s2002 + $0xfb0] sm:%s1995]
        %2507 = vst [vmem:[%s2003 + $0xfb0] sm:%s1995] %v2506
        %v2508 = vld [vmem:[%s2002 + $0xfc0] sm:%s1995]
        %2509 = vst [vmem:[%s2003 + $0xfc0] sm:%s1995] %v2508
        %v2510 = vld [vmem:[%s2002 + $0xfd0] sm:%s1995]
        %2511 = vst [vmem:[%s2003 + $0xfd0] sm:%s1995] %v2510
        %v2512 = vld [vmem:[%s2002 + $0xfe0] sm:%s1995]
        %2513 = vst [vmem:[%s2003 + $0xfe0] sm:%s1995] %v2512
        %v2514 = vld [vmem:[%s2002 + $0xff0] sm:%s1995]
        %2515 = vst [vmem:[%s2003 + $0xff0] sm:%s1995] %v2514
        %v2516 = vld [vmem:[%s2002 + $0x1000] sm:%s1995]
        %2517 = vst [vmem:[%s2003 + $0x1000] sm:%s1995] %v2516
        %v2518 = vld [vmem:[%s2002 + $0x1010] sm:%s1995]
        %2519 = vst [vmem:[%s2003 + $0x1010] sm:%s1995] %v2518
        %v2520 = vld [vmem:[%s2002 + $0x1020] sm:%s1995]
        %2521 = vst [vmem:[%s2003 + $0x1020] sm:%s1995] %v2520
        %v2522 = vld [vmem:[%s2002 + $0x1030] sm:%s1995]
        %2523 = vst [vmem:[%s2003 + $0x1030] sm:%s1995] %v2522
        %v2524 = vld [vmem:[%s2002 + $0x1040] sm:%s1995]
        %2525 = vst [vmem:[%s2003 + $0x1040] sm:%s1995] %v2524
        %v2526 = vld [vmem:[%s2002 + $0x1050] sm:%s1995]
        %2527 = vst [vmem:[%s2003 + $0x1050] sm:%s1995] %v2526
        %v2528 = vld [vmem:[%s2002 + $0x1060] sm:%s1995]
        %2529 = vst [vmem:[%s2003 + $0x1060] sm:%s1995] %v2528
        %v2530 = vld [vmem:[%s2002 + $0x1070] sm:%s1995]
        %2531 = vst [vmem:[%s2003 + $0x1070] sm:%s1995] %v2530
        %v2532 = vld [vmem:[%s2002 + $0x1080] sm:%s1995]
        %2533 = vst [vmem:[%s2003 + $0x1080] sm:%s1995] %v2532
        %v2534 = vld [vmem:[%s2002 + $0x1090] sm:%s1995]
        %2535 = vst [vmem:[%s2003 + $0x1090] sm:%s1995] %v2534
        %v2536 = vld [vmem:[%s2002 + $0x10a0] sm:%s1995]
        %2537 = vst [vmem:[%s2003 + $0x10a0] sm:%s1995] %v2536
        %v2538 = vld [vmem:[%s2002 + $0x10b0] sm:%s1995]
        %2539 = vst [vmem:[%s2003 + $0x10b0] sm:%s1995] %v2538
        %v2540 = vld [vmem:[%s2002 + $0x10c0] sm:%s1995]
        %2541 = vst [vmem:[%s2003 + $0x10c0] sm:%s1995] %v2540
        %v2542 = vld [vmem:[%s2002 + $0x10d0] sm:%s1995]
        %2543 = vst [vmem:[%s2003 + $0x10d0] sm:%s1995] %v2542
        %v2544 = vld [vmem:[%s2002 + $0x10e0] sm:%s1995]
        %2545 = vst [vmem:[%s2003 + $0x10e0] sm:%s1995] %v2544
        %v2546 = vld [vmem:[%s2002 + $0x10f0] sm:%s1995]
        %2547 = vst [vmem:[%s2003 + $0x10f0] sm:%s1995] %v2546
        %v2548 = vld [vmem:[%s2002 + $0x1100] sm:%s1995]
        %2549 = vst [vmem:[%s2003 + $0x1100] sm:%s1995] %v2548
        %v2550 = vld [vmem:[%s2002 + $0x1110] sm:%s1995]
        %2551 = vst [vmem:[%s2003 + $0x1110] sm:%s1995] %v2550
        %v2552 = vld [vmem:[%s2002 + $0x1120] sm:%s1995]
        %2553 = vst [vmem:[%s2003 + $0x1120] sm:%s1995] %v2552
        %v2554 = vld [vmem:[%s2002 + $0x1130] sm:%s1995]
        %2555 = vst [vmem:[%s2003 + $0x1130] sm:%s1995] %v2554
        %v2556 = vld [vmem:[%s2002 + $0x1140] sm:%s1995]
        %2557 = vst [vmem:[%s2003 + $0x1140] sm:%s1995] %v2556
        %v2558 = vld [vmem:[%s2002 + $0x1150] sm:%s1995]
        %2559 = vst [vmem:[%s2003 + $0x1150] sm:%s1995] %v2558
        %v2560 = vld [vmem:[%s2002 + $0x1160] sm:%s1995]
        %2561 = vst [vmem:[%s2003 + $0x1160] sm:%s1995] %v2560
        %v2562 = vld [vmem:[%s2002 + $0x1170] sm:%s1995]
        %2563 = vst [vmem:[%s2003 + $0x1170] sm:%s1995] %v2562
        %v2564 = vld [vmem:[%s2002 + $0x1180] sm:%s1995]
        %2565 = vst [vmem:[%s2003 + $0x1180] sm:%s1995] %v2564
        %v2566 = vld [vmem:[%s2002 + $0x1190] sm:%s1995]
        %2567 = vst [vmem:[%s2003 + $0x1190] sm:%s1995] %v2566
        %v2568 = vld [vmem:[%s2002 + $0x11a0] sm:%s1995]
        %2569 = vst [vmem:[%s2003 + $0x11a0] sm:%s1995] %v2568
        %v2570 = vld [vmem:[%s2002 + $0x11b0] sm:%s1995]
        %2571 = vst [vmem:[%s2003 + $0x11b0] sm:%s1995] %v2570
        %v2572 = vld [vmem:[%s2002 + $0x11c0] sm:%s1995]
        %2573 = vst [vmem:[%s2003 + $0x11c0] sm:%s1995] %v2572
        %v2574 = vld [vmem:[%s2002 + $0x11d0] sm:%s1995]
        %2575 = vst [vmem:[%s2003 + $0x11d0] sm:%s1995] %v2574
        %v2576 = vld [vmem:[%s2002 + $0x11e0] sm:%s1995]
        %2577 = vst [vmem:[%s2003 + $0x11e0] sm:%s1995] %v2576
        %v2578 = vld [vmem:[%s2002 + $0x11f0] sm:%s1995]
        %2579 = vst [vmem:[%s2003 + $0x11f0] sm:%s1995] %v2578
        %v2580 = vld [vmem:[%s2002 + $0x1200] sm:%s1995]
        %2581 = vst [vmem:[%s2003 + $0x1200] sm:%s1995] %v2580
        %v2582 = vld [vmem:[%s2002 + $0x1210] sm:%s1995]
        %2583 = vst [vmem:[%s2003 + $0x1210] sm:%s1995] %v2582
        %v2584 = vld [vmem:[%s2002 + $0x1220] sm:%s1995]
        %2585 = vst [vmem:[%s2003 + $0x1220] sm:%s1995] %v2584
        %v2586 = vld [vmem:[%s2002 + $0x1230] sm:%s1995]
        %2587 = vst [vmem:[%s2003 + $0x1230] sm:%s1995] %v2586
        %v2588 = vld [vmem:[%s2002 + $0x1240] sm:%s1995]
        %2589 = vst [vmem:[%s2003 + $0x1240] sm:%s1995] %v2588
        %v2590 = vld [vmem:[%s2002 + $0x1250] sm:%s1995]
        %2591 = vst [vmem:[%s2003 + $0x1250] sm:%s1995] %v2590
        %v2592 = vld [vmem:[%s2002 + $0x1260] sm:%s1995]
        %2593 = vst [vmem:[%s2003 + $0x1260] sm:%s1995] %v2592
        %v2594 = vld [vmem:[%s2002 + $0x1270] sm:%s1995]
        %2595 = vst [vmem:[%s2003 + $0x1270] sm:%s1995] %v2594
        %v2596 = vld [vmem:[%s2002 + $0x1280] sm:%s1995]
        %2597 = vst [vmem:[%s2003 + $0x1280] sm:%s1995] %v2596
        %v2598 = vld [vmem:[%s2002 + $0x1290] sm:%s1995]
        %2599 = vst [vmem:[%s2003 + $0x1290] sm:%s1995] %v2598
        %v2600 = vld [vmem:[%s2002 + $0x12a0] sm:%s1995]
        %2601 = vst [vmem:[%s2003 + $0x12a0] sm:%s1995] %v2600
        %v2602 = vld [vmem:[%s2002 + $0x12b0] sm:%s1995]
        %2603 = vst [vmem:[%s2003 + $0x12b0] sm:%s1995] %v2602
        %v2604 = vld [vmem:[%s2002 + $0x12c0] sm:%s1995]
        %2605 = vst [vmem:[%s2003 + $0x12c0] sm:%s1995] %v2604
        %v2606 = vld [vmem:[%s2002 + $0x12d0] sm:%s1995]
        %2607 = vst [vmem:[%s2003 + $0x12d0] sm:%s1995] %v2606
        %v2608 = vld [vmem:[%s2002 + $0x12e0] sm:%s1995]
        %2609 = vst [vmem:[%s2003 + $0x12e0] sm:%s1995] %v2608
        %v2610 = vld [vmem:[%s2002 + $0x12f0] sm:%s1995]
        %2611 = vst [vmem:[%s2003 + $0x12f0] sm:%s1995] %v2610
        %v2612 = vld [vmem:[%s2002 + $0x1300] sm:%s1995]
        %2613 = vst [vmem:[%s2003 + $0x1300] sm:%s1995] %v2612
        %v2614 = vld [vmem:[%s2002 + $0x1310] sm:%s1995]
        %2615 = vst [vmem:[%s2003 + $0x1310] sm:%s1995] %v2614
        %v2616 = vld [vmem:[%s2002 + $0x1320] sm:%s1995]
        %2617 = vst [vmem:[%s2003 + $0x1320] sm:%s1995] %v2616
        %v2618 = vld [vmem:[%s2002 + $0x1330] sm:%s1995]
        %2619 = vst [vmem:[%s2003 + $0x1330] sm:%s1995] %v2618
        %v2620 = vld [vmem:[%s2002 + $0x1340] sm:%s1995]
        %2621 = vst [vmem:[%s2003 + $0x1340] sm:%s1995] %v2620
        %v2622 = vld [vmem:[%s2002 + $0x1350] sm:%s1995]
        %2623 = vst [vmem:[%s2003 + $0x1350] sm:%s1995] %v2622
        %v2624 = vld [vmem:[%s2002 + $0x1360] sm:%s1995]
        %2625 = vst [vmem:[%s2003 + $0x1360] sm:%s1995] %v2624
        %v2626 = vld [vmem:[%s2002 + $0x1370] sm:%s1995]
        %2627 = vst [vmem:[%s2003 + $0x1370] sm:%s1995] %v2626
        %v2628 = vld [vmem:[%s2002 + $0x1380] sm:%s1995]
        %2629 = vst [vmem:[%s2003 + $0x1380] sm:%s1995] %v2628
        %v2630 = vld [vmem:[%s2002 + $0x1390] sm:%s1995]
        %2631 = vst [vmem:[%s2003 + $0x1390] sm:%s1995] %v2630
        %v2632 = vld [vmem:[%s2002 + $0x13a0] sm:%s1995]
        %2633 = vst [vmem:[%s2003 + $0x13a0] sm:%s1995] %v2632
        %v2634 = vld [vmem:[%s2002 + $0x13b0] sm:%s1995]
        %2635 = vst [vmem:[%s2003 + $0x13b0] sm:%s1995] %v2634
        %v2636 = vld [vmem:[%s2002 + $0x13c0] sm:%s1995]
        %2637 = vst [vmem:[%s2003 + $0x13c0] sm:%s1995] %v2636
        %v2638 = vld [vmem:[%s2002 + $0x13d0] sm:%s1995]
        %2639 = vst [vmem:[%s2003 + $0x13d0] sm:%s1995] %v2638
        %v2640 = vld [vmem:[%s2002 + $0x13e0] sm:%s1995]
        %2641 = vst [vmem:[%s2003 + $0x13e0] sm:%s1995] %v2640
        %v2642 = vld [vmem:[%s2002 + $0x13f0] sm:%s1995]
        %2643 = vst [vmem:[%s2003 + $0x13f0] sm:%s1995] %v2642
        %v2644 = vld [vmem:[%s2002 + $0x1400] sm:%s1995]
        %2645 = vst [vmem:[%s2003 + $0x1400] sm:%s1995] %v2644
        %v2646 = vld [vmem:[%s2002 + $0x1410] sm:%s1995]
        %2647 = vst [vmem:[%s2003 + $0x1410] sm:%s1995] %v2646
        %v2648 = vld [vmem:[%s2002 + $0x1420] sm:%s1995]
        %2649 = vst [vmem:[%s2003 + $0x1420] sm:%s1995] %v2648
        %v2650 = vld [vmem:[%s2002 + $0x1430] sm:%s1995]
        %2651 = vst [vmem:[%s2003 + $0x1430] sm:%s1995] %v2650
        %v2652 = vld [vmem:[%s2002 + $0x1440] sm:%s1995]
        %2653 = vst [vmem:[%s2003 + $0x1440] sm:%s1995] %v2652
        %v2654 = vld [vmem:[%s2002 + $0x1450] sm:%s1995]
        %2655 = vst [vmem:[%s2003 + $0x1450] sm:%s1995] %v2654
        %v2656 = vld [vmem:[%s2002 + $0x1460] sm:%s1995]
        %2657 = vst [vmem:[%s2003 + $0x1460] sm:%s1995] %v2656
        %v2658 = vld [vmem:[%s2002 + $0x1470] sm:%s1995]
        %2659 = vst [vmem:[%s2003 + $0x1470] sm:%s1995] %v2658
        %v2660 = vld [vmem:[%s2002 + $0x1480] sm:%s1995]
        %2661 = vst [vmem:[%s2003 + $0x1480] sm:%s1995] %v2660
        %v2662 = vld [vmem:[%s2002 + $0x1490] sm:%s1995]
        %2663 = vst [vmem:[%s2003 + $0x1490] sm:%s1995] %v2662
        %v2664 = vld [vmem:[%s2002 + $0x14a0] sm:%s1995]
        %2665 = vst [vmem:[%s2003 + $0x14a0] sm:%s1995] %v2664
        %v2666 = vld [vmem:[%s2002 + $0x14b0] sm:%s1995]
        %2667 = vst [vmem:[%s2003 + $0x14b0] sm:%s1995] %v2666
        %v2668 = vld [vmem:[%s2002 + $0x14c0] sm:%s1995]
        %2669 = vst [vmem:[%s2003 + $0x14c0] sm:%s1995] %v2668
        %v2670 = vld [vmem:[%s2002 + $0x14d0] sm:%s1995]
        %2671 = vst [vmem:[%s2003 + $0x14d0] sm:%s1995] %v2670
        %v2672 = vld [vmem:[%s2002 + $0x14e0] sm:%s1995]
        %2673 = vst [vmem:[%s2003 + $0x14e0] sm:%s1995] %v2672
        %v2674 = vld [vmem:[%s2002 + $0x14f0] sm:%s1995]
        %2675 = vst [vmem:[%s2003 + $0x14f0] sm:%s1995] %v2674
        %v2676 = vld [vmem:[%s2002 + $0x1500] sm:%s1995]
        %2677 = vst [vmem:[%s2003 + $0x1500] sm:%s1995] %v2676
        %v2678 = vld [vmem:[%s2002 + $0x1510] sm:%s1995]
        %2679 = vst [vmem:[%s2003 + $0x1510] sm:%s1995] %v2678
        %v2680 = vld [vmem:[%s2002 + $0x1520] sm:%s1995]
        %2681 = vst [vmem:[%s2003 + $0x1520] sm:%s1995] %v2680
        %v2682 = vld [vmem:[%s2002 + $0x1530] sm:%s1995]
        %2683 = vst [vmem:[%s2003 + $0x1530] sm:%s1995] %v2682
        %v2684 = vld [vmem:[%s2002 + $0x1540] sm:%s1995]
        %2685 = vst [vmem:[%s2003 + $0x1540] sm:%s1995] %v2684
        %v2686 = vld [vmem:[%s2002 + $0x1550] sm:%s1995]
        %2687 = vst [vmem:[%s2003 + $0x1550] sm:%s1995] %v2686
        %v2688 = vld [vmem:[%s2002 + $0x1560] sm:%s1995]
        %2689 = vst [vmem:[%s2003 + $0x1560] sm:%s1995] %v2688
        %v2690 = vld [vmem:[%s2002 + $0x1570] sm:%s1995]
        %2691 = vst [vmem:[%s2003 + $0x1570] sm:%s1995] %v2690
        %v2692 = vld [vmem:[%s2002 + $0x1580] sm:%s1995]
        %2693 = vst [vmem:[%s2003 + $0x1580] sm:%s1995] %v2692
        %v2694 = vld [vmem:[%s2002 + $0x1590] sm:%s1995]
        %2695 = vst [vmem:[%s2003 + $0x1590] sm:%s1995] %v2694
        %v2696 = vld [vmem:[%s2002 + $0x15a0] sm:%s1995]
        %2697 = vst [vmem:[%s2003 + $0x15a0] sm:%s1995] %v2696
        %v2698 = vld [vmem:[%s2002 + $0x15b0] sm:%s1995]
        %2699 = vst [vmem:[%s2003 + $0x15b0] sm:%s1995] %v2698
        %v2700 = vld [vmem:[%s2002 + $0x15c0] sm:%s1995]
        %2701 = vst [vmem:[%s2003 + $0x15c0] sm:%s1995] %v2700
        %v2702 = vld [vmem:[%s2002 + $0x15d0] sm:%s1995]
        %2703 = vst [vmem:[%s2003 + $0x15d0] sm:%s1995] %v2702
        %v2704 = vld [vmem:[%s2002 + $0x15e0] sm:%s1995]
        %2705 = vst [vmem:[%s2003 + $0x15e0] sm:%s1995] %v2704
        %v2706 = vld [vmem:[%s2002 + $0x15f0] sm:%s1995]
        %2707 = vst [vmem:[%s2003 + $0x15f0] sm:%s1995] %v2706
        %v2708 = vld [vmem:[%s2002 + $0x1600] sm:%s1995]
        %2709 = vst [vmem:[%s2003 + $0x1600] sm:%s1995] %v2708
        %v2710 = vld [vmem:[%s2002 + $0x1610] sm:%s1995]
        %2711 = vst [vmem:[%s2003 + $0x1610] sm:%s1995] %v2710
        %v2712 = vld [vmem:[%s2002 + $0x1620] sm:%s1995]
        %2713 = vst [vmem:[%s2003 + $0x1620] sm:%s1995] %v2712
        %v2714 = vld [vmem:[%s2002 + $0x1630] sm:%s1995]
        %2715 = vst [vmem:[%s2003 + $0x1630] sm:%s1995] %v2714
        %v2716 = vld [vmem:[%s2002 + $0x1640] sm:%s1995]
        %2717 = vst [vmem:[%s2003 + $0x1640] sm:%s1995] %v2716
        %v2718 = vld [vmem:[%s2002 + $0x1650] sm:%s1995]
        %2719 = vst [vmem:[%s2003 + $0x1650] sm:%s1995] %v2718
        %v2720 = vld [vmem:[%s2002 + $0x1660] sm:%s1995]
        %2721 = vst [vmem:[%s2003 + $0x1660] sm:%s1995] %v2720
        %v2722 = vld [vmem:[%s2002 + $0x1670] sm:%s1995]
        %2723 = vst [vmem:[%s2003 + $0x1670] sm:%s1995] %v2722
        %v2724 = vld [vmem:[%s2002 + $0x1680] sm:%s1995]
        %2725 = vst [vmem:[%s2003 + $0x1680] sm:%s1995] %v2724
        %v2726 = vld [vmem:[%s2002 + $0x1690] sm:%s1995]
        %2727 = vst [vmem:[%s2003 + $0x1690] sm:%s1995] %v2726
        %v2728 = vld [vmem:[%s2002 + $0x16a0] sm:%s1995]
        %2729 = vst [vmem:[%s2003 + $0x16a0] sm:%s1995] %v2728
        %v2730 = vld [vmem:[%s2002 + $0x16b0] sm:%s1995]
        %2731 = vst [vmem:[%s2003 + $0x16b0] sm:%s1995] %v2730
        %v2732 = vld [vmem:[%s2002 + $0x16c0] sm:%s1995]
        %2733 = vst [vmem:[%s2003 + $0x16c0] sm:%s1995] %v2732
        %v2734 = vld [vmem:[%s2002 + $0x16d0] sm:%s1995]
        %2735 = vst [vmem:[%s2003 + $0x16d0] sm:%s1995] %v2734
        %v2736 = vld [vmem:[%s2002 + $0x16e0] sm:%s1995]
        %2737 = vst [vmem:[%s2003 + $0x16e0] sm:%s1995] %v2736
        %v2738 = vld [vmem:[%s2002 + $0x16f0] sm:%s1995]
        %2739 = vst [vmem:[%s2003 + $0x16f0] sm:%s1995] %v2738
        %v2740 = vld [vmem:[%s2002 + $0x1700] sm:%s1995]
        %2741 = vst [vmem:[%s2003 + $0x1700] sm:%s1995] %v2740
        %v2742 = vld [vmem:[%s2002 + $0x1710] sm:%s1995]
        %2743 = vst [vmem:[%s2003 + $0x1710] sm:%s1995] %v2742
        %v2744 = vld [vmem:[%s2002 + $0x1720] sm:%s1995]
        %2745 = vst [vmem:[%s2003 + $0x1720] sm:%s1995] %v2744
        %v2746 = vld [vmem:[%s2002 + $0x1730] sm:%s1995]
        %2747 = vst [vmem:[%s2003 + $0x1730] sm:%s1995] %v2746
        %v2748 = vld [vmem:[%s2002 + $0x1740] sm:%s1995]
        %2749 = vst [vmem:[%s2003 + $0x1740] sm:%s1995] %v2748
        %v2750 = vld [vmem:[%s2002 + $0x1750] sm:%s1995]
        %2751 = vst [vmem:[%s2003 + $0x1750] sm:%s1995] %v2750
        %v2752 = vld [vmem:[%s2002 + $0x1760] sm:%s1995]
        %2753 = vst [vmem:[%s2003 + $0x1760] sm:%s1995] %v2752
        %v2754 = vld [vmem:[%s2002 + $0x1770] sm:%s1995]
        %2755 = vst [vmem:[%s2003 + $0x1770] sm:%s1995] %v2754
        %v2756 = vld [vmem:[%s2002 + $0x1780] sm:%s1995]
        %2757 = vst [vmem:[%s2003 + $0x1780] sm:%s1995] %v2756
        %v2758 = vld [vmem:[%s2002 + $0x1790] sm:%s1995]
        %2759 = vst [vmem:[%s2003 + $0x1790] sm:%s1995] %v2758
        %v2760 = vld [vmem:[%s2002 + $0x17a0] sm:%s1995]
        %2761 = vst [vmem:[%s2003 + $0x17a0] sm:%s1995] %v2760
        %v2762 = vld [vmem:[%s2002 + $0x17b0] sm:%s1995]
        %2763 = vst [vmem:[%s2003 + $0x17b0] sm:%s1995] %v2762
        %v2764 = vld [vmem:[%s2002 + $0x17c0] sm:%s1995]
        %2765 = vst [vmem:[%s2003 + $0x17c0] sm:%s1995] %v2764
        %v2766 = vld [vmem:[%s2002 + $0x17d0] sm:%s1995]
        %2767 = vst [vmem:[%s2003 + $0x17d0] sm:%s1995] %v2766
        %v2768 = vld [vmem:[%s2002 + $0x17e0] sm:%s1995]
        %2769 = vst [vmem:[%s2003 + $0x17e0] sm:%s1995] %v2768
        %v2770 = vld [vmem:[%s2002 + $0x17f0] sm:%s1995]
        %2771 = vst [vmem:[%s2003 + $0x17f0] sm:%s1995] %v2770
        %v2772 = vld [vmem:[%s2002 + $0x1800] sm:%s1995]
        %2773 = vst [vmem:[%s2003 + $0x1800] sm:%s1995] %v2772
        %v2774 = vld [vmem:[%s2002 + $0x1810] sm:%s1995]
        %2775 = vst [vmem:[%s2003 + $0x1810] sm:%s1995] %v2774
        %v2776 = vld [vmem:[%s2002 + $0x1820] sm:%s1995]
        %2777 = vst [vmem:[%s2003 + $0x1820] sm:%s1995] %v2776
        %v2778 = vld [vmem:[%s2002 + $0x1830] sm:%s1995]
        %2779 = vst [vmem:[%s2003 + $0x1830] sm:%s1995] %v2778
        %v2780 = vld [vmem:[%s2002 + $0x1840] sm:%s1995]
        %2781 = vst [vmem:[%s2003 + $0x1840] sm:%s1995] %v2780
        %v2782 = vld [vmem:[%s2002 + $0x1850] sm:%s1995]
        %2783 = vst [vmem:[%s2003 + $0x1850] sm:%s1995] %v2782
        %v2784 = vld [vmem:[%s2002 + $0x1860] sm:%s1995]
        %2785 = vst [vmem:[%s2003 + $0x1860] sm:%s1995] %v2784
        %v2786 = vld [vmem:[%s2002 + $0x1870] sm:%s1995]
        %2787 = vst [vmem:[%s2003 + $0x1870] sm:%s1995] %v2786
        %v2788 = vld [vmem:[%s2002 + $0x1880] sm:%s1995]
        %2789 = vst [vmem:[%s2003 + $0x1880] sm:%s1995] %v2788
        %v2790 = vld [vmem:[%s2002 + $0x1890] sm:%s1995]
        %2791 = vst [vmem:[%s2003 + $0x1890] sm:%s1995] %v2790
        %v2792 = vld [vmem:[%s2002 + $0x18a0] sm:%s1995]
        %2793 = vst [vmem:[%s2003 + $0x18a0] sm:%s1995] %v2792
        %v2794 = vld [vmem:[%s2002 + $0x18b0] sm:%s1995]
        %2795 = vst [vmem:[%s2003 + $0x18b0] sm:%s1995] %v2794
        %v2796 = vld [vmem:[%s2002 + $0x18c0] sm:%s1995]
        %2797 = vst [vmem:[%s2003 + $0x18c0] sm:%s1995] %v2796
        %v2798 = vld [vmem:[%s2002 + $0x18d0] sm:%s1995]
        %2799 = vst [vmem:[%s2003 + $0x18d0] sm:%s1995] %v2798
        %v2800 = vld [vmem:[%s2002 + $0x18e0] sm:%s1995]
        %2801 = vst [vmem:[%s2003 + $0x18e0] sm:%s1995] %v2800
        %v2802 = vld [vmem:[%s2002 + $0x18f0] sm:%s1995]
        %2803 = vst [vmem:[%s2003 + $0x18f0] sm:%s1995] %v2802
        %v2804 = vld [vmem:[%s2002 + $0x1900] sm:%s1995]
        %2805 = vst [vmem:[%s2003 + $0x1900] sm:%s1995] %v2804
        %v2806 = vld [vmem:[%s2002 + $0x1910] sm:%s1995]
        %2807 = vst [vmem:[%s2003 + $0x1910] sm:%s1995] %v2806
        %v2808 = vld [vmem:[%s2002 + $0x1920] sm:%s1995]
        %2809 = vst [vmem:[%s2003 + $0x1920] sm:%s1995] %v2808
        %v2810 = vld [vmem:[%s2002 + $0x1930] sm:%s1995]
        %2811 = vst [vmem:[%s2003 + $0x1930] sm:%s1995] %v2810
        %v2812 = vld [vmem:[%s2002 + $0x1940] sm:%s1995]
        %2813 = vst [vmem:[%s2003 + $0x1940] sm:%s1995] %v2812
        %v2814 = vld [vmem:[%s2002 + $0x1950] sm:%s1995]
        %2815 = vst [vmem:[%s2003 + $0x1950] sm:%s1995] %v2814
        %v2816 = vld [vmem:[%s2002 + $0x1960] sm:%s1995]
        %2817 = vst [vmem:[%s2003 + $0x1960] sm:%s1995] %v2816
        %v2818 = vld [vmem:[%s2002 + $0x1970] sm:%s1995]
        %2819 = vst [vmem:[%s2003 + $0x1970] sm:%s1995] %v2818
        %v2820 = vld [vmem:[%s2002 + $0x1980] sm:%s1995]
        %2821 = vst [vmem:[%s2003 + $0x1980] sm:%s1995] %v2820
        %v2822 = vld [vmem:[%s2002 + $0x1990] sm:%s1995]
        %2823 = vst [vmem:[%s2003 + $0x1990] sm:%s1995] %v2822
        %v2824 = vld [vmem:[%s2002 + $0x19a0] sm:%s1995]
        %2825 = vst [vmem:[%s2003 + $0x19a0] sm:%s1995] %v2824
        %v2826 = vld [vmem:[%s2002 + $0x19b0] sm:%s1995]
        %2827 = vst [vmem:[%s2003 + $0x19b0] sm:%s1995] %v2826
        %v2828 = vld [vmem:[%s2002 + $0x19c0] sm:%s1995]
        %2829 = vst [vmem:[%s2003 + $0x19c0] sm:%s1995] %v2828
        %v2830 = vld [vmem:[%s2002 + $0x19d0] sm:%s1995]
        %2831 = vst [vmem:[%s2003 + $0x19d0] sm:%s1995] %v2830
        %v2832 = vld [vmem:[%s2002 + $0x19e0] sm:%s1995]
        %2833 = vst [vmem:[%s2003 + $0x19e0] sm:%s1995] %v2832
        %v2834 = vld [vmem:[%s2002 + $0x19f0] sm:%s1995]
        %2835 = vst [vmem:[%s2003 + $0x19f0] sm:%s1995] %v2834
        %v2836 = vld [vmem:[%s2002 + $0x1a00] sm:%s1995]
        %2837 = vst [vmem:[%s2003 + $0x1a00] sm:%s1995] %v2836
        %v2838 = vld [vmem:[%s2002 + $0x1a10] sm:%s1995]
        %2839 = vst [vmem:[%s2003 + $0x1a10] sm:%s1995] %v2838
        %v2840 = vld [vmem:[%s2002 + $0x1a20] sm:%s1995]
        %2841 = vst [vmem:[%s2003 + $0x1a20] sm:%s1995] %v2840
        %v2842 = vld [vmem:[%s2002 + $0x1a30] sm:%s1995]
        %2843 = vst [vmem:[%s2003 + $0x1a30] sm:%s1995] %v2842
        %v2844 = vld [vmem:[%s2002 + $0x1a40] sm:%s1995]
        %2845 = vst [vmem:[%s2003 + $0x1a40] sm:%s1995] %v2844
        %v2846 = vld [vmem:[%s2002 + $0x1a50] sm:%s1995]
        %2847 = vst [vmem:[%s2003 + $0x1a50] sm:%s1995] %v2846
        %v2848 = vld [vmem:[%s2002 + $0x1a60] sm:%s1995]
        %2849 = vst [vmem:[%s2003 + $0x1a60] sm:%s1995] %v2848
        %v2850 = vld [vmem:[%s2002 + $0x1a70] sm:%s1995]
        %2851 = vst [vmem:[%s2003 + $0x1a70] sm:%s1995] %v2850
        %v2852 = vld [vmem:[%s2002 + $0x1a80] sm:%s1995]
        %2853 = vst [vmem:[%s2003 + $0x1a80] sm:%s1995] %v2852
        %v2854 = vld [vmem:[%s2002 + $0x1a90] sm:%s1995]
        %2855 = vst [vmem:[%s2003 + $0x1a90] sm:%s1995] %v2854
        %v2856 = vld [vmem:[%s2002 + $0x1aa0] sm:%s1995]
        %2857 = vst [vmem:[%s2003 + $0x1aa0] sm:%s1995] %v2856
        %v2858 = vld [vmem:[%s2002 + $0x1ab0] sm:%s1995]
        %2859 = vst [vmem:[%s2003 + $0x1ab0] sm:%s1995] %v2858
        %v2860 = vld [vmem:[%s2002 + $0x1ac0] sm:%s1995]
        %2861 = vst [vmem:[%s2003 + $0x1ac0] sm:%s1995] %v2860
        %v2862 = vld [vmem:[%s2002 + $0x1ad0] sm:%s1995]
        %2863 = vst [vmem:[%s2003 + $0x1ad0] sm:%s1995] %v2862
        %v2864 = vld [vmem:[%s2002 + $0x1ae0] sm:%s1995]
        %2865 = vst [vmem:[%s2003 + $0x1ae0] sm:%s1995] %v2864
        %v2866 = vld [vmem:[%s2002 + $0x1af0] sm:%s1995]
        %2867 = vst [vmem:[%s2003 + $0x1af0] sm:%s1995] %v2866
        %v2868 = vld [vmem:[%s2002 + $0x1b00] sm:%s1995]
        %2869 = vst [vmem:[%s2003 + $0x1b00] sm:%s1995] %v2868
        %v2870 = vld [vmem:[%s2002 + $0x1b10] sm:%s1995]
        %2871 = vst [vmem:[%s2003 + $0x1b10] sm:%s1995] %v2870
        %v2872 = vld [vmem:[%s2002 + $0x1b20] sm:%s1995]
        %2873 = vst [vmem:[%s2003 + $0x1b20] sm:%s1995] %v2872
        %v2874 = vld [vmem:[%s2002 + $0x1b30] sm:%s1995]
        %2875 = vst [vmem:[%s2003 + $0x1b30] sm:%s1995] %v2874
        %v2876 = vld [vmem:[%s2002 + $0x1b40] sm:%s1995]
        %2877 = vst [vmem:[%s2003 + $0x1b40] sm:%s1995] %v2876
        %v2878 = vld [vmem:[%s2002 + $0x1b50] sm:%s1995]
        %2879 = vst [vmem:[%s2003 + $0x1b50] sm:%s1995] %v2878
        %v2880 = vld [vmem:[%s2002 + $0x1b60] sm:%s1995]
        %2881 = vst [vmem:[%s2003 + $0x1b60] sm:%s1995] %v2880
        %v2882 = vld [vmem:[%s2002 + $0x1b70] sm:%s1995]
        %2883 = vst [vmem:[%s2003 + $0x1b70] sm:%s1995] %v2882
        %v2884 = vld [vmem:[%s2002 + $0x1b80] sm:%s1995]
        %2885 = vst [vmem:[%s2003 + $0x1b80] sm:%s1995] %v2884
        %v2886 = vld [vmem:[%s2002 + $0x1b90] sm:%s1995]
        %2887 = vst [vmem:[%s2003 + $0x1b90] sm:%s1995] %v2886
        %v2888 = vld [vmem:[%s2002 + $0x1ba0] sm:%s1995]
        %2889 = vst [vmem:[%s2003 + $0x1ba0] sm:%s1995] %v2888
        %v2890 = vld [vmem:[%s2002 + $0x1bb0] sm:%s1995]
        %2891 = vst [vmem:[%s2003 + $0x1bb0] sm:%s1995] %v2890
        %v2892 = vld [vmem:[%s2002 + $0x1bc0] sm:%s1995]
        %2893 = vst [vmem:[%s2003 + $0x1bc0] sm:%s1995] %v2892
        %v2894 = vld [vmem:[%s2002 + $0x1bd0] sm:%s1995]
        %2895 = vst [vmem:[%s2003 + $0x1bd0] sm:%s1995] %v2894
        %v2896 = vld [vmem:[%s2002 + $0x1be0] sm:%s1995]
        %2897 = vst [vmem:[%s2003 + $0x1be0] sm:%s1995] %v2896
        %v2898 = vld [vmem:[%s2002 + $0x1bf0] sm:%s1995]
        %2899 = vst [vmem:[%s2003 + $0x1bf0] sm:%s1995] %v2898
        %v2900 = vld [vmem:[%s2002 + $0x1c00] sm:%s1995]
        %2901 = vst [vmem:[%s2003 + $0x1c00] sm:%s1995] %v2900
        %v2902 = vld [vmem:[%s2002 + $0x1c10] sm:%s1995]
        %2903 = vst [vmem:[%s2003 + $0x1c10] sm:%s1995] %v2902
        %v2904 = vld [vmem:[%s2002 + $0x1c20] sm:%s1995]
        %2905 = vst [vmem:[%s2003 + $0x1c20] sm:%s1995] %v2904
        %v2906 = vld [vmem:[%s2002 + $0x1c30] sm:%s1995]
        %2907 = vst [vmem:[%s2003 + $0x1c30] sm:%s1995] %v2906
        %v2908 = vld [vmem:[%s2002 + $0x1c40] sm:%s1995]
        %2909 = vst [vmem:[%s2003 + $0x1c40] sm:%s1995] %v2908
        %v2910 = vld [vmem:[%s2002 + $0x1c50] sm:%s1995]
        %2911 = vst [vmem:[%s2003 + $0x1c50] sm:%s1995] %v2910
        %v2912 = vld [vmem:[%s2002 + $0x1c60] sm:%s1995]
        %2913 = vst [vmem:[%s2003 + $0x1c60] sm:%s1995] %v2912
        %v2914 = vld [vmem:[%s2002 + $0x1c70] sm:%s1995]
        %2915 = vst [vmem:[%s2003 + $0x1c70] sm:%s1995] %v2914
        %v2916 = vld [vmem:[%s2002 + $0x1c80] sm:%s1995]
        %2917 = vst [vmem:[%s2003 + $0x1c80] sm:%s1995] %v2916
        %v2918 = vld [vmem:[%s2002 + $0x1c90] sm:%s1995]
        %2919 = vst [vmem:[%s2003 + $0x1c90] sm:%s1995] %v2918
        %v2920 = vld [vmem:[%s2002 + $0x1ca0] sm:%s1995]
        %2921 = vst [vmem:[%s2003 + $0x1ca0] sm:%s1995] %v2920
        %v2922 = vld [vmem:[%s2002 + $0x1cb0] sm:%s1995]
        %2923 = vst [vmem:[%s2003 + $0x1cb0] sm:%s1995] %v2922
        %v2924 = vld [vmem:[%s2002 + $0x1cc0] sm:%s1995]
        %2925 = vst [vmem:[%s2003 + $0x1cc0] sm:%s1995] %v2924
        %v2926 = vld [vmem:[%s2002 + $0x1cd0] sm:%s1995]
        %2927 = vst [vmem:[%s2003 + $0x1cd0] sm:%s1995] %v2926
        %v2928 = vld [vmem:[%s2002 + $0x1ce0] sm:%s1995]
        %2929 = vst [vmem:[%s2003 + $0x1ce0] sm:%s1995] %v2928
        %v2930 = vld [vmem:[%s2002 + $0x1cf0] sm:%s1995]
        %2931 = vst [vmem:[%s2003 + $0x1cf0] sm:%s1995] %v2930
        %v2932 = vld [vmem:[%s2002 + $0x1d00] sm:%s1995]
        %2933 = vst [vmem:[%s2003 + $0x1d00] sm:%s1995] %v2932
        %v2934 = vld [vmem:[%s2002 + $0x1d10] sm:%s1995]
        %2935 = vst [vmem:[%s2003 + $0x1d10] sm:%s1995] %v2934
        %v2936 = vld [vmem:[%s2002 + $0x1d20] sm:%s1995]
        %2937 = vst [vmem:[%s2003 + $0x1d20] sm:%s1995] %v2936
        %v2938 = vld [vmem:[%s2002 + $0x1d30] sm:%s1995]
        %2939 = vst [vmem:[%s2003 + $0x1d30] sm:%s1995] %v2938
        %v2940 = vld [vmem:[%s2002 + $0x1d40] sm:%s1995]
        %2941 = vst [vmem:[%s2003 + $0x1d40] sm:%s1995] %v2940
        %v2942 = vld [vmem:[%s2002 + $0x1d50] sm:%s1995]
        %2943 = vst [vmem:[%s2003 + $0x1d50] sm:%s1995] %v2942
        %v2944 = vld [vmem:[%s2002 + $0x1d60] sm:%s1995]
        %2945 = vst [vmem:[%s2003 + $0x1d60] sm:%s1995] %v2944
        %v2946 = vld [vmem:[%s2002 + $0x1d70] sm:%s1995]
        %2947 = vst [vmem:[%s2003 + $0x1d70] sm:%s1995] %v2946
        %v2948 = vld [vmem:[%s2002 + $0x1d80] sm:%s1995]
        %2949 = vst [vmem:[%s2003 + $0x1d80] sm:%s1995] %v2948
        %v2950 = vld [vmem:[%s2002 + $0x1d90] sm:%s1995]
        %2951 = vst [vmem:[%s2003 + $0x1d90] sm:%s1995] %v2950
        %v2952 = vld [vmem:[%s2002 + $0x1da0] sm:%s1995]
        %2953 = vst [vmem:[%s2003 + $0x1da0] sm:%s1995] %v2952
        %v2954 = vld [vmem:[%s2002 + $0x1db0] sm:%s1995]
        %2955 = vst [vmem:[%s2003 + $0x1db0] sm:%s1995] %v2954
        %v2956 = vld [vmem:[%s2002 + $0x1dc0] sm:%s1995]
        %2957 = vst [vmem:[%s2003 + $0x1dc0] sm:%s1995] %v2956
        %v2958 = vld [vmem:[%s2002 + $0x1dd0] sm:%s1995]
        %2959 = vst [vmem:[%s2003 + $0x1dd0] sm:%s1995] %v2958
        %v2960 = vld [vmem:[%s2002 + $0x1de0] sm:%s1995]
        %2961 = vst [vmem:[%s2003 + $0x1de0] sm:%s1995] %v2960
        %v2962 = vld [vmem:[%s2002 + $0x1df0] sm:%s1995]
        %2963 = vst [vmem:[%s2003 + $0x1df0] sm:%s1995] %v2962
        %v2964 = vld [vmem:[%s2002 + $0x1e00] sm:%s1995]
        %2965 = vst [vmem:[%s2003 + $0x1e00] sm:%s1995] %v2964
        %v2966 = vld [vmem:[%s2002 + $0x1e10] sm:%s1995]
        %2967 = vst [vmem:[%s2003 + $0x1e10] sm:%s1995] %v2966
        %v2968 = vld [vmem:[%s2002 + $0x1e20] sm:%s1995]
        %2969 = vst [vmem:[%s2003 + $0x1e20] sm:%s1995] %v2968
        %v2970 = vld [vmem:[%s2002 + $0x1e30] sm:%s1995]
        %2971 = vst [vmem:[%s2003 + $0x1e30] sm:%s1995] %v2970
        %v2972 = vld [vmem:[%s2002 + $0x1e40] sm:%s1995]
        %2973 = vst [vmem:[%s2003 + $0x1e40] sm:%s1995] %v2972
        %v2974 = vld [vmem:[%s2002 + $0x1e50] sm:%s1995]
        %2975 = vst [vmem:[%s2003 + $0x1e50] sm:%s1995] %v2974
        %v2976 = vld [vmem:[%s2002 + $0x1e60] sm:%s1995]
        %2977 = vst [vmem:[%s2003 + $0x1e60] sm:%s1995] %v2976
        %v2978 = vld [vmem:[%s2002 + $0x1e70] sm:%s1995]
        %2979 = vst [vmem:[%s2003 + $0x1e70] sm:%s1995] %v2978
      $region32: #{tpu_custom_call.1} parent=19 // loop_footer
        %s2001 = sadd.s32 1, %s1997
      $region33: #{tpu_custom_call.1} parent=19 // loop_footer_branch
        %1996 = sbr.rel target = $region29
      $region34: #{tpu_custom_call.1} parent=19 // loop_exit
        _
    $region20: #{tpu_custom_call.1} parent=4 // pred_fallthru
      _
  $region5: #{tpu_custom_call.1} parent=0 // pred_fallthru
    _
  // Predicated region
  $region6: #{tpu_custom_call.1} parent=0 // pred_check
    %p11 = pneg %p7
  $region7: #{tpu_custom_call.1} parent=0 // pred_check_branch
    %13 = sbr.rel (%p11) target = $region9
  $region8: #{tpu_custom_call.1} parent=0 // pred_region
    %s14 = sshll.u32 1, 14
    %s15 = ssub.s32 %s14, 1
    loop: start=0, step=1, limit=1
    $region10: #{tpu_custom_call.1} parent=8 // loop_pre_header
      _
    $region11: #{tpu_custom_call.1} parent=8 // loop_header
      %s17 = sphi 0, %s21
      %p18 = scmp.ge.s32.totalorder %s17, 1
      %s22 = sphi %s0, %s0
      %s23 = sphi %s1, %s1
    $region12: #{tpu_custom_call.1} parent=8 // loop_header_branch
      %20 = sbr.rel (%p18) target = $region16
    $region13: #{tpu_custom_call.1} parent=8 // loop_body
      %v24 = vld [vmem:[%s22] sm:%s15]
      %25 = vst [vmem:[%s23] sm:%s15] %v24
      %v26 = vld [vmem:[%s22 + $0x10] sm:%s15]
      %27 = vst [vmem:[%s23 + $0x10] sm:%s15] %v26
      %v28 = vld [vmem:[%s22 + $0x20] sm:%s15]
      %29 = vst [vmem:[%s23 + $0x20] sm:%s15] %v28
      %v30 = vld [vmem:[%s22 + $0x30] sm:%s15]
      %31 = vst [vmem:[%s23 + $0x30] sm:%s15] %v30
      %v32 = vld [vmem:[%s22 + $0x40] sm:%s15]
      %33 = vst [vmem:[%s23 + $0x40] sm:%s15] %v32
      %v34 = vld [vmem:[%s22 + $0x50] sm:%s15]
      %35 = vst [vmem:[%s23 + $0x50] sm:%s15] %v34
      %v36 = vld [vmem:[%s22 + $0x60] sm:%s15]
      %37 = vst [vmem:[%s23 + $0x60] sm:%s15] %v36
      %v38 = vld [vmem:[%s22 + $0x70] sm:%s15]
      %39 = vst [vmem:[%s23 + $0x70] sm:%s15] %v38
      %v40 = vld [vmem:[%s22 + $0x80] sm:%s15]
      %41 = vst [vmem:[%s23 + $0x80] sm:%s15] %v40
      %v42 = vld [vmem:[%s22 + $0x90] sm:%s15]
      %43 = vst [vmem:[%s23 + $0x90] sm:%s15] %v42
      %v44 = vld [vmem:[%s22 + $0xa0] sm:%s15]
      %45 = vst [vmem:[%s23 + $0xa0] sm:%s15] %v44
      %v46 = vld [vmem:[%s22 + $0xb0] sm:%s15]
      %47 = vst [vmem:[%s23 + $0xb0] sm:%s15] %v46
      %v48 = vld [vmem:[%s22 + $0xc0] sm:%s15]
      %49 = vst [vmem:[%s23 + $0xc0] sm:%s15] %v48
      %v50 = vld [vmem:[%s22 + $0xd0] sm:%s15]
      %51 = vst [vmem:[%s23 + $0xd0] sm:%s15] %v50
      %v52 = vld [vmem:[%s22 + $0xe0] sm:%s15]
      %53 = vst [vmem:[%s23 + $0xe0] sm:%s15] %v52
      %v54 = vld [vmem:[%s22 + $0xf0] sm:%s15]
      %55 = vst [vmem:[%s23 + $0xf0] sm:%s15] %v54
      %v56 = vld [vmem:[%s22 + $0x100] sm:%s15]
      %57 = vst [vmem:[%s23 + $0x100] sm:%s15] %v56
      %v58 = vld [vmem:[%s22 + $0x110] sm:%s15]
      %59 = vst [vmem:[%s23 + $0x110] sm:%s15] %v58
      %v60 = vld [vmem:[%s22 + $0x120] sm:%s15]
      %61 = vst [vmem:[%s23 + $0x120] sm:%s15] %v60
      %v62 = vld [vmem:[%s22 + $0x130] sm:%s15]
      %63 = vst [vmem:[%s23 + $0x130] sm:%s15] %v62
      %v64 = vld [vmem:[%s22 + $0x140] sm:%s15]
      %65 = vst [vmem:[%s23 + $0x140] sm:%s15] %v64
      %v66 = vld [vmem:[%s22 + $0x150] sm:%s15]
      %67 = vst [vmem:[%s23 + $0x150] sm:%s15] %v66
      %v68 = vld [vmem:[%s22 + $0x160] sm:%s15]
      %69 = vst [vmem:[%s23 + $0x160] sm:%s15] %v68
      %v70 = vld [vmem:[%s22 + $0x170] sm:%s15]
      %71 = vst [vmem:[%s23 + $0x170] sm:%s15] %v70
      %v72 = vld [vmem:[%s22 + $0x180] sm:%s15]
      %73 = vst [vmem:[%s23 + $0x180] sm:%s15] %v72
      %v74 = vld [vmem:[%s22 + $0x190] sm:%s15]
      %75 = vst [vmem:[%s23 + $0x190] sm:%s15] %v74
      %v76 = vld [vmem:[%s22 + $0x1a0] sm:%s15]
      %77 = vst [vmem:[%s23 + $0x1a0] sm:%s15] %v76
      %v78 = vld [vmem:[%s22 + $0x1b0] sm:%s15]
      %79 = vst [vmem:[%s23 + $0x1b0] sm:%s15] %v78
      %v80 = vld [vmem:[%s22 + $0x1c0] sm:%s15]
      %81 = vst [vmem:[%s23 + $0x1c0] sm:%s15] %v80
      %v82 = vld [vmem:[%s22 + $0x1d0] sm:%s15]
      %83 = vst [vmem:[%s23 + $0x1d0] sm:%s15] %v82
      %v84 = vld [vmem:[%s22 + $0x1e0] sm:%s15]
      %85 = vst [vmem:[%s23 + $0x1e0] sm:%s15] %v84
      %v86 = vld [vmem:[%s22 + $0x1f0] sm:%s15]
      %87 = vst [vmem:[%s23 + $0x1f0] sm:%s15] %v86
      %v88 = vld [vmem:[%s22 + $0x200] sm:%s15]
      %89 = vst [vmem:[%s23 + $0x200] sm:%s15] %v88
      %v90 = vld [vmem:[%s22 + $0x210] sm:%s15]
      %91 = vst [vmem:[%s23 + $0x210] sm:%s15] %v90
      %v92 = vld [vmem:[%s22 + $0x220] sm:%s15]
      %93 = vst [vmem:[%s23 + $0x220] sm:%s15] %v92
      %v94 = vld [vmem:[%s22 + $0x230] sm:%s15]
      %95 = vst [vmem:[%s23 + $0x230] sm:%s15] %v94
      %v96 = vld [vmem:[%s22 + $0x240] sm:%s15]
      %97 = vst [vmem:[%s23 + $0x240] sm:%s15] %v96
      %v98 = vld [vmem:[%s22 + $0x250] sm:%s15]
      %99 = vst [vmem:[%s23 + $0x250] sm:%s15] %v98
      %v100 = vld [vmem:[%s22 + $0x260] sm:%s15]
      %101 = vst [vmem:[%s23 + $0x260] sm:%s15] %v100
      %v102 = vld [vmem:[%s22 + $0x270] sm:%s15]
      %103 = vst [vmem:[%s23 + $0x270] sm:%s15] %v102
      %v104 = vld [vmem:[%s22 + $0x280] sm:%s15]
      %105 = vst [vmem:[%s23 + $0x280] sm:%s15] %v104
      %v106 = vld [vmem:[%s22 + $0x290] sm:%s15]
      %107 = vst [vmem:[%s23 + $0x290] sm:%s15] %v106
      %v108 = vld [vmem:[%s22 + $0x2a0] sm:%s15]
      %109 = vst [vmem:[%s23 + $0x2a0] sm:%s15] %v108
      %v110 = vld [vmem:[%s22 + $0x2b0] sm:%s15]
      %111 = vst [vmem:[%s23 + $0x2b0] sm:%s15] %v110
      %v112 = vld [vmem:[%s22 + $0x2c0] sm:%s15]
      %113 = vst [vmem:[%s23 + $0x2c0] sm:%s15] %v112
      %v114 = vld [vmem:[%s22 + $0x2d0] sm:%s15]
      %115 = vst [vmem:[%s23 + $0x2d0] sm:%s15] %v114
      %v116 = vld [vmem:[%s22 + $0x2e0] sm:%s15]
      %117 = vst [vmem:[%s23 + $0x2e0] sm:%s15] %v116
      %v118 = vld [vmem:[%s22 + $0x2f0] sm:%s15]
      %119 = vst [vmem:[%s23 + $0x2f0] sm:%s15] %v118
      %v120 = vld [vmem:[%s22 + $0x300] sm:%s15]
      %121 = vst [vmem:[%s23 + $0x300] sm:%s15] %v120
      %v122 = vld [vmem:[%s22 + $0x310] sm:%s15]
      %123 = vst [vmem:[%s23 + $0x310] sm:%s15] %v122
      %v124 = vld [vmem:[%s22 + $0x320] sm:%s15]
      %125 = vst [vmem:[%s23 + $0x320] sm:%s15] %v124
      %v126 = vld [vmem:[%s22 + $0x330] sm:%s15]
      %127 = vst [vmem:[%s23 + $0x330] sm:%s15] %v126
      %v128 = vld [vmem:[%s22 + $0x340] sm:%s15]
      %129 = vst [vmem:[%s23 + $0x340] sm:%s15] %v128
      %v130 = vld [vmem:[%s22 + $0x350] sm:%s15]
      %131 = vst [vmem:[%s23 + $0x350] sm:%s15] %v130
      %v132 = vld [vmem:[%s22 + $0x360] sm:%s15]
      %133 = vst [vmem:[%s23 + $0x360] sm:%s15] %v132
      %v134 = vld [vmem:[%s22 + $0x370] sm:%s15]
      %135 = vst [vmem:[%s23 + $0x370] sm:%s15] %v134
      %v136 = vld [vmem:[%s22 + $0x380] sm:%s15]
      %137 = vst [vmem:[%s23 + $0x380] sm:%s15] %v136
      %v138 = vld [vmem:[%s22 + $0x390] sm:%s15]
      %139 = vst [vmem:[%s23 + $0x390] sm:%s15] %v138
      %v140 = vld [vmem:[%s22 + $0x3a0] sm:%s15]
      %141 = vst [vmem:[%s23 + $0x3a0] sm:%s15] %v140
      %v142 = vld [vmem:[%s22 + $0x3b0] sm:%s15]
      %143 = vst [vmem:[%s23 + $0x3b0] sm:%s15] %v142
      %v144 = vld [vmem:[%s22 + $0x3c0] sm:%s15]
      %145 = vst [vmem:[%s23 + $0x3c0] sm:%s15] %v144
      %v146 = vld [vmem:[%s22 + $0x3d0] sm:%s15]
      %147 = vst [vmem:[%s23 + $0x3d0] sm:%s15] %v146
      %v148 = vld [vmem:[%s22 + $0x3e0] sm:%s15]
      %149 = vst [vmem:[%s23 + $0x3e0] sm:%s15] %v148
      %v150 = vld [vmem:[%s22 + $0x3f0] sm:%s15]
      %151 = vst [vmem:[%s23 + $0x3f0] sm:%s15] %v150
      %v152 = vld [vmem:[%s22 + $0x400] sm:%s15]
      %153 = vst [vmem:[%s23 + $0x400] sm:%s15] %v152
      %v154 = vld [vmem:[%s22 + $0x410] sm:%s15]
      %155 = vst [vmem:[%s23 + $0x410] sm:%s15] %v154
      %v156 = vld [vmem:[%s22 + $0x420] sm:%s15]
      %157 = vst [vmem:[%s23 + $0x420] sm:%s15] %v156
      %v158 = vld [vmem:[%s22 + $0x430] sm:%s15]
      %159 = vst [vmem:[%s23 + $0x430] sm:%s15] %v158
      %v160 = vld [vmem:[%s22 + $0x440] sm:%s15]
      %161 = vst [vmem:[%s23 + $0x440] sm:%s15] %v160
      %v162 = vld [vmem:[%s22 + $0x450] sm:%s15]
      %163 = vst [vmem:[%s23 + $0x450] sm:%s15] %v162
      %v164 = vld [vmem:[%s22 + $0x460] sm:%s15]
      %165 = vst [vmem:[%s23 + $0x460] sm:%s15] %v164
      %v166 = vld [vmem:[%s22 + $0x470] sm:%s15]
      %167 = vst [vmem:[%s23 + $0x470] sm:%s15] %v166
      %v168 = vld [vmem:[%s22 + $0x480] sm:%s15]
      %169 = vst [vmem:[%s23 + $0x480] sm:%s15] %v168
      %v170 = vld [vmem:[%s22 + $0x490] sm:%s15]
      %171 = vst [vmem:[%s23 + $0x490] sm:%s15] %v170
      %v172 = vld [vmem:[%s22 + $0x4a0] sm:%s15]
      %173 = vst [vmem:[%s23 + $0x4a0] sm:%s15] %v172
      %v174 = vld [vmem:[%s22 + $0x4b0] sm:%s15]
      %175 = vst [vmem:[%s23 + $0x4b0] sm:%s15] %v174
      %v176 = vld [vmem:[%s22 + $0x4c0] sm:%s15]
      %177 = vst [vmem:[%s23 + $0x4c0] sm:%s15] %v176
      %v178 = vld [vmem:[%s22 + $0x4d0] sm:%s15]
      %179 = vst [vmem:[%s23 + $0x4d0] sm:%s15] %v178
      %v180 = vld [vmem:[%s22 + $0x4e0] sm:%s15]
      %181 = vst [vmem:[%s23 + $0x4e0] sm:%s15] %v180
      %v182 = vld [vmem:[%s22 + $0x4f0] sm:%s15]
      %183 = vst [vmem:[%s23 + $0x4f0] sm:%s15] %v182
      %v184 = vld [vmem:[%s22 + $0x500] sm:%s15]
      %185 = vst [vmem:[%s23 + $0x500] sm:%s15] %v184
      %v186 = vld [vmem:[%s22 + $0x510] sm:%s15]
      %187 = vst [vmem:[%s23 + $0x510] sm:%s15] %v186
      %v188 = vld [vmem:[%s22 + $0x520] sm:%s15]
      %189 = vst [vmem:[%s23 + $0x520] sm:%s15] %v188
      %v190 = vld [vmem:[%s22 + $0x530] sm:%s15]
      %191 = vst [vmem:[%s23 + $0x530] sm:%s15] %v190
      %v192 = vld [vmem:[%s22 + $0x540] sm:%s15]
      %193 = vst [vmem:[%s23 + $0x540] sm:%s15] %v192
      %v194 = vld [vmem:[%s22 + $0x550] sm:%s15]
      %195 = vst [vmem:[%s23 + $0x550] sm:%s15] %v194
      %v196 = vld [vmem:[%s22 + $0x560] sm:%s15]
      %197 = vst [vmem:[%s23 + $0x560] sm:%s15] %v196
      %v198 = vld [vmem:[%s22 + $0x570] sm:%s15]
      %199 = vst [vmem:[%s23 + $0x570] sm:%s15] %v198
      %v200 = vld [vmem:[%s22 + $0x580] sm:%s15]
      %201 = vst [vmem:[%s23 + $0x580] sm:%s15] %v200
      %v202 = vld [vmem:[%s22 + $0x590] sm:%s15]
      %203 = vst [vmem:[%s23 + $0x590] sm:%s15] %v202
      %v204 = vld [vmem:[%s22 + $0x5a0] sm:%s15]
      %205 = vst [vmem:[%s23 + $0x5a0] sm:%s15] %v204
      %v206 = vld [vmem:[%s22 + $0x5b0] sm:%s15]
      %207 = vst [vmem:[%s23 + $0x5b0] sm:%s15] %v206
      %v208 = vld [vmem:[%s22 + $0x5c0] sm:%s15]
      %209 = vst [vmem:[%s23 + $0x5c0] sm:%s15] %v208
      %v210 = vld [vmem:[%s22 + $0x5d0] sm:%s15]
      %211 = vst [vmem:[%s23 + $0x5d0] sm:%s15] %v210
      %v212 = vld [vmem:[%s22 + $0x5e0] sm:%s15]
      %213 = vst [vmem:[%s23 + $0x5e0] sm:%s15] %v212
      %v214 = vld [vmem:[%s22 + $0x5f0] sm:%s15]
      %215 = vst [vmem:[%s23 + $0x5f0] sm:%s15] %v214
      %v216 = vld [vmem:[%s22 + $0x600] sm:%s15]
      %217 = vst [vmem:[%s23 + $0x600] sm:%s15] %v216
      %v218 = vld [vmem:[%s22 + $0x610] sm:%s15]
      %219 = vst [vmem:[%s23 + $0x610] sm:%s15] %v218
      %v220 = vld [vmem:[%s22 + $0x620] sm:%s15]
      %221 = vst [vmem:[%s23 + $0x620] sm:%s15] %v220
      %v222 = vld [vmem:[%s22 + $0x630] sm:%s15]
      %223 = vst [vmem:[%s23 + $0x630] sm:%s15] %v222
      %v224 = vld [vmem:[%s22 + $0x640] sm:%s15]
      %225 = vst [vmem:[%s23 + $0x640] sm:%s15] %v224
      %v226 = vld [vmem:[%s22 + $0x650] sm:%s15]
      %227 = vst [vmem:[%s23 + $0x650] sm:%s15] %v226
      %v228 = vld [vmem:[%s22 + $0x660] sm:%s15]
      %229 = vst [vmem:[%s23 + $0x660] sm:%s15] %v228
      %v230 = vld [vmem:[%s22 + $0x670] sm:%s15]
      %231 = vst [vmem:[%s23 + $0x670] sm:%s15] %v230
      %v232 = vld [vmem:[%s22 + $0x680] sm:%s15]
      %233 = vst [vmem:[%s23 + $0x680] sm:%s15] %v232
      %v234 = vld [vmem:[%s22 + $0x690] sm:%s15]
      %235 = vst [vmem:[%s23 + $0x690] sm:%s15] %v234
      %v236 = vld [vmem:[%s22 + $0x6a0] sm:%s15]
      %237 = vst [vmem:[%s23 + $0x6a0] sm:%s15] %v236
      %v238 = vld [vmem:[%s22 + $0x6b0] sm:%s15]
      %239 = vst [vmem:[%s23 + $0x6b0] sm:%s15] %v238
      %v240 = vld [vmem:[%s22 + $0x6c0] sm:%s15]
      %241 = vst [vmem:[%s23 + $0x6c0] sm:%s15] %v240
      %v242 = vld [vmem:[%s22 + $0x6d0] sm:%s15]
      %243 = vst [vmem:[%s23 + $0x6d0] sm:%s15] %v242
      %v244 = vld [vmem:[%s22 + $0x6e0] sm:%s15]
      %245 = vst [vmem:[%s23 + $0x6e0] sm:%s15] %v244
      %v246 = vld [vmem:[%s22 + $0x6f0] sm:%s15]
      %247 = vst [vmem:[%s23 + $0x6f0] sm:%s15] %v246
      %v248 = vld [vmem:[%s22 + $0x700] sm:%s15]
      %249 = vst [vmem:[%s23 + $0x700] sm:%s15] %v248
      %v250 = vld [vmem:[%s22 + $0x710] sm:%s15]
      %251 = vst [vmem:[%s23 + $0x710] sm:%s15] %v250
      %v252 = vld [vmem:[%s22 + $0x720] sm:%s15]
      %253 = vst [vmem:[%s23 + $0x720] sm:%s15] %v252
      %v254 = vld [vmem:[%s22 + $0x730] sm:%s15]
      %255 = vst [vmem:[%s23 + $0x730] sm:%s15] %v254
      %v256 = vld [vmem:[%s22 + $0x740] sm:%s15]
      %257 = vst [vmem:[%s23 + $0x740] sm:%s15] %v256
      %v258 = vld [vmem:[%s22 + $0x750] sm:%s15]
      %259 = vst [vmem:[%s23 + $0x750] sm:%s15] %v258
      %v260 = vld [vmem:[%s22 + $0x760] sm:%s15]
      %261 = vst [vmem:[%s23 + $0x760] sm:%s15] %v260
      %v262 = vld [vmem:[%s22 + $0x770] sm:%s15]
      %263 = vst [vmem:[%s23 + $0x770] sm:%s15] %v262
      %v264 = vld [vmem:[%s22 + $0x780] sm:%s15]
      %265 = vst [vmem:[%s23 + $0x780] sm:%s15] %v264
      %v266 = vld [vmem:[%s22 + $0x790] sm:%s15]
      %267 = vst [vmem:[%s23 + $0x790] sm:%s15] %v266
      %v268 = vld [vmem:[%s22 + $0x7a0] sm:%s15]
      %269 = vst [vmem:[%s23 + $0x7a0] sm:%s15] %v268
      %v270 = vld [vmem:[%s22 + $0x7b0] sm:%s15]
      %271 = vst [vmem:[%s23 + $0x7b0] sm:%s15] %v270
      %v272 = vld [vmem:[%s22 + $0x7c0] sm:%s15]
      %273 = vst [vmem:[%s23 + $0x7c0] sm:%s15] %v272
      %v274 = vld [vmem:[%s22 + $0x7d0] sm:%s15]
      %275 = vst [vmem:[%s23 + $0x7d0] sm:%s15] %v274
      %v276 = vld [vmem:[%s22 + $0x7e0] sm:%s15]
      %277 = vst [vmem:[%s23 + $0x7e0] sm:%s15] %v276
      %v278 = vld [vmem:[%s22 + $0x7f0] sm:%s15]
      %279 = vst [vmem:[%s23 + $0x7f0] sm:%s15] %v278
      %v280 = vld [vmem:[%s22 + $0x800] sm:%s15]
      %281 = vst [vmem:[%s23 + $0x800] sm:%s15] %v280
      %v282 = vld [vmem:[%s22 + $0x810] sm:%s15]
      %283 = vst [vmem:[%s23 + $0x810] sm:%s15] %v282
      %v284 = vld [vmem:[%s22 + $0x820] sm:%s15]
      %285 = vst [vmem:[%s23 + $0x820] sm:%s15] %v284
      %v286 = vld [vmem:[%s22 + $0x830] sm:%s15]
      %287 = vst [vmem:[%s23 + $0x830] sm:%s15] %v286
      %v288 = vld [vmem:[%s22 + $0x840] sm:%s15]
      %289 = vst [vmem:[%s23 + $0x840] sm:%s15] %v288
      %v290 = vld [vmem:[%s22 + $0x850] sm:%s15]
      %291 = vst [vmem:[%s23 + $0x850] sm:%s15] %v290
      %v292 = vld [vmem:[%s22 + $0x860] sm:%s15]
      %293 = vst [vmem:[%s23 + $0x860] sm:%s15] %v292
      %v294 = vld [vmem:[%s22 + $0x870] sm:%s15]
      %295 = vst [vmem:[%s23 + $0x870] sm:%s15] %v294
      %v296 = vld [vmem:[%s22 + $0x880] sm:%s15]
      %297 = vst [vmem:[%s23 + $0x880] sm:%s15] %v296
      %v298 = vld [vmem:[%s22 + $0x890] sm:%s15]
      %299 = vst [vmem:[%s23 + $0x890] sm:%s15] %v298
      %v300 = vld [vmem:[%s22 + $0x8a0] sm:%s15]
      %301 = vst [vmem:[%s23 + $0x8a0] sm:%s15] %v300
      %v302 = vld [vmem:[%s22 + $0x8b0] sm:%s15]
      %303 = vst [vmem:[%s23 + $0x8b0] sm:%s15] %v302
      %v304 = vld [vmem:[%s22 + $0x8c0] sm:%s15]
      %305 = vst [vmem:[%s23 + $0x8c0] sm:%s15] %v304
      %v306 = vld [vmem:[%s22 + $0x8d0] sm:%s15]
      %307 = vst [vmem:[%s23 + $0x8d0] sm:%s15] %v306
      %v308 = vld [vmem:[%s22 + $0x8e0] sm:%s15]
      %309 = vst [vmem:[%s23 + $0x8e0] sm:%s15] %v308
      %v310 = vld [vmem:[%s22 + $0x8f0] sm:%s15]
      %311 = vst [vmem:[%s23 + $0x8f0] sm:%s15] %v310
      %v312 = vld [vmem:[%s22 + $0x900] sm:%s15]
      %313 = vst [vmem:[%s23 + $0x900] sm:%s15] %v312
      %v314 = vld [vmem:[%s22 + $0x910] sm:%s15]
      %315 = vst [vmem:[%s23 + $0x910] sm:%s15] %v314
      %v316 = vld [vmem:[%s22 + $0x920] sm:%s15]
      %317 = vst [vmem:[%s23 + $0x920] sm:%s15] %v316
      %v318 = vld [vmem:[%s22 + $0x930] sm:%s15]
      %319 = vst [vmem:[%s23 + $0x930] sm:%s15] %v318
      %v320 = vld [vmem:[%s22 + $0x940] sm:%s15]
      %321 = vst [vmem:[%s23 + $0x940] sm:%s15] %v320
      %v322 = vld [vmem:[%s22 + $0x950] sm:%s15]
      %323 = vst [vmem:[%s23 + $0x950] sm:%s15] %v322
      %v324 = vld [vmem:[%s22 + $0x960] sm:%s15]
      %325 = vst [vmem:[%s23 + $0x960] sm:%s15] %v324
      %v326 = vld [vmem:[%s22 + $0x970] sm:%s15]
      %327 = vst [vmem:[%s23 + $0x970] sm:%s15] %v326
      %v328 = vld [vmem:[%s22 + $0x980] sm:%s15]
      %329 = vst [vmem:[%s23 + $0x980] sm:%s15] %v328
      %v330 = vld [vmem:[%s22 + $0x990] sm:%s15]
      %331 = vst [vmem:[%s23 + $0x990] sm:%s15] %v330
      %v332 = vld [vmem:[%s22 + $0x9a0] sm:%s15]
      %333 = vst [vmem:[%s23 + $0x9a0] sm:%s15] %v332
      %v334 = vld [vmem:[%s22 + $0x9b0] sm:%s15]
      %335 = vst [vmem:[%s23 + $0x9b0] sm:%s15] %v334
      %v336 = vld [vmem:[%s22 + $0x9c0] sm:%s15]
      %337 = vst [vmem:[%s23 + $0x9c0] sm:%s15] %v336
      %v338 = vld [vmem:[%s22 + $0x9d0] sm:%s15]
      %339 = vst [vmem:[%s23 + $0x9d0] sm:%s15] %v338
      %v340 = vld [vmem:[%s22 + $0x9e0] sm:%s15]
      %341 = vst [vmem:[%s23 + $0x9e0] sm:%s15] %v340
      %v342 = vld [vmem:[%s22 + $0x9f0] sm:%s15]
      %343 = vst [vmem:[%s23 + $0x9f0] sm:%s15] %v342
      %v344 = vld [vmem:[%s22 + $0xa00] sm:%s15]
      %345 = vst [vmem:[%s23 + $0xa00] sm:%s15] %v344
      %v346 = vld [vmem:[%s22 + $0xa10] sm:%s15]
      %347 = vst [vmem:[%s23 + $0xa10] sm:%s15] %v346
      %v348 = vld [vmem:[%s22 + $0xa20] sm:%s15]
      %349 = vst [vmem:[%s23 + $0xa20] sm:%s15] %v348
      %v350 = vld [vmem:[%s22 + $0xa30] sm:%s15]
      %351 = vst [vmem:[%s23 + $0xa30] sm:%s15] %v350
      %v352 = vld [vmem:[%s22 + $0xa40] sm:%s15]
      %353 = vst [vmem:[%s23 + $0xa40] sm:%s15] %v352
      %v354 = vld [vmem:[%s22 + $0xa50] sm:%s15]
      %355 = vst [vmem:[%s23 + $0xa50] sm:%s15] %v354
      %v356 = vld [vmem:[%s22 + $0xa60] sm:%s15]
      %357 = vst [vmem:[%s23 + $0xa60] sm:%s15] %v356
      %v358 = vld [vmem:[%s22 + $0xa70] sm:%s15]
      %359 = vst [vmem:[%s23 + $0xa70] sm:%s15] %v358
      %v360 = vld [vmem:[%s22 + $0xa80] sm:%s15]
      %361 = vst [vmem:[%s23 + $0xa80] sm:%s15] %v360
      %v362 = vld [vmem:[%s22 + $0xa90] sm:%s15]
      %363 = vst [vmem:[%s23 + $0xa90] sm:%s15] %v362
      %v364 = vld [vmem:[%s22 + $0xaa0] sm:%s15]
      %365 = vst [vmem:[%s23 + $0xaa0] sm:%s15] %v364
      %v366 = vld [vmem:[%s22 + $0xab0] sm:%s15]
      %367 = vst [vmem:[%s23 + $0xab0] sm:%s15] %v366
      %v368 = vld [vmem:[%s22 + $0xac0] sm:%s15]
      %369 = vst [vmem:[%s23 + $0xac0] sm:%s15] %v368
      %v370 = vld [vmem:[%s22 + $0xad0] sm:%s15]
      %371 = vst [vmem:[%s23 + $0xad0] sm:%s15] %v370
      %v372 = vld [vmem:[%s22 + $0xae0] sm:%s15]
      %373 = vst [vmem:[%s23 + $0xae0] sm:%s15] %v372
      %v374 = vld [vmem:[%s22 + $0xaf0] sm:%s15]
      %375 = vst [vmem:[%s23 + $0xaf0] sm:%s15] %v374
      %v376 = vld [vmem:[%s22 + $0xb00] sm:%s15]
      %377 = vst [vmem:[%s23 + $0xb00] sm:%s15] %v376
      %v378 = vld [vmem:[%s22 + $0xb10] sm:%s15]
      %379 = vst [vmem:[%s23 + $0xb10] sm:%s15] %v378
      %v380 = vld [vmem:[%s22 + $0xb20] sm:%s15]
      %381 = vst [vmem:[%s23 + $0xb20] sm:%s15] %v380
      %v382 = vld [vmem:[%s22 + $0xb30] sm:%s15]
      %383 = vst [vmem:[%s23 + $0xb30] sm:%s15] %v382
      %v384 = vld [vmem:[%s22 + $0xb40] sm:%s15]
      %385 = vst [vmem:[%s23 + $0xb40] sm:%s15] %v384
      %v386 = vld [vmem:[%s22 + $0xb50] sm:%s15]
      %387 = vst [vmem:[%s23 + $0xb50] sm:%s15] %v386
      %v388 = vld [vmem:[%s22 + $0xb60] sm:%s15]
      %389 = vst [vmem:[%s23 + $0xb60] sm:%s15] %v388
      %v390 = vld [vmem:[%s22 + $0xb70] sm:%s15]
      %391 = vst [vmem:[%s23 + $0xb70] sm:%s15] %v390
      %v392 = vld [vmem:[%s22 + $0xb80] sm:%s15]
      %393 = vst [vmem:[%s23 + $0xb80] sm:%s15] %v392
      %v394 = vld [vmem:[%s22 + $0xb90] sm:%s15]
      %395 = vst [vmem:[%s23 + $0xb90] sm:%s15] %v394
      %v396 = vld [vmem:[%s22 + $0xba0] sm:%s15]
      %397 = vst [vmem:[%s23 + $0xba0] sm:%s15] %v396
      %v398 = vld [vmem:[%s22 + $0xbb0] sm:%s15]
      %399 = vst [vmem:[%s23 + $0xbb0] sm:%s15] %v398
      %v400 = vld [vmem:[%s22 + $0xbc0] sm:%s15]
      %401 = vst [vmem:[%s23 + $0xbc0] sm:%s15] %v400
      %v402 = vld [vmem:[%s22 + $0xbd0] sm:%s15]
      %403 = vst [vmem:[%s23 + $0xbd0] sm:%s15] %v402
      %v404 = vld [vmem:[%s22 + $0xbe0] sm:%s15]
      %405 = vst [vmem:[%s23 + $0xbe0] sm:%s15] %v404
      %v406 = vld [vmem:[%s22 + $0xbf0] sm:%s15]
      %407 = vst [vmem:[%s23 + $0xbf0] sm:%s15] %v406
      %v408 = vld [vmem:[%s22 + $0xc00] sm:%s15]
      %409 = vst [vmem:[%s23 + $0xc00] sm:%s15] %v408
      %v410 = vld [vmem:[%s22 + $0xc10] sm:%s15]
      %411 = vst [vmem:[%s23 + $0xc10] sm:%s15] %v410
      %v412 = vld [vmem:[%s22 + $0xc20] sm:%s15]
      %413 = vst [vmem:[%s23 + $0xc20] sm:%s15] %v412
      %v414 = vld [vmem:[%s22 + $0xc30] sm:%s15]
      %415 = vst [vmem:[%s23 + $0xc30] sm:%s15] %v414
      %v416 = vld [vmem:[%s22 + $0xc40] sm:%s15]
      %417 = vst [vmem:[%s23 + $0xc40] sm:%s15] %v416
      %v418 = vld [vmem:[%s22 + $0xc50] sm:%s15]
      %419 = vst [vmem:[%s23 + $0xc50] sm:%s15] %v418
      %v420 = vld [vmem:[%s22 + $0xc60] sm:%s15]
      %421 = vst [vmem:[%s23 + $0xc60] sm:%s15] %v420
      %v422 = vld [vmem:[%s22 + $0xc70] sm:%s15]
      %423 = vst [vmem:[%s23 + $0xc70] sm:%s15] %v422
      %v424 = vld [vmem:[%s22 + $0xc80] sm:%s15]
      %425 = vst [vmem:[%s23 + $0xc80] sm:%s15] %v424
      %v426 = vld [vmem:[%s22 + $0xc90] sm:%s15]
      %427 = vst [vmem:[%s23 + $0xc90] sm:%s15] %v426
      %v428 = vld [vmem:[%s22 + $0xca0] sm:%s15]
      %429 = vst [vmem:[%s23 + $0xca0] sm:%s15] %v428
      %v430 = vld [vmem:[%s22 + $0xcb0] sm:%s15]
      %431 = vst [vmem:[%s23 + $0xcb0] sm:%s15] %v430
      %v432 = vld [vmem:[%s22 + $0xcc0] sm:%s15]
      %433 = vst [vmem:[%s23 + $0xcc0] sm:%s15] %v432
      %v434 = vld [vmem:[%s22 + $0xcd0] sm:%s15]
      %435 = vst [vmem:[%s23 + $0xcd0] sm:%s15] %v434
      %v436 = vld [vmem:[%s22 + $0xce0] sm:%s15]
      %437 = vst [vmem:[%s23 + $0xce0] sm:%s15] %v436
      %v438 = vld [vmem:[%s22 + $0xcf0] sm:%s15]
      %439 = vst [vmem:[%s23 + $0xcf0] sm:%s15] %v438
      %v440 = vld [vmem:[%s22 + $0xd00] sm:%s15]
      %441 = vst [vmem:[%s23 + $0xd00] sm:%s15] %v440
      %v442 = vld [vmem:[%s22 + $0xd10] sm:%s15]
      %443 = vst [vmem:[%s23 + $0xd10] sm:%s15] %v442
      %v444 = vld [vmem:[%s22 + $0xd20] sm:%s15]
      %445 = vst [vmem:[%s23 + $0xd20] sm:%s15] %v444
      %v446 = vld [vmem:[%s22 + $0xd30] sm:%s15]
      %447 = vst [vmem:[%s23 + $0xd30] sm:%s15] %v446
      %v448 = vld [vmem:[%s22 + $0xd40] sm:%s15]
      %449 = vst [vmem:[%s23 + $0xd40] sm:%s15] %v448
      %v450 = vld [vmem:[%s22 + $0xd50] sm:%s15]
      %451 = vst [vmem:[%s23 + $0xd50] sm:%s15] %v450
      %v452 = vld [vmem:[%s22 + $0xd60] sm:%s15]
      %453 = vst [vmem:[%s23 + $0xd60] sm:%s15] %v452
      %v454 = vld [vmem:[%s22 + $0xd70] sm:%s15]
      %455 = vst [vmem:[%s23 + $0xd70] sm:%s15] %v454
      %v456 = vld [vmem:[%s22 + $0xd80] sm:%s15]
      %457 = vst [vmem:[%s23 + $0xd80] sm:%s15] %v456
      %v458 = vld [vmem:[%s22 + $0xd90] sm:%s15]
      %459 = vst [vmem:[%s23 + $0xd90] sm:%s15] %v458
      %v460 = vld [vmem:[%s22 + $0xda0] sm:%s15]
      %461 = vst [vmem:[%s23 + $0xda0] sm:%s15] %v460
      %v462 = vld [vmem:[%s22 + $0xdb0] sm:%s15]
      %463 = vst [vmem:[%s23 + $0xdb0] sm:%s15] %v462
      %v464 = vld [vmem:[%s22 + $0xdc0] sm:%s15]
      %465 = vst [vmem:[%s23 + $0xdc0] sm:%s15] %v464
      %v466 = vld [vmem:[%s22 + $0xdd0] sm:%s15]
      %467 = vst [vmem:[%s23 + $0xdd0] sm:%s15] %v466
      %v468 = vld [vmem:[%s22 + $0xde0] sm:%s15]
      %469 = vst [vmem:[%s23 + $0xde0] sm:%s15] %v468
      %v470 = vld [vmem:[%s22 + $0xdf0] sm:%s15]
      %471 = vst [vmem:[%s23 + $0xdf0] sm:%s15] %v470
      %v472 = vld [vmem:[%s22 + $0xe00] sm:%s15]
      %473 = vst [vmem:[%s23 + $0xe00] sm:%s15] %v472
      %v474 = vld [vmem:[%s22 + $0xe10] sm:%s15]
      %475 = vst [vmem:[%s23 + $0xe10] sm:%s15] %v474
      %v476 = vld [vmem:[%s22 + $0xe20] sm:%s15]
      %477 = vst [vmem:[%s23 + $0xe20] sm:%s15] %v476
      %v478 = vld [vmem:[%s22 + $0xe30] sm:%s15]
      %479 = vst [vmem:[%s23 + $0xe30] sm:%s15] %v478
      %v480 = vld [vmem:[%s22 + $0xe40] sm:%s15]
      %481 = vst [vmem:[%s23 + $0xe40] sm:%s15] %v480
      %v482 = vld [vmem:[%s22 + $0xe50] sm:%s15]
      %483 = vst [vmem:[%s23 + $0xe50] sm:%s15] %v482
      %v484 = vld [vmem:[%s22 + $0xe60] sm:%s15]
      %485 = vst [vmem:[%s23 + $0xe60] sm:%s15] %v484
      %v486 = vld [vmem:[%s22 + $0xe70] sm:%s15]
      %487 = vst [vmem:[%s23 + $0xe70] sm:%s15] %v486
      %v488 = vld [vmem:[%s22 + $0xe80] sm:%s15]
      %489 = vst [vmem:[%s23 + $0xe80] sm:%s15] %v488
      %v490 = vld [vmem:[%s22 + $0xe90] sm:%s15]
      %491 = vst [vmem:[%s23 + $0xe90] sm:%s15] %v490
      %v492 = vld [vmem:[%s22 + $0xea0] sm:%s15]
      %493 = vst [vmem:[%s23 + $0xea0] sm:%s15] %v492
      %v494 = vld [vmem:[%s22 + $0xeb0] sm:%s15]
      %495 = vst [vmem:[%s23 + $0xeb0] sm:%s15] %v494
      %v496 = vld [vmem:[%s22 + $0xec0] sm:%s15]
      %497 = vst [vmem:[%s23 + $0xec0] sm:%s15] %v496
      %v498 = vld [vmem:[%s22 + $0xed0] sm:%s15]
      %499 = vst [vmem:[%s23 + $0xed0] sm:%s15] %v498
      %v500 = vld [vmem:[%s22 + $0xee0] sm:%s15]
      %501 = vst [vmem:[%s23 + $0xee0] sm:%s15] %v500
      %v502 = vld [vmem:[%s22 + $0xef0] sm:%s15]
      %503 = vst [vmem:[%s23 + $0xef0] sm:%s15] %v502
      %v504 = vld [vmem:[%s22 + $0xf00] sm:%s15]
      %505 = vst [vmem:[%s23 + $0xf00] sm:%s15] %v504
      %v506 = vld [vmem:[%s22 + $0xf10] sm:%s15]
      %507 = vst [vmem:[%s23 + $0xf10] sm:%s15] %v506
      %v508 = vld [vmem:[%s22 + $0xf20] sm:%s15]
      %509 = vst [vmem:[%s23 + $0xf20] sm:%s15] %v508
      %v510 = vld [vmem:[%s22 + $0xf30] sm:%s15]
      %511 = vst [vmem:[%s23 + $0xf30] sm:%s15] %v510
      %v512 = vld [vmem:[%s22 + $0xf40] sm:%s15]
      %513 = vst [vmem:[%s23 + $0xf40] sm:%s15] %v512
      %v514 = vld [vmem:[%s22 + $0xf50] sm:%s15]
      %515 = vst [vmem:[%s23 + $0xf50] sm:%s15] %v514
      %v516 = vld [vmem:[%s22 + $0xf60] sm:%s15]
      %517 = vst [vmem:[%s23 + $0xf60] sm:%s15] %v516
      %v518 = vld [vmem:[%s22 + $0xf70] sm:%s15]
      %519 = vst [vmem:[%s23 + $0xf70] sm:%s15] %v518
      %v520 = vld [vmem:[%s22 + $0xf80] sm:%s15]
      %521 = vst [vmem:[%s23 + $0xf80] sm:%s15] %v520
      %v522 = vld [vmem:[%s22 + $0xf90] sm:%s15]
      %523 = vst [vmem:[%s23 + $0xf90] sm:%s15] %v522
      %v524 = vld [vmem:[%s22 + $0xfa0] sm:%s15]
      %525 = vst [vmem:[%s23 + $0xfa0] sm:%s15] %v524
      %v526 = vld [vmem:[%s22 + $0xfb0] sm:%s15]
      %527 = vst [vmem:[%s23 + $0xfb0] sm:%s15] %v526
      %v528 = vld [vmem:[%s22 + $0xfc0] sm:%s15]
      %529 = vst [vmem:[%s23 + $0xfc0] sm:%s15] %v528
      %v530 = vld [vmem:[%s22 + $0xfd0] sm:%s15]
      %531 = vst [vmem:[%s23 + $0xfd0] sm:%s15] %v530
      %v532 = vld [vmem:[%s22 + $0xfe0] sm:%s15]
      %533 = vst [vmem:[%s23 + $0xfe0] sm:%s15] %v532
      %v534 = vld [vmem:[%s22 + $0xff0] sm:%s15]
      %535 = vst [vmem:[%s23 + $0xff0] sm:%s15] %v534
      %v536 = vld [vmem:[%s22 + $0x1000] sm:%s15]
      %537 = vst [vmem:[%s23 + $0x1000] sm:%s15] %v536
      %v538 = vld [vmem:[%s22 + $0x1010] sm:%s15]
      %539 = vst [vmem:[%s23 + $0x1010] sm:%s15] %v538
      %v540 = vld [vmem:[%s22 + $0x1020] sm:%s15]
      %541 = vst [vmem:[%s23 + $0x1020] sm:%s15] %v540
      %v542 = vld [vmem:[%s22 + $0x1030] sm:%s15]
      %543 = vst [vmem:[%s23 + $0x1030] sm:%s15] %v542
      %v544 = vld [vmem:[%s22 + $0x1040] sm:%s15]
      %545 = vst [vmem:[%s23 + $0x1040] sm:%s15] %v544
      %v546 = vld [vmem:[%s22 + $0x1050] sm:%s15]
      %547 = vst [vmem:[%s23 + $0x1050] sm:%s15] %v546
      %v548 = vld [vmem:[%s22 + $0x1060] sm:%s15]
      %549 = vst [vmem:[%s23 + $0x1060] sm:%s15] %v548
      %v550 = vld [vmem:[%s22 + $0x1070] sm:%s15]
      %551 = vst [vmem:[%s23 + $0x1070] sm:%s15] %v550
      %v552 = vld [vmem:[%s22 + $0x1080] sm:%s15]
      %553 = vst [vmem:[%s23 + $0x1080] sm:%s15] %v552
      %v554 = vld [vmem:[%s22 + $0x1090] sm:%s15]
      %555 = vst [vmem:[%s23 + $0x1090] sm:%s15] %v554
      %v556 = vld [vmem:[%s22 + $0x10a0] sm:%s15]
      %557 = vst [vmem:[%s23 + $0x10a0] sm:%s15] %v556
      %v558 = vld [vmem:[%s22 + $0x10b0] sm:%s15]
      %559 = vst [vmem:[%s23 + $0x10b0] sm:%s15] %v558
      %v560 = vld [vmem:[%s22 + $0x10c0] sm:%s15]
      %561 = vst [vmem:[%s23 + $0x10c0] sm:%s15] %v560
      %v562 = vld [vmem:[%s22 + $0x10d0] sm:%s15]
      %563 = vst [vmem:[%s23 + $0x10d0] sm:%s15] %v562
      %v564 = vld [vmem:[%s22 + $0x10e0] sm:%s15]
      %565 = vst [vmem:[%s23 + $0x10e0] sm:%s15] %v564
      %v566 = vld [vmem:[%s22 + $0x10f0] sm:%s15]
      %567 = vst [vmem:[%s23 + $0x10f0] sm:%s15] %v566
      %v568 = vld [vmem:[%s22 + $0x1100] sm:%s15]
      %569 = vst [vmem:[%s23 + $0x1100] sm:%s15] %v568
      %v570 = vld [vmem:[%s22 + $0x1110] sm:%s15]
      %571 = vst [vmem:[%s23 + $0x1110] sm:%s15] %v570
      %v572 = vld [vmem:[%s22 + $0x1120] sm:%s15]
      %573 = vst [vmem:[%s23 + $0x1120] sm:%s15] %v572
      %v574 = vld [vmem:[%s22 + $0x1130] sm:%s15]
      %575 = vst [vmem:[%s23 + $0x1130] sm:%s15] %v574
      %v576 = vld [vmem:[%s22 + $0x1140] sm:%s15]
      %577 = vst [vmem:[%s23 + $0x1140] sm:%s15] %v576
      %v578 = vld [vmem:[%s22 + $0x1150] sm:%s15]
      %579 = vst [vmem:[%s23 + $0x1150] sm:%s15] %v578
      %v580 = vld [vmem:[%s22 + $0x1160] sm:%s15]
      %581 = vst [vmem:[%s23 + $0x1160] sm:%s15] %v580
      %v582 = vld [vmem:[%s22 + $0x1170] sm:%s15]
      %583 = vst [vmem:[%s23 + $0x1170] sm:%s15] %v582
      %v584 = vld [vmem:[%s22 + $0x1180] sm:%s15]
      %585 = vst [vmem:[%s23 + $0x1180] sm:%s15] %v584
      %v586 = vld [vmem:[%s22 + $0x1190] sm:%s15]
      %587 = vst [vmem:[%s23 + $0x1190] sm:%s15] %v586
      %v588 = vld [vmem:[%s22 + $0x11a0] sm:%s15]
      %589 = vst [vmem:[%s23 + $0x11a0] sm:%s15] %v588
      %v590 = vld [vmem:[%s22 + $0x11b0] sm:%s15]
      %591 = vst [vmem:[%s23 + $0x11b0] sm:%s15] %v590
      %v592 = vld [vmem:[%s22 + $0x11c0] sm:%s15]
      %593 = vst [vmem:[%s23 + $0x11c0] sm:%s15] %v592
      %v594 = vld [vmem:[%s22 + $0x11d0] sm:%s15]
      %595 = vst [vmem:[%s23 + $0x11d0] sm:%s15] %v594
      %v596 = vld [vmem:[%s22 + $0x11e0] sm:%s15]
      %597 = vst [vmem:[%s23 + $0x11e0] sm:%s15] %v596
      %v598 = vld [vmem:[%s22 + $0x11f0] sm:%s15]
      %599 = vst [vmem:[%s23 + $0x11f0] sm:%s15] %v598
      %v600 = vld [vmem:[%s22 + $0x1200] sm:%s15]
      %601 = vst [vmem:[%s23 + $0x1200] sm:%s15] %v600
      %v602 = vld [vmem:[%s22 + $0x1210] sm:%s15]
      %603 = vst [vmem:[%s23 + $0x1210] sm:%s15] %v602
      %v604 = vld [vmem:[%s22 + $0x1220] sm:%s15]
      %605 = vst [vmem:[%s23 + $0x1220] sm:%s15] %v604
      %v606 = vld [vmem:[%s22 + $0x1230] sm:%s15]
      %607 = vst [vmem:[%s23 + $0x1230] sm:%s15] %v606
      %v608 = vld [vmem:[%s22 + $0x1240] sm:%s15]
      %609 = vst [vmem:[%s23 + $0x1240] sm:%s15] %v608
      %v610 = vld [vmem:[%s22 + $0x1250] sm:%s15]
      %611 = vst [vmem:[%s23 + $0x1250] sm:%s15] %v610
      %v612 = vld [vmem:[%s22 + $0x1260] sm:%s15]
      %613 = vst [vmem:[%s23 + $0x1260] sm:%s15] %v612
      %v614 = vld [vmem:[%s22 + $0x1270] sm:%s15]
      %615 = vst [vmem:[%s23 + $0x1270] sm:%s15] %v614
      %v616 = vld [vmem:[%s22 + $0x1280] sm:%s15]
      %617 = vst [vmem:[%s23 + $0x1280] sm:%s15] %v616
      %v618 = vld [vmem:[%s22 + $0x1290] sm:%s15]
      %619 = vst [vmem:[%s23 + $0x1290] sm:%s15] %v618
      %v620 = vld [vmem:[%s22 + $0x12a0] sm:%s15]
      %621 = vst [vmem:[%s23 + $0x12a0] sm:%s15] %v620
      %v622 = vld [vmem:[%s22 + $0x12b0] sm:%s15]
      %623 = vst [vmem:[%s23 + $0x12b0] sm:%s15] %v622
      %v624 = vld [vmem:[%s22 + $0x12c0] sm:%s15]
      %625 = vst [vmem:[%s23 + $0x12c0] sm:%s15] %v624
      %v626 = vld [vmem:[%s22 + $0x12d0] sm:%s15]
      %627 = vst [vmem:[%s23 + $0x12d0] sm:%s15] %v626
      %v628 = vld [vmem:[%s22 + $0x12e0] sm:%s15]
      %629 = vst [vmem:[%s23 + $0x12e0] sm:%s15] %v628
      %v630 = vld [vmem:[%s22 + $0x12f0] sm:%s15]
      %631 = vst [vmem:[%s23 + $0x12f0] sm:%s15] %v630
      %v632 = vld [vmem:[%s22 + $0x1300] sm:%s15]
      %633 = vst [vmem:[%s23 + $0x1300] sm:%s15] %v632
      %v634 = vld [vmem:[%s22 + $0x1310] sm:%s15]
      %635 = vst [vmem:[%s23 + $0x1310] sm:%s15] %v634
      %v636 = vld [vmem:[%s22 + $0x1320] sm:%s15]
      %637 = vst [vmem:[%s23 + $0x1320] sm:%s15] %v636
      %v638 = vld [vmem:[%s22 + $0x1330] sm:%s15]
      %639 = vst [vmem:[%s23 + $0x1330] sm:%s15] %v638
      %v640 = vld [vmem:[%s22 + $0x1340] sm:%s15]
      %641 = vst [vmem:[%s23 + $0x1340] sm:%s15] %v640
      %v642 = vld [vmem:[%s22 + $0x1350] sm:%s15]
      %643 = vst [vmem:[%s23 + $0x1350] sm:%s15] %v642
      %v644 = vld [vmem:[%s22 + $0x1360] sm:%s15]
      %645 = vst [vmem:[%s23 + $0x1360] sm:%s15] %v644
      %v646 = vld [vmem:[%s22 + $0x1370] sm:%s15]
      %647 = vst [vmem:[%s23 + $0x1370] sm:%s15] %v646
      %v648 = vld [vmem:[%s22 + $0x1380] sm:%s15]
      %649 = vst [vmem:[%s23 + $0x1380] sm:%s15] %v648
      %v650 = vld [vmem:[%s22 + $0x1390] sm:%s15]
      %651 = vst [vmem:[%s23 + $0x1390] sm:%s15] %v650
      %v652 = vld [vmem:[%s22 + $0x13a0] sm:%s15]
      %653 = vst [vmem:[%s23 + $0x13a0] sm:%s15] %v652
      %v654 = vld [vmem:[%s22 + $0x13b0] sm:%s15]
      %655 = vst [vmem:[%s23 + $0x13b0] sm:%s15] %v654
      %v656 = vld [vmem:[%s22 + $0x13c0] sm:%s15]
      %657 = vst [vmem:[%s23 + $0x13c0] sm:%s15] %v656
      %v658 = vld [vmem:[%s22 + $0x13d0] sm:%s15]
      %659 = vst [vmem:[%s23 + $0x13d0] sm:%s15] %v658
      %v660 = vld [vmem:[%s22 + $0x13e0] sm:%s15]
      %661 = vst [vmem:[%s23 + $0x13e0] sm:%s15] %v660
      %v662 = vld [vmem:[%s22 + $0x13f0] sm:%s15]
      %663 = vst [vmem:[%s23 + $0x13f0] sm:%s15] %v662
      %v664 = vld [vmem:[%s22 + $0x1400] sm:%s15]
      %665 = vst [vmem:[%s23 + $0x1400] sm:%s15] %v664
      %v666 = vld [vmem:[%s22 + $0x1410] sm:%s15]
      %667 = vst [vmem:[%s23 + $0x1410] sm:%s15] %v666
      %v668 = vld [vmem:[%s22 + $0x1420] sm:%s15]
      %669 = vst [vmem:[%s23 + $0x1420] sm:%s15] %v668
      %v670 = vld [vmem:[%s22 + $0x1430] sm:%s15]
      %671 = vst [vmem:[%s23 + $0x1430] sm:%s15] %v670
      %v672 = vld [vmem:[%s22 + $0x1440] sm:%s15]
      %673 = vst [vmem:[%s23 + $0x1440] sm:%s15] %v672
      %v674 = vld [vmem:[%s22 + $0x1450] sm:%s15]
      %675 = vst [vmem:[%s23 + $0x1450] sm:%s15] %v674
      %v676 = vld [vmem:[%s22 + $0x1460] sm:%s15]
      %677 = vst [vmem:[%s23 + $0x1460] sm:%s15] %v676
      %v678 = vld [vmem:[%s22 + $0x1470] sm:%s15]
      %679 = vst [vmem:[%s23 + $0x1470] sm:%s15] %v678
      %v680 = vld [vmem:[%s22 + $0x1480] sm:%s15]
      %681 = vst [vmem:[%s23 + $0x1480] sm:%s15] %v680
      %v682 = vld [vmem:[%s22 + $0x1490] sm:%s15]
      %683 = vst [vmem:[%s23 + $0x1490] sm:%s15] %v682
      %v684 = vld [vmem:[%s22 + $0x14a0] sm:%s15]
      %685 = vst [vmem:[%s23 + $0x14a0] sm:%s15] %v684
      %v686 = vld [vmem:[%s22 + $0x14b0] sm:%s15]
      %687 = vst [vmem:[%s23 + $0x14b0] sm:%s15] %v686
      %v688 = vld [vmem:[%s22 + $0x14c0] sm:%s15]
      %689 = vst [vmem:[%s23 + $0x14c0] sm:%s15] %v688
      %v690 = vld [vmem:[%s22 + $0x14d0] sm:%s15]
      %691 = vst [vmem:[%s23 + $0x14d0] sm:%s15] %v690
      %v692 = vld [vmem:[%s22 + $0x14e0] sm:%s15]
      %693 = vst [vmem:[%s23 + $0x14e0] sm:%s15] %v692
      %v694 = vld [vmem:[%s22 + $0x14f0] sm:%s15]
      %695 = vst [vmem:[%s23 + $0x14f0] sm:%s15] %v694
      %v696 = vld [vmem:[%s22 + $0x1500] sm:%s15]
      %697 = vst [vmem:[%s23 + $0x1500] sm:%s15] %v696
      %v698 = vld [vmem:[%s22 + $0x1510] sm:%s15]
      %699 = vst [vmem:[%s23 + $0x1510] sm:%s15] %v698
      %v700 = vld [vmem:[%s22 + $0x1520] sm:%s15]
      %701 = vst [vmem:[%s23 + $0x1520] sm:%s15] %v700
      %v702 = vld [vmem:[%s22 + $0x1530] sm:%s15]
      %703 = vst [vmem:[%s23 + $0x1530] sm:%s15] %v702
      %v704 = vld [vmem:[%s22 + $0x1540] sm:%s15]
      %705 = vst [vmem:[%s23 + $0x1540] sm:%s15] %v704
      %v706 = vld [vmem:[%s22 + $0x1550] sm:%s15]
      %707 = vst [vmem:[%s23 + $0x1550] sm:%s15] %v706
      %v708 = vld [vmem:[%s22 + $0x1560] sm:%s15]
      %709 = vst [vmem:[%s23 + $0x1560] sm:%s15] %v708
      %v710 = vld [vmem:[%s22 + $0x1570] sm:%s15]
      %711 = vst [vmem:[%s23 + $0x1570] sm:%s15] %v710
      %v712 = vld [vmem:[%s22 + $0x1580] sm:%s15]
      %713 = vst [vmem:[%s23 + $0x1580] sm:%s15] %v712
      %v714 = vld [vmem:[%s22 + $0x1590] sm:%s15]
      %715 = vst [vmem:[%s23 + $0x1590] sm:%s15] %v714
      %v716 = vld [vmem:[%s22 + $0x15a0] sm:%s15]
      %717 = vst [vmem:[%s23 + $0x15a0] sm:%s15] %v716
      %v718 = vld [vmem:[%s22 + $0x15b0] sm:%s15]
      %719 = vst [vmem:[%s23 + $0x15b0] sm:%s15] %v718
      %v720 = vld [vmem:[%s22 + $0x15c0] sm:%s15]
      %721 = vst [vmem:[%s23 + $0x15c0] sm:%s15] %v720
      %v722 = vld [vmem:[%s22 + $0x15d0] sm:%s15]
      %723 = vst [vmem:[%s23 + $0x15d0] sm:%s15] %v722
      %v724 = vld [vmem:[%s22 + $0x15e0] sm:%s15]
      %725 = vst [vmem:[%s23 + $0x15e0] sm:%s15] %v724
      %v726 = vld [vmem:[%s22 + $0x15f0] sm:%s15]
      %727 = vst [vmem:[%s23 + $0x15f0] sm:%s15] %v726
      %v728 = vld [vmem:[%s22 + $0x1600] sm:%s15]
      %729 = vst [vmem:[%s23 + $0x1600] sm:%s15] %v728
      %v730 = vld [vmem:[%s22 + $0x1610] sm:%s15]
      %731 = vst [vmem:[%s23 + $0x1610] sm:%s15] %v730
      %v732 = vld [vmem:[%s22 + $0x1620] sm:%s15]
      %733 = vst [vmem:[%s23 + $0x1620] sm:%s15] %v732
      %v734 = vld [vmem:[%s22 + $0x1630] sm:%s15]
      %735 = vst [vmem:[%s23 + $0x1630] sm:%s15] %v734
      %v736 = vld [vmem:[%s22 + $0x1640] sm:%s15]
      %737 = vst [vmem:[%s23 + $0x1640] sm:%s15] %v736
      %v738 = vld [vmem:[%s22 + $0x1650] sm:%s15]
      %739 = vst [vmem:[%s23 + $0x1650] sm:%s15] %v738
      %v740 = vld [vmem:[%s22 + $0x1660] sm:%s15]
      %741 = vst [vmem:[%s23 + $0x1660] sm:%s15] %v740
      %v742 = vld [vmem:[%s22 + $0x1670] sm:%s15]
      %743 = vst [vmem:[%s23 + $0x1670] sm:%s15] %v742
      %v744 = vld [vmem:[%s22 + $0x1680] sm:%s15]
      %745 = vst [vmem:[%s23 + $0x1680] sm:%s15] %v744
      %v746 = vld [vmem:[%s22 + $0x1690] sm:%s15]
      %747 = vst [vmem:[%s23 + $0x1690] sm:%s15] %v746
      %v748 = vld [vmem:[%s22 + $0x16a0] sm:%s15]
      %749 = vst [vmem:[%s23 + $0x16a0] sm:%s15] %v748
      %v750 = vld [vmem:[%s22 + $0x16b0] sm:%s15]
      %751 = vst [vmem:[%s23 + $0x16b0] sm:%s15] %v750
      %v752 = vld [vmem:[%s22 + $0x16c0] sm:%s15]
      %753 = vst [vmem:[%s23 + $0x16c0] sm:%s15] %v752
      %v754 = vld [vmem:[%s22 + $0x16d0] sm:%s15]
      %755 = vst [vmem:[%s23 + $0x16d0] sm:%s15] %v754
      %v756 = vld [vmem:[%s22 + $0x16e0] sm:%s15]
      %757 = vst [vmem:[%s23 + $0x16e0] sm:%s15] %v756
      %v758 = vld [vmem:[%s22 + $0x16f0] sm:%s15]
      %759 = vst [vmem:[%s23 + $0x16f0] sm:%s15] %v758
      %v760 = vld [vmem:[%s22 + $0x1700] sm:%s15]
      %761 = vst [vmem:[%s23 + $0x1700] sm:%s15] %v760
      %v762 = vld [vmem:[%s22 + $0x1710] sm:%s15]
      %763 = vst [vmem:[%s23 + $0x1710] sm:%s15] %v762
      %v764 = vld [vmem:[%s22 + $0x1720] sm:%s15]
      %765 = vst [vmem:[%s23 + $0x1720] sm:%s15] %v764
      %v766 = vld [vmem:[%s22 + $0x1730] sm:%s15]
      %767 = vst [vmem:[%s23 + $0x1730] sm:%s15] %v766
      %v768 = vld [vmem:[%s22 + $0x1740] sm:%s15]
      %769 = vst [vmem:[%s23 + $0x1740] sm:%s15] %v768
      %v770 = vld [vmem:[%s22 + $0x1750] sm:%s15]
      %771 = vst [vmem:[%s23 + $0x1750] sm:%s15] %v770
      %v772 = vld [vmem:[%s22 + $0x1760] sm:%s15]
      %773 = vst [vmem:[%s23 + $0x1760] sm:%s15] %v772
      %v774 = vld [vmem:[%s22 + $0x1770] sm:%s15]
      %775 = vst [vmem:[%s23 + $0x1770] sm:%s15] %v774
      %v776 = vld [vmem:[%s22 + $0x1780] sm:%s15]
      %777 = vst [vmem:[%s23 + $0x1780] sm:%s15] %v776
      %v778 = vld [vmem:[%s22 + $0x1790] sm:%s15]
      %779 = vst [vmem:[%s23 + $0x1790] sm:%s15] %v778
      %v780 = vld [vmem:[%s22 + $0x17a0] sm:%s15]
      %781 = vst [vmem:[%s23 + $0x17a0] sm:%s15] %v780
      %v782 = vld [vmem:[%s22 + $0x17b0] sm:%s15]
      %783 = vst [vmem:[%s23 + $0x17b0] sm:%s15] %v782
      %v784 = vld [vmem:[%s22 + $0x17c0] sm:%s15]
      %785 = vst [vmem:[%s23 + $0x17c0] sm:%s15] %v784
      %v786 = vld [vmem:[%s22 + $0x17d0] sm:%s15]
      %787 = vst [vmem:[%s23 + $0x17d0] sm:%s15] %v786
      %v788 = vld [vmem:[%s22 + $0x17e0] sm:%s15]
      %789 = vst [vmem:[%s23 + $0x17e0] sm:%s15] %v788
      %v790 = vld [vmem:[%s22 + $0x17f0] sm:%s15]
      %791 = vst [vmem:[%s23 + $0x17f0] sm:%s15] %v790
      %v792 = vld [vmem:[%s22 + $0x1800] sm:%s15]
      %793 = vst [vmem:[%s23 + $0x1800] sm:%s15] %v792
      %v794 = vld [vmem:[%s22 + $0x1810] sm:%s15]
      %795 = vst [vmem:[%s23 + $0x1810] sm:%s15] %v794
      %v796 = vld [vmem:[%s22 + $0x1820] sm:%s15]
      %797 = vst [vmem:[%s23 + $0x1820] sm:%s15] %v796
      %v798 = vld [vmem:[%s22 + $0x1830] sm:%s15]
      %799 = vst [vmem:[%s23 + $0x1830] sm:%s15] %v798
      %v800 = vld [vmem:[%s22 + $0x1840] sm:%s15]
      %801 = vst [vmem:[%s23 + $0x1840] sm:%s15] %v800
      %v802 = vld [vmem:[%s22 + $0x1850] sm:%s15]
      %803 = vst [vmem:[%s23 + $0x1850] sm:%s15] %v802
      %v804 = vld [vmem:[%s22 + $0x1860] sm:%s15]
      %805 = vst [vmem:[%s23 + $0x1860] sm:%s15] %v804
      %v806 = vld [vmem:[%s22 + $0x1870] sm:%s15]
      %807 = vst [vmem:[%s23 + $0x1870] sm:%s15] %v806
      %v808 = vld [vmem:[%s22 + $0x1880] sm:%s15]
      %809 = vst [vmem:[%s23 + $0x1880] sm:%s15] %v808
      %v810 = vld [vmem:[%s22 + $0x1890] sm:%s15]
      %811 = vst [vmem:[%s23 + $0x1890] sm:%s15] %v810
      %v812 = vld [vmem:[%s22 + $0x18a0] sm:%s15]
      %813 = vst [vmem:[%s23 + $0x18a0] sm:%s15] %v812
      %v814 = vld [vmem:[%s22 + $0x18b0] sm:%s15]
      %815 = vst [vmem:[%s23 + $0x18b0] sm:%s15] %v814
      %v816 = vld [vmem:[%s22 + $0x18c0] sm:%s15]
      %817 = vst [vmem:[%s23 + $0x18c0] sm:%s15] %v816
      %v818 = vld [vmem:[%s22 + $0x18d0] sm:%s15]
      %819 = vst [vmem:[%s23 + $0x18d0] sm:%s15] %v818
      %v820 = vld [vmem:[%s22 + $0x18e0] sm:%s15]
      %821 = vst [vmem:[%s23 + $0x18e0] sm:%s15] %v820
      %v822 = vld [vmem:[%s22 + $0x18f0] sm:%s15]
      %823 = vst [vmem:[%s23 + $0x18f0] sm:%s15] %v822
      %v824 = vld [vmem:[%s22 + $0x1900] sm:%s15]
      %825 = vst [vmem:[%s23 + $0x1900] sm:%s15] %v824
      %v826 = vld [vmem:[%s22 + $0x1910] sm:%s15]
      %827 = vst [vmem:[%s23 + $0x1910] sm:%s15] %v826
      %v828 = vld [vmem:[%s22 + $0x1920] sm:%s15]
      %829 = vst [vmem:[%s23 + $0x1920] sm:%s15] %v828
      %v830 = vld [vmem:[%s22 + $0x1930] sm:%s15]
      %831 = vst [vmem:[%s23 + $0x1930] sm:%s15] %v830
      %v832 = vld [vmem:[%s22 + $0x1940] sm:%s15]
      %833 = vst [vmem:[%s23 + $0x1940] sm:%s15] %v832
      %v834 = vld [vmem:[%s22 + $0x1950] sm:%s15]
      %835 = vst [vmem:[%s23 + $0x1950] sm:%s15] %v834
      %v836 = vld [vmem:[%s22 + $0x1960] sm:%s15]
      %837 = vst [vmem:[%s23 + $0x1960] sm:%s15] %v836
      %v838 = vld [vmem:[%s22 + $0x1970] sm:%s15]
      %839 = vst [vmem:[%s23 + $0x1970] sm:%s15] %v838
      %v840 = vld [vmem:[%s22 + $0x1980] sm:%s15]
      %841 = vst [vmem:[%s23 + $0x1980] sm:%s15] %v840
      %v842 = vld [vmem:[%s22 + $0x1990] sm:%s15]
      %843 = vst [vmem:[%s23 + $0x1990] sm:%s15] %v842
      %v844 = vld [vmem:[%s22 + $0x19a0] sm:%s15]
      %845 = vst [vmem:[%s23 + $0x19a0] sm:%s15] %v844
      %v846 = vld [vmem:[%s22 + $0x19b0] sm:%s15]
      %847 = vst [vmem:[%s23 + $0x19b0] sm:%s15] %v846
      %v848 = vld [vmem:[%s22 + $0x19c0] sm:%s15]
      %849 = vst [vmem:[%s23 + $0x19c0] sm:%s15] %v848
      %v850 = vld [vmem:[%s22 + $0x19d0] sm:%s15]
      %851 = vst [vmem:[%s23 + $0x19d0] sm:%s15] %v850
      %v852 = vld [vmem:[%s22 + $0x19e0] sm:%s15]
      %853 = vst [vmem:[%s23 + $0x19e0] sm:%s15] %v852
      %v854 = vld [vmem:[%s22 + $0x19f0] sm:%s15]
      %855 = vst [vmem:[%s23 + $0x19f0] sm:%s15] %v854
      %v856 = vld [vmem:[%s22 + $0x1a00] sm:%s15]
      %857 = vst [vmem:[%s23 + $0x1a00] sm:%s15] %v856
      %v858 = vld [vmem:[%s22 + $0x1a10] sm:%s15]
      %859 = vst [vmem:[%s23 + $0x1a10] sm:%s15] %v858
      %v860 = vld [vmem:[%s22 + $0x1a20] sm:%s15]
      %861 = vst [vmem:[%s23 + $0x1a20] sm:%s15] %v860
      %v862 = vld [vmem:[%s22 + $0x1a30] sm:%s15]
      %863 = vst [vmem:[%s23 + $0x1a30] sm:%s15] %v862
      %v864 = vld [vmem:[%s22 + $0x1a40] sm:%s15]
      %865 = vst [vmem:[%s23 + $0x1a40] sm:%s15] %v864
      %v866 = vld [vmem:[%s22 + $0x1a50] sm:%s15]
      %867 = vst [vmem:[%s23 + $0x1a50] sm:%s15] %v866
      %v868 = vld [vmem:[%s22 + $0x1a60] sm:%s15]
      %869 = vst [vmem:[%s23 + $0x1a60] sm:%s15] %v868
      %v870 = vld [vmem:[%s22 + $0x1a70] sm:%s15]
      %871 = vst [vmem:[%s23 + $0x1a70] sm:%s15] %v870
      %v872 = vld [vmem:[%s22 + $0x1a80] sm:%s15]
      %873 = vst [vmem:[%s23 + $0x1a80] sm:%s15] %v872
      %v874 = vld [vmem:[%s22 + $0x1a90] sm:%s15]
      %875 = vst [vmem:[%s23 + $0x1a90] sm:%s15] %v874
      %v876 = vld [vmem:[%s22 + $0x1aa0] sm:%s15]
      %877 = vst [vmem:[%s23 + $0x1aa0] sm:%s15] %v876
      %v878 = vld [vmem:[%s22 + $0x1ab0] sm:%s15]
      %879 = vst [vmem:[%s23 + $0x1ab0] sm:%s15] %v878
      %v880 = vld [vmem:[%s22 + $0x1ac0] sm:%s15]
      %881 = vst [vmem:[%s23 + $0x1ac0] sm:%s15] %v880
      %v882 = vld [vmem:[%s22 + $0x1ad0] sm:%s15]
      %883 = vst [vmem:[%s23 + $0x1ad0] sm:%s15] %v882
      %v884 = vld [vmem:[%s22 + $0x1ae0] sm:%s15]
      %885 = vst [vmem:[%s23 + $0x1ae0] sm:%s15] %v884
      %v886 = vld [vmem:[%s22 + $0x1af0] sm:%s15]
      %887 = vst [vmem:[%s23 + $0x1af0] sm:%s15] %v886
      %v888 = vld [vmem:[%s22 + $0x1b00] sm:%s15]
      %889 = vst [vmem:[%s23 + $0x1b00] sm:%s15] %v888
      %v890 = vld [vmem:[%s22 + $0x1b10] sm:%s15]
      %891 = vst [vmem:[%s23 + $0x1b10] sm:%s15] %v890
      %v892 = vld [vmem:[%s22 + $0x1b20] sm:%s15]
      %893 = vst [vmem:[%s23 + $0x1b20] sm:%s15] %v892
      %v894 = vld [vmem:[%s22 + $0x1b30] sm:%s15]
      %895 = vst [vmem:[%s23 + $0x1b30] sm:%s15] %v894
      %v896 = vld [vmem:[%s22 + $0x1b40] sm:%s15]
      %897 = vst [vmem:[%s23 + $0x1b40] sm:%s15] %v896
      %v898 = vld [vmem:[%s22 + $0x1b50] sm:%s15]
      %899 = vst [vmem:[%s23 + $0x1b50] sm:%s15] %v898
      %v900 = vld [vmem:[%s22 + $0x1b60] sm:%s15]
      %901 = vst [vmem:[%s23 + $0x1b60] sm:%s15] %v900
      %v902 = vld [vmem:[%s22 + $0x1b70] sm:%s15]
      %903 = vst [vmem:[%s23 + $0x1b70] sm:%s15] %v902
      %v904 = vld [vmem:[%s22 + $0x1b80] sm:%s15]
      %905 = vst [vmem:[%s23 + $0x1b80] sm:%s15] %v904
      %v906 = vld [vmem:[%s22 + $0x1b90] sm:%s15]
      %907 = vst [vmem:[%s23 + $0x1b90] sm:%s15] %v906
      %v908 = vld [vmem:[%s22 + $0x1ba0] sm:%s15]
      %909 = vst [vmem:[%s23 + $0x1ba0] sm:%s15] %v908
      %v910 = vld [vmem:[%s22 + $0x1bb0] sm:%s15]
      %911 = vst [vmem:[%s23 + $0x1bb0] sm:%s15] %v910
      %v912 = vld [vmem:[%s22 + $0x1bc0] sm:%s15]
      %913 = vst [vmem:[%s23 + $0x1bc0] sm:%s15] %v912
      %v914 = vld [vmem:[%s22 + $0x1bd0] sm:%s15]
      %915 = vst [vmem:[%s23 + $0x1bd0] sm:%s15] %v914
      %v916 = vld [vmem:[%s22 + $0x1be0] sm:%s15]
      %917 = vst [vmem:[%s23 + $0x1be0] sm:%s15] %v916
      %v918 = vld [vmem:[%s22 + $0x1bf0] sm:%s15]
      %919 = vst [vmem:[%s23 + $0x1bf0] sm:%s15] %v918
      %v920 = vld [vmem:[%s22 + $0x1c00] sm:%s15]
      %921 = vst [vmem:[%s23 + $0x1c00] sm:%s15] %v920
      %v922 = vld [vmem:[%s22 + $0x1c10] sm:%s15]
      %923 = vst [vmem:[%s23 + $0x1c10] sm:%s15] %v922
      %v924 = vld [vmem:[%s22 + $0x1c20] sm:%s15]
      %925 = vst [vmem:[%s23 + $0x1c20] sm:%s15] %v924
      %v926 = vld [vmem:[%s22 + $0x1c30] sm:%s15]
      %927 = vst [vmem:[%s23 + $0x1c30] sm:%s15] %v926
      %v928 = vld [vmem:[%s22 + $0x1c40] sm:%s15]
      %929 = vst [vmem:[%s23 + $0x1c40] sm:%s15] %v928
      %v930 = vld [vmem:[%s22 + $0x1c50] sm:%s15]
      %931 = vst [vmem:[%s23 + $0x1c50] sm:%s15] %v930
      %v932 = vld [vmem:[%s22 + $0x1c60] sm:%s15]
      %933 = vst [vmem:[%s23 + $0x1c60] sm:%s15] %v932
      %v934 = vld [vmem:[%s22 + $0x1c70] sm:%s15]
      %935 = vst [vmem:[%s23 + $0x1c70] sm:%s15] %v934
      %v936 = vld [vmem:[%s22 + $0x1c80] sm:%s15]
      %937 = vst [vmem:[%s23 + $0x1c80] sm:%s15] %v936
      %v938 = vld [vmem:[%s22 + $0x1c90] sm:%s15]
      %939 = vst [vmem:[%s23 + $0x1c90] sm:%s15] %v938
      %v940 = vld [vmem:[%s22 + $0x1ca0] sm:%s15]
      %941 = vst [vmem:[%s23 + $0x1ca0] sm:%s15] %v940
      %v942 = vld [vmem:[%s22 + $0x1cb0] sm:%s15]
      %943 = vst [vmem:[%s23 + $0x1cb0] sm:%s15] %v942
      %v944 = vld [vmem:[%s22 + $0x1cc0] sm:%s15]
      %945 = vst [vmem:[%s23 + $0x1cc0] sm:%s15] %v944
      %v946 = vld [vmem:[%s22 + $0x1cd0] sm:%s15]
      %947 = vst [vmem:[%s23 + $0x1cd0] sm:%s15] %v946
      %v948 = vld [vmem:[%s22 + $0x1ce0] sm:%s15]
      %949 = vst [vmem:[%s23 + $0x1ce0] sm:%s15] %v948
      %v950 = vld [vmem:[%s22 + $0x1cf0] sm:%s15]
      %951 = vst [vmem:[%s23 + $0x1cf0] sm:%s15] %v950
      %v952 = vld [vmem:[%s22 + $0x1d00] sm:%s15]
      %953 = vst [vmem:[%s23 + $0x1d00] sm:%s15] %v952
      %v954 = vld [vmem:[%s22 + $0x1d10] sm:%s15]
      %955 = vst [vmem:[%s23 + $0x1d10] sm:%s15] %v954
      %v956 = vld [vmem:[%s22 + $0x1d20] sm:%s15]
      %957 = vst [vmem:[%s23 + $0x1d20] sm:%s15] %v956
      %v958 = vld [vmem:[%s22 + $0x1d30] sm:%s15]
      %959 = vst [vmem:[%s23 + $0x1d30] sm:%s15] %v958
      %v960 = vld [vmem:[%s22 + $0x1d40] sm:%s15]
      %961 = vst [vmem:[%s23 + $0x1d40] sm:%s15] %v960
      %v962 = vld [vmem:[%s22 + $0x1d50] sm:%s15]
      %963 = vst [vmem:[%s23 + $0x1d50] sm:%s15] %v962
      %v964 = vld [vmem:[%s22 + $0x1d60] sm:%s15]
      %965 = vst [vmem:[%s23 + $0x1d60] sm:%s15] %v964
      %v966 = vld [vmem:[%s22 + $0x1d70] sm:%s15]
      %967 = vst [vmem:[%s23 + $0x1d70] sm:%s15] %v966
      %v968 = vld [vmem:[%s22 + $0x1d80] sm:%s15]
      %969 = vst [vmem:[%s23 + $0x1d80] sm:%s15] %v968
      %v970 = vld [vmem:[%s22 + $0x1d90] sm:%s15]
      %971 = vst [vmem:[%s23 + $0x1d90] sm:%s15] %v970
      %v972 = vld [vmem:[%s22 + $0x1da0] sm:%s15]
      %973 = vst [vmem:[%s23 + $0x1da0] sm:%s15] %v972
      %v974 = vld [vmem:[%s22 + $0x1db0] sm:%s15]
      %975 = vst [vmem:[%s23 + $0x1db0] sm:%s15] %v974
      %v976 = vld [vmem:[%s22 + $0x1dc0] sm:%s15]
      %977 = vst [vmem:[%s23 + $0x1dc0] sm:%s15] %v976
      %v978 = vld [vmem:[%s22 + $0x1dd0] sm:%s15]
      %979 = vst [vmem:[%s23 + $0x1dd0] sm:%s15] %v978
      %v980 = vld [vmem:[%s22 + $0x1de0] sm:%s15]
      %981 = vst [vmem:[%s23 + $0x1de0] sm:%s15] %v980
      %v982 = vld [vmem:[%s22 + $0x1df0] sm:%s15]
      %983 = vst [vmem:[%s23 + $0x1df0] sm:%s15] %v982
      %v984 = vld [vmem:[%s22 + $0x1e00] sm:%s15]
      %985 = vst [vmem:[%s23 + $0x1e00] sm:%s15] %v984
      %v986 = vld [vmem:[%s22 + $0x1e10] sm:%s15]
      %987 = vst [vmem:[%s23 + $0x1e10] sm:%s15] %v986
      %v988 = vld [vmem:[%s22 + $0x1e20] sm:%s15]
      %989 = vst [vmem:[%s23 + $0x1e20] sm:%s15] %v988
      %v990 = vld [vmem:[%s22 + $0x1e30] sm:%s15]
      %991 = vst [vmem:[%s23 + $0x1e30] sm:%s15] %v990
      %v992 = vld [vmem:[%s22 + $0x1e40] sm:%s15]
      %993 = vst [vmem:[%s23 + $0x1e40] sm:%s15] %v992
      %v994 = vld [vmem:[%s22 + $0x1e50] sm:%s15]
      %995 = vst [vmem:[%s23 + $0x1e50] sm:%s15] %v994
      %v996 = vld [vmem:[%s22 + $0x1e60] sm:%s15]
      %997 = vst [vmem:[%s23 + $0x1e60] sm:%s15] %v996
      %v998 = vld [vmem:[%s22 + $0x1e70] sm:%s15]
      %999 = vst [vmem:[%s23 + $0x1e70] sm:%s15] %v998
    $region14: #{tpu_custom_call.1} parent=8 // loop_footer
      %s21 = sadd.s32 1, %s17
    $region15: #{tpu_custom_call.1} parent=8 // loop_footer_branch
      %16 = sbr.rel target = $region11
    $region16: #{tpu_custom_call.1} parent=8 // loop_exit
      _
  $region9: #{tpu_custom_call.1} parent=0 // pred_fallthru
    _
  // Predicated region
  $region35: #{tpu_custom_call.1} parent=0 // pred_check
    _
  $region36: #{tpu_custom_call.1} parent=0 // pred_check_branch
    %2982 = sbr.rel (0) target = $region38
  $region37: #{tpu_custom_call.1} parent=0 // pred_region
    %2983 = vsyncadd [#allocation2], 109312
  $region38: #{tpu_custom_call.1} parent=0 // pred_fallthru
    _
  %s2984 = smul.u32 1, 488
  %s2985 = smul.u32 %s2984, 14
  %s2986 = smul.u32 %s2985, 1
  %s2987 = sshll.u32 %s2986, 4
  %2988 = dma.done [#allocation2], %s2987
  %2989 = vsyncmov [#allocation2]
  %s2990 = vpop.sfrf %2989
  %p2991 = scmp.eq.s32.totalorder %s2990, 0
  %p2992 = pneg %p2991
  %2994 = shalt.err (%p2992)

</llo_original>
